<compile_context>
chip_gen: v7x
topology: tpu7x:2x2x1
jax: 0.10.0
libtpu: 0.0.40
codegen_flags: <defaults>
</compile_context>

<pallas_src>
import functools
import math

import jax
import jax.numpy as jnp
from jax.experimental import pallas as pl
from jax.experimental.pallas import tpu as pltpu


def _round_up(x, m):
    return (x + m - 1) // m * m


# ----------------------------------------------------------------------------
# Fused ViT kernel: one grid step = (one batch element, one transformer layer)
# ----------------------------------------------------------------------------

def _vit_block_kernel(p_ref, pw_ref, pb_ref, pos_ref, cls_ref,
                      ln1g_ref, ln1b_ref, wq_ref, wk_ref, wv_ref,
                      bq_ref, bk_ref, bv_ref, wo_ref, bo_ref,
                      ln2g_ref, ln2b_ref, w1_ref, b1_ref, w2_ref, b2_ref,
                      hw_ref, hb_ref,
                      o_ref, h_ref,
                      *, S, N, N_pad, C, num_heads, depth, compute_dtype):
    d = pl.program_id(1)                      # depth index (innermost grid axis)
    dh = C // num_heads
    scale = 1.0 / math.sqrt(dh)
    cd = compute_dtype

    def matmul(a, w):
        return jnp.dot(a.astype(cd), w.astype(cd),
                       preferred_element_type=jnp.float32)

    def layernorm(x, g, b):
        mean = jnp.mean(x, axis=-1, keepdims=True)
        cen = x - mean
        var = jnp.mean(cen * cen, axis=-1, keepdims=True)
        return cen * jax.lax.rsqrt(var + 1e-5) * g + b

    # ---- layer 0 only: patch embed (matmul) + positional add + CLS append ----
    @pl.when(d == 0)
    def _():
        tok = matmul(p_ref[...], pw_ref[...]) + pb_ref[...]          # (S, C)
        h_ref[pl.ds(0, S), :] = tok + pos_ref[...]
        # cls_ref = [CLS; zeros] -> rows S..N_pad-1 in one aligned 8-row store.
        h_ref[pl.ds(S, N_pad - S), :] = cls_ref[...]
        # nn.Dropout(emb_dropout): identity in eval mode.

    x = h_ref[...]                                                   # (N_pad, C)

    # ---- pre-LN multi-head self-attention ----
    hn = layernorm(x, ln1g_ref[...], ln1b_ref[...])
    # Mask padded key columns (tokens >= N) out of the softmax.
    key_valid = jax.lax.broadcasted_iota(jnp.int32, (N_pad, N_pad), 1) < N

    attn = jnp.zeros((N_pad, C), jnp.float32)
    for hh in range(num_heads):
        qh = matmul(hn, wq_ref[hh]) + bq_ref[hh]                     # (N_pad, dh)
        kh = matmul(hn, wk_ref[hh]) + bk_ref[hh]
        vh = matmul(hn, wv_ref[hh]) + bv_ref[hh]
        s = jax.lax.dot_general(
            qh.astype(cd), kh.astype(cd),
            (((1,), (1,)), ((), ())),                                # contract dh
            preferred_element_type=jnp.float32) * scale              # (N_pad, N_pad)
        s = jnp.where(key_valid, s, -1e30)
        s = s - jnp.max(s, axis=-1, keepdims=True)
        pexp = jnp.exp(s)
        inv = pl.reciprocal(jnp.sum(pexp, axis=-1, keepdims=True), approx=True)
        pattn = pexp * inv
        oh = matmul(pattn, vh)                                       # (N_pad, dh)
        # Per-head out-projection accumulated directly -> no head re-packing.
        attn = attn + matmul(oh, wo_ref[hh])                         # (N_pad, C)

    x = x + attn + bo_ref[...]            # residual (no dead mid-layer h store)

    # ---- LN2 + GELU MLP + residual; single h store per layer ----
    hn2 = layernorm(x, ln2g_ref[...], ln2b_ref[...])
    m = matmul(hn2, w1_ref[...]) + b1_ref[...]
    # TODO(synk): PyTorch nn.GELU default is exact erf; tanh approx used here.
    m = jax.nn.gelu(m)
    m = matmul(m, w2_ref[...]) + b2_ref[...]
    h_ref[...] = x + m

    # ---- last layer only: CLS pool (aligned row S) + output head ----
    @pl.when(d == depth - 1)
    def _():
        cls_repr = h_ref[pl.ds(S, 1), :]                             # (1, C)
        out = matmul(cls_repr, hw_ref[...]) + hb_ref[...]            # (1, out_dim)
        o_ref[...] = out.astype(o_ref.dtype)


# ----------------------------------------------------------------------------
# Parameter initialization (deterministic, in-script, PyTorch-like layouts)
# ----------------------------------------------------------------------------

def init_vit_params(key, *, input_shape=(4, 16, 16), out_channels=32,
                    patch_size=4, num_heads=4, depth=3, mlp_hidden_dim=64,
                    output_dim=8):
    Cin, H, W = input_shape
    Hp, Wp = H // patch_size, W // patch_size
    C = out_channels
    keys = jax.random.split(key, 4 + depth)

    params = {
        # Conv2d(Cin, C, kernel=patch, stride=patch) — the "Vi" patch embed.
        "patch_w": 0.02 * jax.random.normal(
            keys[0], (C, Cin, patch_size, patch_size), jnp.float32),
        "patch_b": jnp.zeros((C,), jnp.float32),
        # LearnablePositionalEncodings: nn.Parameter(torch.randn(C, Hp, Wp)).
        "pos": jax.random.normal(keys[1], (C, Hp, Wp), jnp.float32),
        # CLSToken: nn.Parameter(torch.randn(C, 1)).
        "cls": jax.random.normal(keys[2], (C, 1), jnp.float32),
        # Final head: Linear(C, output_dim) after CLSPool.
        "head_w": 0.02 * jax.random.normal(keys[3], (C, output_dim), jnp.float32),
        "head_b": jnp.zeros((output_dim,), jnp.float32),
    }

    blocks = []
    for d in range(depth):
        lk = jax.random.split(keys[4 + d], 6)
        blocks.append(dict(
            ln1_g=jnp.ones((C,), jnp.float32),
            ln1_b=jnp.zeros((C,), jnp.float32),
            wq=0.02 * jax.random.normal(lk[0], (C, C), jnp.float32),
            wk=0.02 * jax.random.normal(lk[1], (C, C), jnp.float32),
            wv=0.02 * jax.random.normal(lk[2], (C, C), jnp.float32),
            bq=jnp.zeros((C,), jnp.float32),
            bk=jnp.zeros((C,), jnp.float32),
            bv=jnp.zeros((C,), jnp.float32),
            wo=0.02 * jax.random.normal(lk[3], (C, C), jnp.float32),
            bo=jnp.zeros((C,), jnp.float32),
            ln2_g=jnp.ones((C,), jnp.float32),
            ln2_b=jnp.zeros((C,), jnp.float32),
            mlp_w1=0.02 * jax.random.normal(lk[4], (C, mlp_hidden_dim), jnp.float32),
            mlp_b1=jnp.zeros((mlp_hidden_dim,), jnp.float32),
            mlp_w2=0.02 * jax.random.normal(lk[5], (mlp_hidden_dim, C), jnp.float32),
            mlp_b2=jnp.zeros((C,), jnp.float32),
        ))
    # Stack per-block params along a leading depth axis (one kernel arg each).
    for name in blocks[0]:
        params[name] = jnp.stack([b[name] for b in blocks], axis=0)
    return params


# ----------------------------------------------------------------------------
# ViT forward pass (single fused pallas_call, grid over (batch, depth))
# ----------------------------------------------------------------------------

def vit_forward(params, x, *, patch_size=4, num_heads=4,
                compute_dtype=jnp.float32):
    """x: (B, Cin, H, W) channels-first (matches PyTorch NCHW).

    compute_dtype=jnp.bfloat16 may be passed on v6e/v7x for bf16 MXU operands;
    accumulation / LN / softmax / residuals stay f32.
    """
    B, Cin, H, W = x.shape
    C = params["patch_w"].shape[0]
    Hp, Wp = H // patch_size, W // patch_size
    S = Hp * Wp
    N = S + 1
    N_pad = _round_up(N, 8)
    depth = params["wq"].shape[0]
    mlp = params["mlp_w1"].shape[-1]
    out_dim = params["head_w"].shape[-1]
    dh = C // num_heads
    P = Cin * patch_size * patch_size
    f32 = jnp.float32

    # ---- layout-only glue in JAX (free): patchify + head-major weight split ----
    p = x.reshape(B, Cin, Hp, patch_size, Wp, patch_size)
    p = p.transpose(0, 2, 4, 1, 3, 5).reshape(B, S, P)        # (B, S, Cin*ps*ps)
    pw = params["patch_w"].reshape(C, P).T                    # (P, C)
    pb = params["patch_b"].reshape(1, C)
    pos = params["pos"].reshape(C, S).T                       # (S, C)
    cls = params["cls"].reshape(C, 1).T                       # (1, C)
    cls_pad = jnp.concatenate(
        [cls, jnp.zeros((N_pad - S - 1, C), f32)], axis=0)    # (N_pad - S, C)

    def heads_w(w):   # (depth, C, C) -> (depth, H, C, dh)
        return w.reshape(depth, C, num_heads, dh).transpose(0, 2, 1, 3)

    def heads_b(b):   # (depth, C) -> (depth, H, 1, dh)
        return b.reshape(depth, num_heads, 1, dh)

    wq, wk, wv = heads_w(params["wq"]), heads_w(params["wk"]), heads_w(params["wv"])
    bq, bk, bv = heads_b(params["bq"]), heads_b(params["bk"]), heads_b(params["bv"])
    wo = params["wo"].reshape(depth, num_heads, dh, C)        # head-major rows
    bo = params["bo"].reshape(depth, 1, C)
    ln1g = params["ln1_g"].reshape(depth, 1, C)
    ln1b = params["ln1_b"].reshape(depth, 1, C)
    ln2g = params["ln2_g"].reshape(depth, 1, C)
    ln2b = params["ln2_b"].reshape(depth, 1, C)
    w1 = params["mlp_w1"]                                     # (depth, C, mlp)
    b1 = params["mlp_b1"].reshape(depth, 1, mlp)
    w2 = params["mlp_w2"]                                     # (depth, mlp, C)
    b2 = params["mlp_b2"].reshape(depth, 1, C)
    hw = params["head_w"]                                     # (C, out_dim)
    hb = params["head_b"].reshape(1, out_dim)

    inputs = [p, pw, pb, pos, cls_pad,
              ln1g, ln1b, wq, wk, wv, bq, bk, bv, wo, bo,
              ln2g, ln2b, w1, b1, w2, b2, hw, hb]

    def shared(a):
        nd = a.ndim
        return pl.BlockSpec(a.shape, lambda b, d, nd=nd: (0,) * nd)

    def per_depth(a):
        nd = a.ndim
        return pl.BlockSpec((None,) + a.shape[1:],
                            lambda b, d, nd=nd: (d,) + (0,) * (nd - 1))

    in_specs = [
        pl.BlockSpec((None, S, P), lambda b, d: (b, 0, 0)),   # per-batch patches
        shared(pw), shared(pb), shared(pos), shared(cls_pad),
        per_depth(ln1g), per_depth(ln1b),
        per_depth(wq), per_depth(wk), per_depth(wv),
        per_depth(bq), per_depth(bk), per_depth(bv),
        per_depth(wo), per_depth(bo),
        per_depth(ln2g), per_depth(ln2b),
        per_depth(w1), per_depth(b1), per_depth(w2), per_depth(b2),
        shared(hw), shared(hb),
    ]

    # Advisory cost estimate (GEMM flops dominate).
    gemm_flops = (2 * B * depth * N_pad * C * (3 * C + C + 2 * mlp)
                  + 2 * B * depth * N_pad * N_pad * 2 * C
                  + 2 * B * S * P * C + 2 * B * C * out_dim)
    transcendentals = B * depth * (num_heads * N_pad * N_pad + N_pad * mlp)
    bytes_accessed = (sum(int(a.size) * a.dtype.itemsize for a in inputs)
                      + B * out_dim * 4)
    cost = pl.CostEstimate(flops=int(gemm_flops),
                           transcendentals=int(transcendentals),
                           bytes_accessed=int(bytes_accessed))

    kernel = functools.partial(
        _vit_block_kernel, S=S, N=N, N_pad=N_pad, C=C,
        num_heads=num_heads, depth=depth, compute_dtype=compute_dtype)

    out = pl.pallas_call(
        kernel,
        out_shape=jax.ShapeDtypeStruct((B, 1, out_dim), x.dtype),
        grid=(B, depth),
        in_specs=in_specs,
        out_specs=pl.BlockSpec((None, 1, out_dim), lambda b, d: (b, 0, 0)),
        scratch_shapes=[pltpu.VMEM((N_pad, C), jnp.float32)],   # resident tokens
        compiler_params=pltpu.CompilerParams(
            dimension_semantics=("parallel", "arbitrary"),
            vmem_limit_bytes=32 * 1024 * 1024),
        cost_estimate=cost,
    )(*inputs)
    return out.reshape(B, out_dim)


# ----------------------------------------------------------------------------
# Demo
# ----------------------------------------------------------------------------

if __name__ == "__main__":
    key = jax.random.PRNGKey(0)
    k_x, k_p = jax.random.split(key)

    # Small shapes consistent with the module: input_shape=(4,16,16),
    # out_channels=32, patch_size=4 -> 4x4=16 patches (+1 CLS), depth=3,
    # num_heads=4, output_shape=(8,) -> final (B, 8).
    x = jax.random.normal(k_x, (2, 4, 16, 16), jnp.float32)
    params = init_vit_params(k_p, input_shape=(4, 16, 16), out_channels=32,
                             patch_size=4, num_heads=4, depth=3,
                             mlp_hidden_dim=64, output_dim=8)

    out = vit_forward(params, x, patch_size=4, num_heads=4)
    out = jax.block_until_ready(out)
    assert out.shape == (2, 8), out.shape
    print("KERNEL_OK")
</pallas_src>

<mosaic_0001>
module attributes {stable_mosaic.version = 11 : i64} {
  func.func @_vit_block_kernel(%arg0: i32, %arg1: i32, %arg2: memref<1x16x64xf32, #tpu.memory_space<vmem>>, %arg3: memref<64x32xf32, #tpu.memory_space<vmem>>, %arg4: memref<1x32xf32, #tpu.memory_space<vmem>>, %arg5: memref<16x32xf32, #tpu.memory_space<vmem>>, %arg6: memref<8x32xf32, #tpu.memory_space<vmem>>, %arg7: memref<1x1x32xf32, #tpu.memory_space<vmem>>, %arg8: memref<1x1x32xf32, #tpu.memory_space<vmem>>, %arg9: memref<1x4x32x8xf32, #tpu.memory_space<vmem>>, %arg10: memref<1x4x32x8xf32, #tpu.memory_space<vmem>>, %arg11: memref<1x4x32x8xf32, #tpu.memory_space<vmem>>, %arg12: memref<1x4x1x8xf32, #tpu.memory_space<vmem>>, %arg13: memref<1x4x1x8xf32, #tpu.memory_space<vmem>>, %arg14: memref<1x4x1x8xf32, #tpu.memory_space<vmem>>, %arg15: memref<1x4x8x32xf32, #tpu.memory_space<vmem>>, %arg16: memref<1x1x32xf32, #tpu.memory_space<vmem>>, %arg17: memref<1x1x32xf32, #tpu.memory_space<vmem>>, %arg18: memref<1x1x32xf32, #tpu.memory_space<vmem>>, %arg19: memref<1x32x64xf32, #tpu.memory_space<vmem>>, %arg20: memref<1x1x64xf32, #tpu.memory_space<vmem>>, %arg21: memref<1x64x32xf32, #tpu.memory_space<vmem>>, %arg22: memref<1x1x32xf32, #tpu.memory_space<vmem>>, %arg23: memref<32x8xf32, #tpu.memory_space<vmem>>, %arg24: memref<1x8xf32, #tpu.memory_space<vmem>>, %arg25: memref<1x1x8xf32, #tpu.memory_space<vmem>>, %arg26: memref<24x32xf32, #tpu.memory_space<vmem>>) attributes {dimension_semantics = [#tpu.dimension_semantics<parallel>, #tpu.dimension_semantics<arbitrary>], iteration_bounds = array<i64: 2, 3>, scalar_prefetch = 0 : i64, scratch_operands = 1 : i64, tpu.core_type = #tpu.core_type<tc>, window_params = [{transform_indices = @transform_0, window_bounds = array<i64: 1, 16, 64>}, {pipeline_mode = #tpu.pipeline_mode<synchronous>, transform_indices = @transform_1, window_bounds = array<i64: 64, 32>}, {pipeline_mode = #tpu.pipeline_mode<synchronous>, transform_indices = @transform_2, window_bounds = array<i64: 1, 32>}, {pipeline_mode = #tpu.pipeline_mode<synchronous>, transform_indices = @transform_3, window_bounds = array<i64: 16, 32>}, {pipeline_mode = #tpu.pipeline_mode<synchronous>, transform_indices = @transform_4, window_bounds = array<i64: 8, 32>}, {transform_indices = @transform_5, window_bounds = array<i64: 1, 1, 32>}, {transform_indices = @transform_6, window_bounds = array<i64: 1, 1, 32>}, {transform_indices = @transform_7, window_bounds = array<i64: 1, 4, 32, 8>}, {transform_indices = @transform_8, window_bounds = array<i64: 1, 4, 32, 8>}, {transform_indices = @transform_9, window_bounds = array<i64: 1, 4, 32, 8>}, {transform_indices = @transform_10, window_bounds = array<i64: 1, 4, 1, 8>}, {transform_indices = @transform_11, window_bounds = array<i64: 1, 4, 1, 8>}, {transform_indices = @transform_12, window_bounds = array<i64: 1, 4, 1, 8>}, {transform_indices = @transform_13, window_bounds = array<i64: 1, 4, 8, 32>}, {transform_indices = @transform_14, window_bounds = array<i64: 1, 1, 32>}, {transform_indices = @transform_15, window_bounds = array<i64: 1, 1, 32>}, {transform_indices = @transform_16, window_bounds = array<i64: 1, 1, 32>}, {transform_indices = @transform_17, window_bounds = array<i64: 1, 32, 64>}, {transform_indices = @transform_18, window_bounds = array<i64: 1, 1, 64>}, {transform_indices = @transform_19, window_bounds = array<i64: 1, 64, 32>}, {transform_indices = @transform_20, window_bounds = array<i64: 1, 1, 32>}, {pipeline_mode = #tpu.pipeline_mode<synchronous>, transform_indices = @transform_21, window_bounds = array<i64: 32, 8>}, {pipeline_mode = #tpu.pipeline_mode<synchronous>, transform_indices = @transform_22, window_bounds = array<i64: 1, 8>}, {transform_indices = @transform_23, window_bounds = array<i64: 1, 1, 8>}]} {
    %c0_i32 = arith.constant 0 : i32
    %0 = arith.cmpi eq, %arg1, %c0_i32 : i32
    %1 = arith.extui %0 : i1 to i32
    %c0_i32_0 = arith.constant 0 : i32
    %2 = arith.cmpi ne, %1, %c0_i32_0 : i32
    scf.if %2 {
      %c0_197 = arith.constant 0 : index
      %c0_198 = arith.constant 0 : index
      %c0_199 = arith.constant 0 : index
      %257 = vector.load %arg2[%c0_197, %c0_198, %c0_199] : memref<1x16x64xf32, #tpu.memory_space<vmem>>, vector<1x16x64xf32>
      %258 = vector.shape_cast %257 : vector<1x16x64xf32> to vector<16x64xf32>
      %c0_200 = arith.constant 0 : index
      %c0_201 = arith.constant 0 : index
      %259 = vector.load %arg3[%c0_200, %c0_201] : memref<64x32xf32, #tpu.memory_space<vmem>>, vector<64x32xf32>
      %cst_202 = arith.constant dense<0.000000e+00> : vector<16x32xf32>
      %260 = tpu.matmul %258, %259, %cst_202 {dimension_numbers = #tpu.dot_dimension_numbers<[1], [0], [0], [1], [0, 0, 1, 1], [], []>} : vector<16x64xf32>, vector<64x32xf32>, vector<16x32xf32> -> vector<16x32xf32>
      %c0_203 = arith.constant 0 : index
      %c0_204 = arith.constant 0 : index
      %261 = vector.load %arg4[%c0_203, %c0_204] : memref<1x32xf32, #tpu.memory_space<vmem>>, vector<1x32xf32>
      %262 = vector.broadcast %261 : vector<1x32xf32> to vector<16x32xf32>
      %263 = arith.addf %260, %262 : vector<16x32xf32>
      %c0_205 = arith.constant 0 : index
      %c0_206 = arith.constant 0 : index
      %264 = vector.load %arg5[%c0_205, %c0_206] : memref<16x32xf32, #tpu.memory_space<vmem>>, vector<16x32xf32>
      %265 = arith.addf %263, %264 : vector<16x32xf32>
      %c0_207 = arith.constant 0 : index
      %c0_208 = arith.constant 0 : index
      %266 = vector.load %arg26[%c0_207, %c0_208] : memref<24x32xf32, #tpu.memory_space<vmem>>, vector<16x32xf32>
      tpu.vector_store %arg26[%c0_207, %c0_208], %265 {strides = array<i32>} : memref<24x32xf32, #tpu.memory_space<vmem>>, vector<16x32xf32>,
      %c0_209 = arith.constant 0 : index
      %c0_210 = arith.constant 0 : index
      %267 = vector.load %arg6[%c0_209, %c0_210] : memref<8x32xf32, #tpu.memory_space<vmem>>, vector<8x32xf32>
      %c16 = arith.constant 16 : index
      %c0_211 = arith.constant 0 : index
      %268 = vector.load %arg26[%c16, %c0_211] : memref<24x32xf32, #tpu.memory_space<vmem>>, vector<8x32xf32>
      tpu.vector_store %arg26[%c16, %c0_211], %267 {strides = array<i32>} : memref<24x32xf32, #tpu.memory_space<vmem>>, vector<8x32xf32>,
    } else {
    }
    %c0 = arith.constant 0 : index
    %c0_1 = arith.constant 0 : index
    %3 = vector.load %arg26[%c0, %c0_1] : memref<24x32xf32, #tpu.memory_space<vmem>>, vector<24x32xf32>
    %c0_2 = arith.constant 0 : index
    %c0_3 = arith.constant 0 : index
    %c0_4 = arith.constant 0 : index
    %4 = vector.load %arg7[%c0_2, %c0_3, %c0_4] : memref<1x1x32xf32, #tpu.memory_space<vmem>>, vector<1x1x32xf32>
    %5 = vector.shape_cast %4 : vector<1x1x32xf32> to vector<1x32xf32>
    %c0_5 = arith.constant 0 : index
    %c0_6 = arith.constant 0 : index
    %c0_7 = arith.constant 0 : index
    %6 = vector.load %arg8[%c0_5, %c0_6, %c0_7] : memref<1x1x32xf32, #tpu.memory_space<vmem>>, vector<1x1x32xf32>
    %7 = vector.shape_cast %6 : vector<1x1x32xf32> to vector<1x32xf32>
    %cst = arith.constant dense<0.000000e+00> : vector<24xf32>
    %8 = vector.multi_reduction <add>, %3, %cst [1] : vector<24x32xf32> to vector<24xf32>
    %9 = vector.shape_cast %8 : vector<24xf32> to vector<24x1xf32>
    %cst_8 = arith.constant 3.200000e+01 : f32
    %10 = vector.broadcast %cst_8 : f32 to vector<24x1xf32>
    %11 = arith.divf %9, %10 : vector<24x1xf32>
    %12 = vector.broadcast %11 : vector<24x1xf32> to vector<24x32xf32>
    %13 = arith.subf %3, %12 : vector<24x32xf32>
    %14 = arith.mulf %13, %13 : vector<24x32xf32>
    %cst_9 = arith.constant dense<0.000000e+00> : vector<24xf32>
    %15 = vector.multi_reduction <add>, %14, %cst_9 [1] : vector<24x32xf32> to vector<24xf32>
    %16 = vector.shape_cast %15 : vector<24xf32> to vector<24x1xf32>
    %cst_10 = arith.constant 3.200000e+01 : f32
    %17 = vector.broadcast %cst_10 : f32 to vector<24x1xf32>
    %18 = arith.divf %16, %17 : vector<24x1xf32>
    %cst_11 = arith.constant 9.99999974E-6 : f32
    %19 = vector.broadcast %cst_11 : f32 to vector<24x1xf32>
    %20 = arith.addf %18, %19 : vector<24x1xf32>
    %21 = math.rsqrt %20 : vector<24x1xf32>
    %22 = vector.broadcast %21 : vector<24x1xf32> to vector<24x32xf32>
    %23 = arith.mulf %13, %22 : vector<24x32xf32>
    %24 = vector.broadcast %5 : vector<1x32xf32> to vector<24x32xf32>
    %25 = arith.mulf %23, %24 : vector<24x32xf32>
    %26 = vector.broadcast %7 : vector<1x32xf32> to vector<24x32xf32>
    %27 = arith.addf %25, %26 : vector<24x32xf32>
    %28 = tpu.iota {dimensions = array<i32: 1>} : vector<24x24xi32>
    %c17_i32 = arith.constant 17 : i32
    %29 = vector.broadcast %c17_i32 : i32 to vector<24x24xi32>
    %30 = arith.cmpi slt, %28, %29 : vector<24x24xi32>
    %cst_12 = arith.constant 0.000000e+00 : f32
    %31 = vector.broadcast %cst_12 : f32 to vector<24x32xf32>
    %c0_13 = arith.constant 0 : index
    %c0_14 = arith.constant 0 : index
    %c0_15 = arith.constant 0 : index
    %c0_16 = arith.constant 0 : index
    %32 = vector.load %arg9[%c0_13, %c0_14, %c0_15, %c0_16] : memref<1x4x32x8xf32, #tpu.memory_space<vmem>>, vector<1x1x32x8xf32>
    %33 = vector.shape_cast %32 : vector<1x1x32x8xf32> to vector<32x8xf32>
    %cst_17 = arith.constant dense<0.000000e+00> : vector<24x8xf32>
    %34 = tpu.matmul %27, %33, %cst_17 {dimension_numbers = #tpu.dot_dimension_numbers<[1], [0], [0], [1], [0, 0, 1, 1], [], []>} : vector<24x32xf32>, vector<32x8xf32>, vector<24x8xf32> -> vector<24x8xf32>
    %c0_18 = arith.constant 0 : index
    %c0_19 = arith.constant 0 : index
    %c0_20 = arith.constant 0 : index
    %c0_21 = arith.constant 0 : index
    %35 = vector.load %arg12[%c0_18, %c0_19, %c0_20, %c0_21] : memref<1x4x1x8xf32, #tpu.memory_space<vmem>>, vector<1x1x1x8xf32>
    %36 = vector.shape_cast %35 : vector<1x1x1x8xf32> to vector<1x8xf32>
    %37 = vector.broadcast %36 : vector<1x8xf32> to vector<24x8xf32>
    %38 = arith.addf %34, %37 : vector<24x8xf32>
    %c0_22 = arith.constant 0 : index
    %c0_23 = arith.constant 0 : index
    %c0_24 = arith.constant 0 : index
    %c0_25 = arith.constant 0 : index
    %39 = vector.load %arg10[%c0_22, %c0_23, %c0_24, %c0_25] : memref<1x4x32x8xf32, #tpu.memory_space<vmem>>, vector<1x1x32x8xf32>
    %40 = vector.shape_cast %39 : vector<1x1x32x8xf32> to vector<32x8xf32>
    %cst_26 = arith.constant dense<0.000000e+00> : vector<24x8xf32>
    %41 = tpu.matmul %27, %40, %cst_26 {dimension_numbers = #tpu.dot_dimension_numbers<[1], [0], [0], [1], [0, 0, 1, 1], [], []>} : vector<24x32xf32>, vector<32x8xf32>, vector<24x8xf32> -> vector<24x8xf32>
    %c0_27 = arith.constant 0 : index
    %c0_28 = arith.constant 0 : index
    %c0_29 = arith.constant 0 : index
    %c0_30 = arith.constant 0 : index
    %42 = vector.load %arg13[%c0_27, %c0_28, %c0_29, %c0_30] : memref<1x4x1x8xf32, #tpu.memory_space<vmem>>, vector<1x1x1x8xf32>
    %43 = vector.shape_cast %42 : vector<1x1x1x8xf32> to vector<1x8xf32>
    %44 = vector.broadcast %43 : vector<1x8xf32> to vector<24x8xf32>
    %45 = arith.addf %41, %44 : vector<24x8xf32>
    %c0_31 = arith.constant 0 : index
    %c0_32 = arith.constant 0 : index
    %c0_33 = arith.constant 0 : index
    %c0_34 = arith.constant 0 : index
    %46 = vector.load %arg11[%c0_31, %c0_32, %c0_33, %c0_34] : memref<1x4x32x8xf32, #tpu.memory_space<vmem>>, vector<1x1x32x8xf32>
    %47 = vector.shape_cast %46 : vector<1x1x32x8xf32> to vector<32x8xf32>
    %cst_35 = arith.constant dense<0.000000e+00> : vector<24x8xf32>
    %48 = tpu.matmul %27, %47, %cst_35 {dimension_numbers = #tpu.dot_dimension_numbers<[1], [0], [0], [1], [0, 0, 1, 1], [], []>} : vector<24x32xf32>, vector<32x8xf32>, vector<24x8xf32> -> vector<24x8xf32>
    %c0_36 = arith.constant 0 : index
    %c0_37 = arith.constant 0 : index
    %c0_38 = arith.constant 0 : index
    %c0_39 = arith.constant 0 : index
    %49 = vector.load %arg14[%c0_36, %c0_37, %c0_38, %c0_39] : memref<1x4x1x8xf32, #tpu.memory_space<vmem>>, vector<1x1x1x8xf32>
    %50 = vector.shape_cast %49 : vector<1x1x1x8xf32> to vector<1x8xf32>
    %51 = vector.broadcast %50 : vector<1x8xf32> to vector<24x8xf32>
    %52 = arith.addf %48, %51 : vector<24x8xf32>
    %cst_40 = arith.constant dense<0.000000e+00> : vector<24x24xf32>
    %53 = tpu.matmul %38, %45, %cst_40 {dimension_numbers = #tpu.dot_dimension_numbers<[1], [1], [0], [0], [0, 0, 1, 0], [], []>} : vector<24x8xf32>, vector<24x8xf32>, vector<24x24xf32> -> vector<24x24xf32>
    %cst_41 = arith.constant 0.353553385 : f32
    %54 = vector.broadcast %cst_41 : f32 to vector<24x24xf32>
    %55 = arith.mulf %53, %54 : vector<24x24xf32>
    %cst_42 = arith.constant -1.000000e+30 : f32
    %56 = vector.broadcast %cst_42 : f32 to vector<24x24xf32>
    %57 = arith.select %30, %55, %56 : vector<24x24xi1>, vector<24x24xf32>
    %cst_43 = arith.constant dense<0xFF800000> : vector<24xf32>
    %58 = vector.multi_reduction <maximumf>, %57, %cst_43 [1] : vector<24x24xf32> to vector<24xf32>
    %59 = vector.shape_cast %58 : vector<24xf32> to vector<24x1xf32>
    %60 = vector.broadcast %59 : vector<24x1xf32> to vector<24x24xf32>
    %61 = arith.subf %57, %60 : vector<24x24xf32>
    %62 = math.exp %61 : vector<24x24xf32>
    %cst_44 = arith.constant dense<0.000000e+00> : vector<24xf32>
    %63 = vector.multi_reduction <add>, %62, %cst_44 [1] : vector<24x24xf32> to vector<24xf32>
    %64 = vector.shape_cast %63 : vector<24xf32> to vector<24x1xf32>
    %65 = tpu.reciprocal %64 {approx = true} : vector<24x1xf32> -> vector<24x1xf32>
    %66 = vector.broadcast %65 : vector<24x1xf32> to vector<24x24xf32>
    %67 = arith.mulf %62, %66 : vector<24x24xf32>
    %cst_45 = arith.constant dense<0.000000e+00> : vector<24x8xf32>
    %68 = tpu.matmul %67, %52, %cst_45 {dimension_numbers = #tpu.dot_dimension_numbers<[1], [0], [0], [1], [0, 0, 1, 1], [], []>} : vector<24x24xf32>, vector<24x8xf32>, vector<24x8xf32> -> vector<24x8xf32>
    %c0_46 = arith.constant 0 : index
    %c0_47 = arith.constant 0 : index
    %c0_48 = arith.constant 0 : index
    %c0_49 = arith.constant 0 : index
    %69 = vector.load %arg15[%c0_46, %c0_47, %c0_48, %c0_49] : memref<1x4x8x32xf32, #tpu.memory_space<vmem>>, vector<1x1x8x32xf32>
    %70 = vector.shape_cast %69 : vector<1x1x8x32xf32> to vector<8x32xf32>
    %cst_50 = arith.constant dense<0.000000e+00> : vector<24x32xf32>
    %71 = tpu.matmul %68, %70, %cst_50 {dimension_numbers = #tpu.dot_dimension_numbers<[1], [0], [0], [1], [0, 0, 1, 1], [], []>} : vector<24x8xf32>, vector<8x32xf32>, vector<24x32xf32> -> vector<24x32xf32>
    %72 = arith.addf %31, %71 : vector<24x32xf32>
    %c0_51 = arith.constant 0 : index
    %c1 = arith.constant 1 : index
    %c0_52 = arith.constant 0 : index
    %c0_53 = arith.constant 0 : index
    %73 = vector.load %arg9[%c0_51, %c1, %c0_52, %c0_53] : memref<1x4x32x8xf32, #tpu.memory_space<vmem>>, vector<1x1x32x8xf32>
    %74 = vector.shape_cast %73 : vector<1x1x32x8xf32> to vector<32x8xf32>
    %cst_54 = arith.constant dense<0.000000e+00> : vector<24x8xf32>
    %75 = tpu.matmul %27, %74, %cst_54 {dimension_numbers = #tpu.dot_dimension_numbers<[1], [0], [0], [1], [0, 0, 1, 1], [], []>} : vector<24x32xf32>, vector<32x8xf32>, vector<24x8xf32> -> vector<24x8xf32>
    %c0_55 = arith.constant 0 : index
    %c1_56 = arith.constant 1 : index
    %c0_57 = arith.constant 0 : index
    %c0_58 = arith.constant 0 : index
    %76 = vector.load %arg12[%c0_55, %c1_56, %c0_57, %c0_58] : memref<1x4x1x8xf32, #tpu.memory_space<vmem>>, vector<1x1x1x8xf32>
    %77 = vector.shape_cast %76 : vector<1x1x1x8xf32> to vector<1x8xf32>
    %78 = vector.broadcast %77 : vector<1x8xf32> to vector<24x8xf32>
    %79 = arith.addf %75, %78 : vector<24x8xf32>
    %c0_59 = arith.constant 0 : index
    %c1_60 = arith.constant 1 : index
    %c0_61 = arith.constant 0 : index
    %c0_62 = arith.constant 0 : index
    %80 = vector.load %arg10[%c0_59, %c1_60, %c0_61, %c0_62] : memref<1x4x32x8xf32, #tpu.memory_space<vmem>>, vector<1x1x32x8xf32>
    %81 = vector.shape_cast %80 : vector<1x1x32x8xf32> to vector<32x8xf32>
    %cst_63 = arith.constant dense<0.000000e+00> : vector<24x8xf32>
    %82 = tpu.matmul %27, %81, %cst_63 {dimension_numbers = #tpu.dot_dimension_numbers<[1], [0], [0], [1], [0, 0, 1, 1], [], []>} : vector<24x32xf32>, vector<32x8xf32>, vector<24x8xf32> -> vector<24x8xf32>
    %c0_64 = arith.constant 0 : index
    %c1_65 = arith.constant 1 : index
    %c0_66 = arith.constant 0 : index
    %c0_67 = arith.constant 0 : index
    %83 = vector.load %arg13[%c0_64, %c1_65, %c0_66, %c0_67] : memref<1x4x1x8xf32, #tpu.memory_space<vmem>>, vector<1x1x1x8xf32>
    %84 = vector.shape_cast %83 : vector<1x1x1x8xf32> to vector<1x8xf32>
    %85 = vector.broadcast %84 : vector<1x8xf32> to vector<24x8xf32>
    %86 = arith.addf %82, %85 : vector<24x8xf32>
    %c0_68 = arith.constant 0 : index
    %c1_69 = arith.constant 1 : index
    %c0_70 = arith.constant 0 : index
    %c0_71 = arith.constant 0 : index
    %87 = vector.load %arg11[%c0_68, %c1_69, %c0_70, %c0_71] : memref<1x4x32x8xf32, #tpu.memory_space<vmem>>, vector<1x1x32x8xf32>
    %88 = vector.shape_cast %87 : vector<1x1x32x8xf32> to vector<32x8xf32>
    %cst_72 = arith.constant dense<0.000000e+00> : vector<24x8xf32>
    %89 = tpu.matmul %27, %88, %cst_72 {dimension_numbers = #tpu.dot_dimension_numbers<[1], [0], [0], [1], [0, 0, 1, 1], [], []>} : vector<24x32xf32>, vector<32x8xf32>, vector<24x8xf32> -> vector<24x8xf32>
    %c0_73 = arith.constant 0 : index
    %c1_74 = arith.constant 1 : index
    %c0_75 = arith.constant 0 : index
    %c0_76 = arith.constant 0 : index
    %90 = vector.load %arg14[%c0_73, %c1_74, %c0_75, %c0_76] : memref<1x4x1x8xf32, #tpu.memory_space<vmem>>, vector<1x1x1x8xf32>
    %91 = vector.shape_cast %90 : vector<1x1x1x8xf32> to vector<1x8xf32>
    %92 = vector.broadcast %91 : vector<1x8xf32> to vector<24x8xf32>
    %93 = arith.addf %89, %92 : vector<24x8xf32>
    %cst_77 = arith.constant dense<0.000000e+00> : vector<24x24xf32>
    %94 = tpu.matmul %79, %86, %cst_77 {dimension_numbers = #tpu.dot_dimension_numbers<[1], [1], [0], [0], [0, 0, 1, 0], [], []>} : vector<24x8xf32>, vector<24x8xf32>, vector<24x24xf32> -> vector<24x24xf32>
    %cst_78 = arith.constant 0.353553385 : f32
    %95 = vector.broadcast %cst_78 : f32 to vector<24x24xf32>
    %96 = arith.mulf %94, %95 : vector<24x24xf32>
    %cst_79 = arith.constant -1.000000e+30 : f32
    %97 = vector.broadcast %cst_79 : f32 to vector<24x24xf32>
    %98 = arith.select %30, %96, %97 : vector<24x24xi1>, vector<24x24xf32>
    %cst_80 = arith.constant dense<0xFF800000> : vector<24xf32>
    %99 = vector.multi_reduction <maximumf>, %98, %cst_80 [1] : vector<24x24xf32> to vector<24xf32>
    %100 = vector.shape_cast %99 : vector<24xf32> to vector<24x1xf32>
    %101 = vector.broadcast %100 : vector<24x1xf32> to vector<24x24xf32>
    %102 = arith.subf %98, %101 : vector<24x24xf32>
    %103 = math.exp %102 : vector<24x24xf32>
    %cst_81 = arith.constant dense<0.000000e+00> : vector<24xf32>
    %104 = vector.multi_reduction <add>, %103, %cst_81 [1] : vector<24x24xf32> to vector<24xf32>
    %105 = vector.shape_cast %104 : vector<24xf32> to vector<24x1xf32>
    %106 = tpu.reciprocal %105 {approx = true} : vector<24x1xf32> -> vector<24x1xf32>
    %107 = vector.broadcast %106 : vector<24x1xf32> to vector<24x24xf32>
    %108 = arith.mulf %103, %107 : vector<24x24xf32>
    %cst_82 = arith.constant dense<0.000000e+00> : vector<24x8xf32>
    %109 = tpu.matmul %108, %93, %cst_82 {dimension_numbers = #tpu.dot_dimension_numbers<[1], [0], [0], [1], [0, 0, 1, 1], [], []>} : vector<24x24xf32>, vector<24x8xf32>, vector<24x8xf32> -> vector<24x8xf32>
    %c0_83 = arith.constant 0 : index
    %c1_84 = arith.constant 1 : index
    %c0_85 = arith.constant 0 : index
    %c0_86 = arith.constant 0 : index
    %110 = vector.load %arg15[%c0_83, %c1_84, %c0_85, %c0_86] : memref<1x4x8x32xf32, #tpu.memory_space<vmem>>, vector<1x1x8x32xf32>
    %111 = vector.shape_cast %110 : vector<1x1x8x32xf32> to vector<8x32xf32>
    %cst_87 = arith.constant dense<0.000000e+00> : vector<24x32xf32>
    %112 = tpu.matmul %109, %111, %cst_87 {dimension_numbers = #tpu.dot_dimension_numbers<[1], [0], [0], [1], [0, 0, 1, 1], [], []>} : vector<24x8xf32>, vector<8x32xf32>, vector<24x32xf32> -> vector<24x32xf32>
    %113 = arith.addf %72, %112 : vector<24x32xf32>
    %c0_88 = arith.constant 0 : index
    %c2 = arith.constant 2 : index
    %c0_89 = arith.constant 0 : index
    %c0_90 = arith.constant 0 : index
    %114 = vector.load %arg9[%c0_88, %c2, %c0_89, %c0_90] : memref<1x4x32x8xf32, #tpu.memory_space<vmem>>, vector<1x1x32x8xf32>
    %115 = vector.shape_cast %114 : vector<1x1x32x8xf32> to vector<32x8xf32>
    %cst_91 = arith.constant dense<0.000000e+00> : vector<24x8xf32>
    %116 = tpu.matmul %27, %115, %cst_91 {dimension_numbers = #tpu.dot_dimension_numbers<[1], [0], [0], [1], [0, 0, 1, 1], [], []>} : vector<24x32xf32>, vector<32x8xf32>, vector<24x8xf32> -> vector<24x8xf32>
    %c0_92 = arith.constant 0 : index
    %c2_93 = arith.constant 2 : index
    %c0_94 = arith.constant 0 : index
    %c0_95 = arith.constant 0 : index
    %117 = vector.load %arg12[%c0_92, %c2_93, %c0_94, %c0_95] : memref<1x4x1x8xf32, #tpu.memory_space<vmem>>, vector<1x1x1x8xf32>
    %118 = vector.shape_cast %117 : vector<1x1x1x8xf32> to vector<1x8xf32>
    %119 = vector.broadcast %118 : vector<1x8xf32> to vector<24x8xf32>
    %120 = arith.addf %116, %119 : vector<24x8xf32>
    %c0_96 = arith.constant 0 : index
    %c2_97 = arith.constant 2 : index
    %c0_98 = arith.constant 0 : index
    %c0_99 = arith.constant 0 : index
    %121 = vector.load %arg10[%c0_96, %c2_97, %c0_98, %c0_99] : memref<1x4x32x8xf32, #tpu.memory_space<vmem>>, vector<1x1x32x8xf32>
    %122 = vector.shape_cast %121 : vector<1x1x32x8xf32> to vector<32x8xf32>
    %cst_100 = arith.constant dense<0.000000e+00> : vector<24x8xf32>
    %123 = tpu.matmul %27, %122, %cst_100 {dimension_numbers = #tpu.dot_dimension_numbers<[1], [0], [0], [1], [0, 0, 1, 1], [], []>} : vector<24x32xf32>, vector<32x8xf32>, vector<24x8xf32> -> vector<24x8xf32>
    %c0_101 = arith.constant 0 : index
    %c2_102 = arith.constant 2 : index
    %c0_103 = arith.constant 0 : index
    %c0_104 = arith.constant 0 : index
    %124 = vector.load %arg13[%c0_101, %c2_102, %c0_103, %c0_104] : memref<1x4x1x8xf32, #tpu.memory_space<vmem>>, vector<1x1x1x8xf32>
    %125 = vector.shape_cast %124 : vector<1x1x1x8xf32> to vector<1x8xf32>
    %126 = vector.broadcast %125 : vector<1x8xf32> to vector<24x8xf32>
    %127 = arith.addf %123, %126 : vector<24x8xf32>
    %c0_105 = arith.constant 0 : index
    %c2_106 = arith.constant 2 : index
    %c0_107 = arith.constant 0 : index
    %c0_108 = arith.constant 0 : index
    %128 = vector.load %arg11[%c0_105, %c2_106, %c0_107, %c0_108] : memref<1x4x32x8xf32, #tpu.memory_space<vmem>>, vector<1x1x32x8xf32>
    %129 = vector.shape_cast %128 : vector<1x1x32x8xf32> to vector<32x8xf32>
    %cst_109 = arith.constant dense<0.000000e+00> : vector<24x8xf32>
    %130 = tpu.matmul %27, %129, %cst_109 {dimension_numbers = #tpu.dot_dimension_numbers<[1], [0], [0], [1], [0, 0, 1, 1], [], []>} : vector<24x32xf32>, vector<32x8xf32>, vector<24x8xf32> -> vector<24x8xf32>
    %c0_110 = arith.constant 0 : index
    %c2_111 = arith.constant 2 : index
    %c0_112 = arith.constant 0 : index
    %c0_113 = arith.constant 0 : index
    %131 = vector.load %arg14[%c0_110, %c2_111, %c0_112, %c0_113] : memref<1x4x1x8xf32, #tpu.memory_space<vmem>>, vector<1x1x1x8xf32>
    %132 = vector.shape_cast %131 : vector<1x1x1x8xf32> to vector<1x8xf32>
    %133 = vector.broadcast %132 : vector<1x8xf32> to vector<24x8xf32>
    %134 = arith.addf %130, %133 : vector<24x8xf32>
    %cst_114 = arith.constant dense<0.000000e+00> : vector<24x24xf32>
    %135 = tpu.matmul %120, %127, %cst_114 {dimension_numbers = #tpu.dot_dimension_numbers<[1], [1], [0], [0], [0, 0, 1, 0], [], []>} : vector<24x8xf32>, vector<24x8xf32>, vector<24x24xf32> -> vector<24x24xf32>
    %cst_115 = arith.constant 0.353553385 : f32
    %136 = vector.broadcast %cst_115 : f32 to vector<24x24xf32>
    %137 = arith.mulf %135, %136 : vector<24x24xf32>
    %cst_116 = arith.constant -1.000000e+30 : f32
    %138 = vector.broadcast %cst_116 : f32 to vector<24x24xf32>
    %139 = arith.select %30, %137, %138 : vector<24x24xi1>, vector<24x24xf32>
    %cst_117 = arith.constant dense<0xFF800000> : vector<24xf32>
    %140 = vector.multi_reduction <maximumf>, %139, %cst_117 [1] : vector<24x24xf32> to vector<24xf32>
    %141 = vector.shape_cast %140 : vector<24xf32> to vector<24x1xf32>
    %142 = vector.broadcast %141 : vector<24x1xf32> to vector<24x24xf32>
    %143 = arith.subf %139, %142 : vector<24x24xf32>
    %144 = math.exp %143 : vector<24x24xf32>
    %cst_118 = arith.constant dense<0.000000e+00> : vector<24xf32>
    %145 = vector.multi_reduction <add>, %144, %cst_118 [1] : vector<24x24xf32> to vector<24xf32>
    %146 = vector.shape_cast %145 : vector<24xf32> to vector<24x1xf32>
    %147 = tpu.reciprocal %146 {approx = true} : vector<24x1xf32> -> vector<24x1xf32>
    %148 = vector.broadcast %147 : vector<24x1xf32> to vector<24x24xf32>
    %149 = arith.mulf %144, %148 : vector<24x24xf32>
    %cst_119 = arith.constant dense<0.000000e+00> : vector<24x8xf32>
    %150 = tpu.matmul %149, %134, %cst_119 {dimension_numbers = #tpu.dot_dimension_numbers<[1], [0], [0], [1], [0, 0, 1, 1], [], []>} : vector<24x24xf32>, vector<24x8xf32>, vector<24x8xf32> -> vector<24x8xf32>
    %c0_120 = arith.constant 0 : index
    %c2_121 = arith.constant 2 : index
    %c0_122 = arith.constant 0 : index
    %c0_123 = arith.constant 0 : index
    %151 = vector.load %arg15[%c0_120, %c2_121, %c0_122, %c0_123] : memref<1x4x8x32xf32, #tpu.memory_space<vmem>>, vector<1x1x8x32xf32>
    %152 = vector.shape_cast %151 : vector<1x1x8x32xf32> to vector<8x32xf32>
    %cst_124 = arith.constant dense<0.000000e+00> : vector<24x32xf32>
    %153 = tpu.matmul %150, %152, %cst_124 {dimension_numbers = #tpu.dot_dimension_numbers<[1], [0], [0], [1], [0, 0, 1, 1], [], []>} : vector<24x8xf32>, vector<8x32xf32>, vector<24x32xf32> -> vector<24x32xf32>
    %154 = arith.addf %113, %153 : vector<24x32xf32>
    %c0_125 = arith.constant 0 : index
    %c3 = arith.constant 3 : index
    %c0_126 = arith.constant 0 : index
    %c0_127 = arith.constant 0 : index
    %155 = vector.load %arg9[%c0_125, %c3, %c0_126, %c0_127] : memref<1x4x32x8xf32, #tpu.memory_space<vmem>>, vector<1x1x32x8xf32>
    %156 = vector.shape_cast %155 : vector<1x1x32x8xf32> to vector<32x8xf32>
    %cst_128 = arith.constant dense<0.000000e+00> : vector<24x8xf32>
    %157 = tpu.matmul %27, %156, %cst_128 {dimension_numbers = #tpu.dot_dimension_numbers<[1], [0], [0], [1], [0, 0, 1, 1], [], []>} : vector<24x32xf32>, vector<32x8xf32>, vector<24x8xf32> -> vector<24x8xf32>
    %c0_129 = arith.constant 0 : index
    %c3_130 = arith.constant 3 : index
    %c0_131 = arith.constant 0 : index
    %c0_132 = arith.constant 0 : index
    %158 = vector.load %arg12[%c0_129, %c3_130, %c0_131, %c0_132] : memref<1x4x1x8xf32, #tpu.memory_space<vmem>>, vector<1x1x1x8xf32>
    %159 = vector.shape_cast %158 : vector<1x1x1x8xf32> to vector<1x8xf32>
    %160 = vector.broadcast %159 : vector<1x8xf32> to vector<24x8xf32>
    %161 = arith.addf %157, %160 : vector<24x8xf32>
    %c0_133 = arith.constant 0 : index
    %c3_134 = arith.constant 3 : index
    %c0_135 = arith.constant 0 : index
    %c0_136 = arith.constant 0 : index
    %162 = vector.load %arg10[%c0_133, %c3_134, %c0_135, %c0_136] : memref<1x4x32x8xf32, #tpu.memory_space<vmem>>, vector<1x1x32x8xf32>
    %163 = vector.shape_cast %162 : vector<1x1x32x8xf32> to vector<32x8xf32>
    %cst_137 = arith.constant dense<0.000000e+00> : vector<24x8xf32>
    %164 = tpu.matmul %27, %163, %cst_137 {dimension_numbers = #tpu.dot_dimension_numbers<[1], [0], [0], [1], [0, 0, 1, 1], [], []>} : vector<24x32xf32>, vector<32x8xf32>, vector<24x8xf32> -> vector<24x8xf32>
    %c0_138 = arith.constant 0 : index
    %c3_139 = arith.constant 3 : index
    %c0_140 = arith.constant 0 : index
    %c0_141 = arith.constant 0 : index
    %165 = vector.load %arg13[%c0_138, %c3_139, %c0_140, %c0_141] : memref<1x4x1x8xf32, #tpu.memory_space<vmem>>, vector<1x1x1x8xf32>
    %166 = vector.shape_cast %165 : vector<1x1x1x8xf32> to vector<1x8xf32>
    %167 = vector.broadcast %166 : vector<1x8xf32> to vector<24x8xf32>
    %168 = arith.addf %164, %167 : vector<24x8xf32>
    %c0_142 = arith.constant 0 : index
    %c3_143 = arith.constant 3 : index
    %c0_144 = arith.constant 0 : index
    %c0_145 = arith.constant 0 : index
    %169 = vector.load %arg11[%c0_142, %c3_143, %c0_144, %c0_145] : memref<1x4x32x8xf32, #tpu.memory_space<vmem>>, vector<1x1x32x8xf32>
    %170 = vector.shape_cast %169 : vector<1x1x32x8xf32> to vector<32x8xf32>
    %cst_146 = arith.constant dense<0.000000e+00> : vector<24x8xf32>
    %171 = tpu.matmul %27, %170, %cst_146 {dimension_numbers = #tpu.dot_dimension_numbers<[1], [0], [0], [1], [0, 0, 1, 1], [], []>} : vector<24x32xf32>, vector<32x8xf32>, vector<24x8xf32> -> vector<24x8xf32>
    %c0_147 = arith.constant 0 : index
    %c3_148 = arith.constant 3 : index
    %c0_149 = arith.constant 0 : index
    %c0_150 = arith.constant 0 : index
    %172 = vector.load %arg14[%c0_147, %c3_148, %c0_149, %c0_150] : memref<1x4x1x8xf32, #tpu.memory_space<vmem>>, vector<1x1x1x8xf32>
    %173 = vector.shape_cast %172 : vector<1x1x1x8xf32> to vector<1x8xf32>
    %174 = vector.broadcast %173 : vector<1x8xf32> to vector<24x8xf32>
    %175 = arith.addf %171, %174 : vector<24x8xf32>
    %cst_151 = arith.constant dense<0.000000e+00> : vector<24x24xf32>
    %176 = tpu.matmul %161, %168, %cst_151 {dimension_numbers = #tpu.dot_dimension_numbers<[1], [1], [0], [0], [0, 0, 1, 0], [], []>} : vector<24x8xf32>, vector<24x8xf32>, vector<24x24xf32> -> vector<24x24xf32>
    %cst_152 = arith.constant 0.353553385 : f32
    %177 = vector.broadcast %cst_152 : f32 to vector<24x24xf32>
    %178 = arith.mulf %176, %177 : vector<24x24xf32>
    %cst_153 = arith.constant -1.000000e+30 : f32
    %179 = vector.broadcast %cst_153 : f32 to vector<24x24xf32>
    %180 = arith.select %30, %178, %179 : vector<24x24xi1>, vector<24x24xf32>
    %cst_154 = arith.constant dense<0xFF800000> : vector<24xf32>
    %181 = vector.multi_reduction <maximumf>, %180, %cst_154 [1] : vector<24x24xf32> to vector<24xf32>
    %182 = vector.shape_cast %181 : vector<24xf32> to vector<24x1xf32>
    %183 = vector.broadcast %182 : vector<24x1xf32> to vector<24x24xf32>
    %184 = arith.subf %180, %183 : vector<24x24xf32>
    %185 = math.exp %184 : vector<24x24xf32>
    %cst_155 = arith.constant dense<0.000000e+00> : vector<24xf32>
    %186 = vector.multi_reduction <add>, %185, %cst_155 [1] : vector<24x24xf32> to vector<24xf32>
    %187 = vector.shape_cast %186 : vector<24xf32> to vector<24x1xf32>
    %188 = tpu.reciprocal %187 {approx = true} : vector<24x1xf32> -> vector<24x1xf32>
    %189 = vector.broadcast %188 : vector<24x1xf32> to vector<24x24xf32>
    %190 = arith.mulf %185, %189 : vector<24x24xf32>
    %cst_156 = arith.constant dense<0.000000e+00> : vector<24x8xf32>
    %191 = tpu.matmul %190, %175, %cst_156 {dimension_numbers = #tpu.dot_dimension_numbers<[1], [0], [0], [1], [0, 0, 1, 1], [], []>} : vector<24x24xf32>, vector<24x8xf32>, vector<24x8xf32> -> vector<24x8xf32>
    %c0_157 = arith.constant 0 : index
    %c3_158 = arith.constant 3 : index
    %c0_159 = arith.constant 0 : index
    %c0_160 = arith.constant 0 : index
    %192 = vector.load %arg15[%c0_157, %c3_158, %c0_159, %c0_160] : memref<1x4x8x32xf32, #tpu.memory_space<vmem>>, vector<1x1x8x32xf32>
    %193 = vector.shape_cast %192 : vector<1x1x8x32xf32> to vector<8x32xf32>
    %cst_161 = arith.constant dense<0.000000e+00> : vector<24x32xf32>
    %194 = tpu.matmul %191, %193, %cst_161 {dimension_numbers = #tpu.dot_dimension_numbers<[1], [0], [0], [1], [0, 0, 1, 1], [], []>} : vector<24x8xf32>, vector<8x32xf32>, vector<24x32xf32> -> vector<24x32xf32>
    %195 = arith.addf %154, %194 : vector<24x32xf32>
    %196 = arith.addf %3, %195 : vector<24x32xf32>
    %c0_162 = arith.constant 0 : index
    %c0_163 = arith.constant 0 : index
    %c0_164 = arith.constant 0 : index
    %197 = vector.load %arg16[%c0_162, %c0_163, %c0_164] : memref<1x1x32xf32, #tpu.memory_space<vmem>>, vector<1x1x32xf32>
    %198 = vector.shape_cast %197 : vector<1x1x32xf32> to vector<1x32xf32>
    %199 = vector.broadcast %198 : vector<1x32xf32> to vector<24x32xf32>
    %200 = arith.addf %196, %199 : vector<24x32xf32>
    %c0_165 = arith.constant 0 : index
    %c0_166 = arith.constant 0 : index
    %c0_167 = arith.constant 0 : index
    %201 = vector.load %arg17[%c0_165, %c0_166, %c0_167] : memref<1x1x32xf32, #tpu.memory_space<vmem>>, vector<1x1x32xf32>
    %202 = vector.shape_cast %201 : vector<1x1x32xf32> to vector<1x32xf32>
    %c0_168 = arith.constant 0 : index
    %c0_169 = arith.constant 0 : index
    %c0_170 = arith.constant 0 : index
    %203 = vector.load %arg18[%c0_168, %c0_169, %c0_170] : memref<1x1x32xf32, #tpu.memory_space<vmem>>, vector<1x1x32xf32>
    %204 = vector.shape_cast %203 : vector<1x1x32xf32> to vector<1x32xf32>
    %cst_171 = arith.constant dense<0.000000e+00> : vector<24xf32>
    %205 = vector.multi_reduction <add>, %200, %cst_171 [1] : vector<24x32xf32> to vector<24xf32>
    %206 = vector.shape_cast %205 : vector<24xf32> to vector<24x1xf32>
    %cst_172 = arith.constant 3.200000e+01 : f32
    %207 = vector.broadcast %cst_172 : f32 to vector<24x1xf32>
    %208 = arith.divf %206, %207 : vector<24x1xf32>
    %209 = vector.broadcast %208 : vector<24x1xf32> to vector<24x32xf32>
    %210 = arith.subf %200, %209 : vector<24x32xf32>
    %211 = arith.mulf %210, %210 : vector<24x32xf32>
    %cst_173 = arith.constant dense<0.000000e+00> : vector<24xf32>
    %212 = vector.multi_reduction <add>, %211, %cst_173 [1] : vector<24x32xf32> to vector<24xf32>
    %213 = vector.shape_cast %212 : vector<24xf32> to vector<24x1xf32>
    %cst_174 = arith.constant 3.200000e+01 : f32
    %214 = vector.broadcast %cst_174 : f32 to vector<24x1xf32>
    %215 = arith.divf %213, %214 : vector<24x1xf32>
    %cst_175 = arith.constant 9.99999974E-6 : f32
    %216 = vector.broadcast %cst_175 : f32 to vector<24x1xf32>
    %217 = arith.addf %215, %216 : vector<24x1xf32>
    %218 = math.rsqrt %217 : vector<24x1xf32>
    %219 = vector.broadcast %218 : vector<24x1xf32> to vector<24x32xf32>
    %220 = arith.mulf %210, %219 : vector<24x32xf32>
    %221 = vector.broadcast %202 : vector<1x32xf32> to vector<24x32xf32>
    %222 = arith.mulf %220, %221 : vector<24x32xf32>
    %223 = vector.broadcast %204 : vector<1x32xf32> to vector<24x32xf32>
    %224 = arith.addf %222, %223 : vector<24x32xf32>
    %c0_176 = arith.constant 0 : index
    %c0_177 = arith.constant 0 : index
    %c0_178 = arith.constant 0 : index
    %225 = vector.load %arg19[%c0_176, %c0_177, %c0_178] : memref<1x32x64xf32, #tpu.memory_space<vmem>>, vector<1x32x64xf32>
    %226 = vector.shape_cast %225 : vector<1x32x64xf32> to vector<32x64xf32>
    %cst_179 = arith.constant dense<0.000000e+00> : vector<24x64xf32>
    %227 = tpu.matmul %224, %226, %cst_179 {dimension_numbers = #tpu.dot_dimension_numbers<[1], [0], [0], [1], [0, 0, 1, 1], [], []>} : vector<24x32xf32>, vector<32x64xf32>, vector<24x64xf32> -> vector<24x64xf32>
    %c0_180 = arith.constant 0 : index
    %c0_181 = arith.constant 0 : index
    %c0_182 = arith.constant 0 : index
    %228 = vector.load %arg20[%c0_180, %c0_181, %c0_182] : memref<1x1x64xf32, #tpu.memory_space<vmem>>, vector<1x1x64xf32>
    %229 = vector.shape_cast %228 : vector<1x1x64xf32> to vector<1x64xf32>
    %230 = vector.broadcast %229 : vector<1x64xf32> to vector<24x64xf32>
    %231 = arith.addf %227, %230 : vector<24x64xf32>
    %232 = arith.mulf %231, %231 : vector<24x64xf32>
    %233 = arith.mulf %231, %232 : vector<24x64xf32>
    %cst_183 = arith.constant 4.471500e-02 : f32
    %234 = vector.broadcast %cst_183 : f32 to vector<24x64xf32>
    %235 = arith.mulf %234, %233 : vector<24x64xf32>
    %236 = arith.addf %231, %235 : vector<24x64xf32>
    %cst_184 = arith.constant 0.797884583 : f32
    %237 = vector.broadcast %cst_184 : f32 to vector<24x64xf32>
    %238 = arith.mulf %237, %236 : vector<24x64xf32>
    %239 = math.tanh %238 : vector<24x64xf32>
    %cst_185 = arith.constant 1.000000e+00 : f32
    %240 = vector.broadcast %cst_185 : f32 to vector<24x64xf32>
    %241 = arith.addf %240, %239 : vector<24x64xf32>
    %cst_186 = arith.constant 5.000000e-01 : f32
    %242 = vector.broadcast %cst_186 : f32 to vector<24x64xf32>
    %243 = arith.mulf %242, %241 : vector<24x64xf32>
    %244 = arith.mulf %231, %243 : vector<24x64xf32>
    %c0_187 = arith.constant 0 : index
    %c0_188 = arith.constant 0 : index
    %c0_189 = arith.constant 0 : index
    %245 = vector.load %arg21[%c0_187, %c0_188, %c0_189] : memref<1x64x32xf32, #tpu.memory_space<vmem>>, vector<1x64x32xf32>
    %246 = vector.shape_cast %245 : vector<1x64x32xf32> to vector<64x32xf32>
    %cst_190 = arith.constant dense<0.000000e+00> : vector<24x32xf32>
    %247 = tpu.matmul %244, %246, %cst_190 {dimension_numbers = #tpu.dot_dimension_numbers<[1], [0], [0], [1], [0, 0, 1, 1], [], []>} : vector<24x64xf32>, vector<64x32xf32>, vector<24x32xf32> -> vector<24x32xf32>
    %c0_191 = arith.constant 0 : index
    %c0_192 = arith.constant 0 : index
    %c0_193 = arith.constant 0 : index
    %248 = vector.load %arg22[%c0_191, %c0_192, %c0_193] : memref<1x1x32xf32, #tpu.memory_space<vmem>>, vector<1x1x32xf32>
    %249 = vector.shape_cast %248 : vector<1x1x32xf32> to vector<1x32xf32>
    %250 = vector.broadcast %249 : vector<1x32xf32> to vector<24x32xf32>
    %251 = arith.addf %247, %250 : vector<24x32xf32>
    %252 = arith.addf %200, %251 : vector<24x32xf32>
    %c0_194 = arith.constant 0 : index
    %c0_195 = arith.constant 0 : index
    %253 = vector.load %arg26[%c0_194, %c0_195] : memref<24x32xf32, #tpu.memory_space<vmem>>, vector<24x32xf32>
    tpu.vector_store %arg26[%c0_194, %c0_195], %252 {strides = array<i32>} : memref<24x32xf32, #tpu.memory_space<vmem>>, vector<24x32xf32>,
    %c2_i32 = arith.constant 2 : i32
    %254 = arith.cmpi eq, %arg1, %c2_i32 : i32
    %255 = arith.extui %254 : i1 to i32
    %c0_i32_196 = arith.constant 0 : i32
    %256 = arith.cmpi ne, %255, %c0_i32_196 : i32
    scf.if %256 {
      %c16 = arith.constant 16 : index
      %c0_197 = arith.constant 0 : index
      %257 = vector.load %arg26[%c16, %c0_197] : memref<24x32xf32, #tpu.memory_space<vmem>>, vector<1x32xf32>
      %c0_198 = arith.constant 0 : index
      %c0_199 = arith.constant 0 : index
      %258 = vector.load %arg23[%c0_198, %c0_199] : memref<32x8xf32, #tpu.memory_space<vmem>>, vector<32x8xf32>
      %cst_200 = arith.constant dense<0.000000e+00> : vector<1x8xf32>
      %259 = tpu.matmul %257, %258, %cst_200 {dimension_numbers = #tpu.dot_dimension_numbers<[1], [0], [0], [1], [0, 0, 1, 1], [], []>} : vector<1x32xf32>, vector<32x8xf32>, vector<1x8xf32> -> vector<1x8xf32>
      %c0_201 = arith.constant 0 : index
      %c0_202 = arith.constant 0 : index
      %260 = vector.load %arg24[%c0_201, %c0_202] : memref<1x8xf32, #tpu.memory_space<vmem>>, vector<1x8xf32>
      %261 = arith.addf %259, %260 : vector<1x8xf32>
      %c0_203 = arith.constant 0 : index
      %c0_204 = arith.constant 0 : index
      %c0_205 = arith.constant 0 : index
      %262 = vector.load %arg25[%c0_203, %c0_204, %c0_205] : memref<1x1x8xf32, #tpu.memory_space<vmem>>, vector<1x1x8xf32>
      %263 = vector.shape_cast %262 : vector<1x1x8xf32> to vector<1x8xf32>
      %264 = vector.shape_cast %261 : vector<1x8xf32> to vector<1x1x8xf32>
      tpu.vector_store %arg25[%c0_203, %c0_204, %c0_205], %264 {strides = array<i32>} : memref<1x1x8xf32, #tpu.memory_space<vmem>>, vector<1x1x8xf32>,
    } else {
    }
    return
  }
  func.func @transform_0(%arg0: i32, %arg1: i32) -> (i32, i32, i32) {
    %c0_i32 = arith.constant 0 : i32
    %c0_i32_0 = arith.constant 0 : i32
    %c0_i32_1 = arith.constant 0 : i32
    return %arg0, %c0_i32, %c0_i32_0 : i32, i32, i32
  }
  func.func @transform_1(%arg0: i32, %arg1: i32) -> (i32, i32) {
    %c0_i32 = arith.constant 0 : i32
    %c0_i32_0 = arith.constant 0 : i32
    %c0_i32_1 = arith.constant 0 : i32
    return %c0_i32, %c0_i32_0 : i32, i32
  }
  func.func @transform_2(%arg0: i32, %arg1: i32) -> (i32, i32) {
    %c0_i32 = arith.constant 0 : i32
    %c0_i32_0 = arith.constant 0 : i32
    %c0_i32_1 = arith.constant 0 : i32
    return %c0_i32, %c0_i32_0 : i32, i32
  }
  func.func @transform_3(%arg0: i32, %arg1: i32) -> (i32, i32) {
    %c0_i32 = arith.constant 0 : i32
    %c0_i32_0 = arith.constant 0 : i32
    %c0_i32_1 = arith.constant 0 : i32
    return %c0_i32, %c0_i32_0 : i32, i32
  }
  func.func @transform_4(%arg0: i32, %arg1: i32) -> (i32, i32) {
    %c0_i32 = arith.constant 0 : i32
    %c0_i32_0 = arith.constant 0 : i32
    %c0_i32_1 = arith.constant 0 : i32
    return %c0_i32, %c0_i32_0 : i32, i32
  }
  func.func @transform_5(%arg0: i32, %arg1: i32) -> (i32, i32, i32) {
    %c0_i32 = arith.constant 0 : i32
    %c0_i32_0 = arith.constant 0 : i32
    %c0_i32_1 = arith.constant 0 : i32
    return %arg1, %c0_i32, %c0_i32_0 : i32, i32, i32
  }
  func.func @transform_6(%arg0: i32, %arg1: i32) -> (i32, i32, i32) {
    %c0_i32 = arith.constant 0 : i32
    %c0_i32_0 = arith.constant 0 : i32
    %c0_i32_1 = arith.constant 0 : i32
    return %arg1, %c0_i32, %c0_i32_0 : i32, i32, i32
  }
  func.func @transform_7(%arg0: i32, %arg1: i32) -> (i32, i32, i32, i32) {
    %c0_i32 = arith.constant 0 : i32
    %c0_i32_0 = arith.constant 0 : i32
    %c0_i32_1 = arith.constant 0 : i32
    %c0_i32_2 = arith.constant 0 : i32
    return %arg1, %c0_i32, %c0_i32_0, %c0_i32_1 : i32, i32, i32, i32
  }
  func.func @transform_8(%arg0: i32, %arg1: i32) -> (i32, i32, i32, i32) {
    %c0_i32 = arith.constant 0 : i32
    %c0_i32_0 = arith.constant 0 : i32
    %c0_i32_1 = arith.constant 0 : i32
    %c0_i32_2 = arith.constant 0 : i32
    return %arg1, %c0_i32, %c0_i32_0, %c0_i32_1 : i32, i32, i32, i32
  }
  func.func @transform_9(%arg0: i32, %arg1: i32) -> (i32, i32, i32, i32) {
    %c0_i32 = arith.constant 0 : i32
    %c0_i32_0 = arith.constant 0 : i32
    %c0_i32_1 = arith.constant 0 : i32
    %c0_i32_2 = arith.constant 0 : i32
    return %arg1, %c0_i32, %c0_i32_0, %c0_i32_1 : i32, i32, i32, i32
  }
  func.func @transform_10(%arg0: i32, %arg1: i32) -> (i32, i32, i32, i32) {
    %c0_i32 = arith.constant 0 : i32
    %c0_i32_0 = arith.constant 0 : i32
    %c0_i32_1 = arith.constant 0 : i32
    %c0_i32_2 = arith.constant 0 : i32
    return %arg1, %c0_i32, %c0_i32_0, %c0_i32_1 : i32, i32, i32, i32
  }
  func.func @transform_11(%arg0: i32, %arg1: i32) -> (i32, i32, i32, i32) {
    %c0_i32 = arith.constant 0 : i32
    %c0_i32_0 = arith.constant 0 : i32
    %c0_i32_1 = arith.constant 0 : i32
    %c0_i32_2 = arith.constant 0 : i32
    return %arg1, %c0_i32, %c0_i32_0, %c0_i32_1 : i32, i32, i32, i32
  }
  func.func @transform_12(%arg0: i32, %arg1: i32) -> (i32, i32, i32, i32) {
    %c0_i32 = arith.constant 0 : i32
    %c0_i32_0 = arith.constant 0 : i32
    %c0_i32_1 = arith.constant 0 : i32
    %c0_i32_2 = arith.constant 0 : i32
    return %arg1, %c0_i32, %c0_i32_0, %c0_i32_1 : i32, i32, i32, i32
  }
  func.func @transform_13(%arg0: i32, %arg1: i32) -> (i32, i32, i32, i32) {
    %c0_i32 = arith.constant 0 : i32
    %c0_i32_0 = arith.constant 0 : i32
    %c0_i32_1 = arith.constant 0 : i32
    %c0_i32_2 = arith.constant 0 : i32
    return %arg1, %c0_i32, %c0_i32_0, %c0_i32_1 : i32, i32, i32, i32
  }
  func.func @transform_14(%arg0: i32, %arg1: i32) -> (i32, i32, i32) {
    %c0_i32 = arith.constant 0 : i32
    %c0_i32_0 = arith.constant 0 : i32
    %c0_i32_1 = arith.constant 0 : i32
    return %arg1, %c0_i32, %c0_i32_0 : i32, i32, i32
  }
  func.func @transform_15(%arg0: i32, %arg1: i32) -> (i32, i32, i32) {
    %c0_i32 = arith.constant 0 : i32
    %c0_i32_0 = arith.constant 0 : i32
    %c0_i32_1 = arith.constant 0 : i32
    return %arg1, %c0_i32, %c0_i32_0 : i32, i32, i32
  }
  func.func @transform_16(%arg0: i32, %arg1: i32) -> (i32, i32, i32) {
    %c0_i32 = arith.constant 0 : i32
    %c0_i32_0 = arith.constant 0 : i32
    %c0_i32_1 = arith.constant 0 : i32
    return %arg1, %c0_i32, %c0_i32_0 : i32, i32, i32
  }
  func.func @transform_17(%arg0: i32, %arg1: i32) -> (i32, i32, i32) {
    %c0_i32 = arith.constant 0 : i32
    %c0_i32_0 = arith.constant 0 : i32
    %c0_i32_1 = arith.constant 0 : i32
    return %arg1, %c0_i32, %c0_i32_0 : i32, i32, i32
  }
  func.func @transform_18(%arg0: i32, %arg1: i32) -> (i32, i32, i32) {
    %c0_i32 = arith.constant 0 : i32
    %c0_i32_0 = arith.constant 0 : i32
    %c0_i32_1 = arith.constant 0 : i32
    return %arg1, %c0_i32, %c0_i32_0 : i32, i32, i32
  }
  func.func @transform_19(%arg0: i32, %arg1: i32) -> (i32, i32, i32) {
    %c0_i32 = arith.constant 0 : i32
    %c0_i32_0 = arith.constant 0 : i32
    %c0_i32_1 = arith.constant 0 : i32
    return %arg1, %c0_i32, %c0_i32_0 : i32, i32, i32
  }
  func.func @transform_20(%arg0: i32, %arg1: i32) -> (i32, i32, i32) {
    %c0_i32 = arith.constant 0 : i32
    %c0_i32_0 = arith.constant 0 : i32
    %c0_i32_1 = arith.constant 0 : i32
    return %arg1, %c0_i32, %c0_i32_0 : i32, i32, i32
  }
  func.func @transform_21(%arg0: i32, %arg1: i32) -> (i32, i32) {
    %c0_i32 = arith.constant 0 : i32
    %c0_i32_0 = arith.constant 0 : i32
    %c0_i32_1 = arith.constant 0 : i32
    return %c0_i32, %c0_i32_0 : i32, i32
  }
  func.func @transform_22(%arg0: i32, %arg1: i32) -> (i32, i32) {
    %c0_i32 = arith.constant 0 : i32
    %c0_i32_0 = arith.constant 0 : i32
    %c0_i32_1 = arith.constant 0 : i32
    return %c0_i32, %c0_i32_0 : i32, i32
  }
  func.func @transform_23(%arg0: i32, %arg1: i32) -> (i32, i32, i32) {
    %c0_i32 = arith.constant 0 : i32
    %c0_i32_0 = arith.constant 0 : i32
    %c0_i32_1 = arith.constant 0 : i32
    return %arg0, %c0_i32, %c0_i32_0 : i32, i32, i32
  }
}

</mosaic_0001>

<llo_original>
// kernel: tpu_custom_call.1
$region0: #{tpu_custom_call.1}
  #allocation0 [shape = 'u32[]', space=smem, size = 0x4, offset = 0x4, fixed_abs, tag = 'smem constant byte address 0x4 - core index']
  #allocation1 [shape = 'u32[144,128]{1,0:T(1,128)}', space=vmem, size = 0x12000, scoped, tag = 'internal scratch']
  #allocation2 [shape = 'f32[24,32]{1,0:T(8,128)}', space=vmem, size = 0x3000, scoped, tag = 'scratch operand']
  %s0 = inlined_call_operand.vmem [shape: f32[2,16,64], index: 0, kind: input, shape index: {}]
  %s1 = inlined_call_operand.vmem [shape: f32[64,32], index: 1, kind: input, shape index: {}]
  %s2 = inlined_call_operand.vmem [shape: f32[1,32], index: 2, kind: input, shape index: {}]
  %s3 = inlined_call_operand.vmem [shape: f32[16,32], index: 3, kind: input, shape index: {}]
  %s4 = inlined_call_operand.vmem [shape: f32[8,32], index: 4, kind: input, shape index: {}]
  %s5 = inlined_call_operand.vmem [shape: f32[3,1,32], index: 5, kind: input, shape index: {}]
  %s6 = inlined_call_operand.vmem [shape: f32[3,1,32], index: 6, kind: input, shape index: {}]
  %s7 = inlined_call_operand.vmem [shape: f32[3,4,32,8], index: 7, kind: input, shape index: {}]
  %s8 = inlined_call_operand.vmem [shape: f32[3,4,32,8], index: 8, kind: input, shape index: {}]
  %s9 = inlined_call_operand.vmem [shape: f32[3,4,32,8], index: 9, kind: input, shape index: {}]
  %s10 = inlined_call_operand.vmem [shape: f32[3,4,1,8], index: 10, kind: input, shape index: {}]
  %s11 = inlined_call_operand.vmem [shape: f32[3,4,1,8], index: 11, kind: input, shape index: {}]
  %s12 = inlined_call_operand.vmem [shape: f32[3,4,1,8], index: 12, kind: input, shape index: {}]
  %s13 = inlined_call_operand.vmem [shape: f32[3,4,8,32], index: 13, kind: input, shape index: {}]
  %s14 = inlined_call_operand.vmem [shape: f32[3,1,32], index: 14, kind: input, shape index: {}]
  %s15 = inlined_call_operand.vmem [shape: f32[3,1,32], index: 15, kind: input, shape index: {}]
  %s16 = inlined_call_operand.vmem [shape: f32[3,1,32], index: 16, kind: input, shape index: {}]
  %s17 = inlined_call_operand.vmem [shape: f32[3,32,64], index: 17, kind: input, shape index: {}]
  %s18 = inlined_call_operand.vmem [shape: f32[3,1,64], index: 18, kind: input, shape index: {}]
  %s19 = inlined_call_operand.vmem [shape: f32[3,64,32], index: 19, kind: input, shape index: {}]
  %s20 = inlined_call_operand.vmem [shape: f32[3,1,32], index: 20, kind: input, shape index: {}]
  %s21 = inlined_call_operand.vmem [shape: f32[32,8], index: 21, kind: input, shape index: {}]
  %s22 = inlined_call_operand.vmem [shape: f32[1,8], index: 22, kind: input, shape index: {}]
  %s23 = inlined_call_operand.hbm [shape: f32[2,1,8], index: 23, kind: output, shape index: {}]
  %s24 = sld [smem:[#allocation0]]
  $region133: #{tpu_custom_call.1} parent=0
    _
  %s26 = ssub.s32 1, %s24
  %s27 = scalar_select 0, %s26, %s24
  $region1: #{tpu_custom_call.1} parent=0
    #allocation3 [shape = 'u8[1024]{0}', space=vmem, size = 0x400, scoped, tag = 'output window, operand 0']
    #allocation4 [shape = 's32[2]{0}', space=sflag, size = 0x8, scoped, tag = 'scoped memory for tpu_custom_call.1']
    %28 = vsyncpa [#allocation4], 0
    %s29 = scalar_lea.sflag [#allocation4], 1
    %30 = vsyncpa %s29, 0
    loop: start=0, step=1, limit=8
    $region2: #{tpu_custom_call.1} parent=1 // loop_pre_header
      _
    $region3: #{tpu_custom_call.1} parent=1 // loop_header
      %s32 = sphi 0, %s36
      %p33 = scmp.ge.s32.totalorder %s32, 8
      %s39 = sphi 0, %s51
      %s40 = sphi 0, %s47
      %s41 = sphi 0, %s39
      %s42 = sphi 0, %s40
      %s43 = sphi 0, %s41
      %s44 = sphi 0, %s42
      %s54 = sphi 0, %s56
      %s57 = sphi 0, %s54
      %s58 = sphi 0, %s57
      %s74 = sphi 0, %s58
      %s78 = sphi 0, %s78
      %s80 = sphi 0, %s78
      %s81 = sphi 0, %s80
      %s95 = sphi 0, %s81
      %s99 = sphi 0, %s99
      %s101 = sphi 0, %s99
      %s102 = sphi 0, %s101
      %s116 = sphi 0, %s102
      %s120 = sphi 0, %s120
      %s122 = sphi 0, %s120
      %s123 = sphi 0, %s122
      %s137 = sphi 0, %s123
      %s141 = sphi 0, %s141
      %s143 = sphi 0, %s141
      %s144 = sphi 0, %s143
      %s158 = sphi 0, %s144
      %s164 = sphi 0, %s166
      %s167 = sphi 0, %s164
      %s168 = sphi 0, %s167
      %s184 = sphi 0, %s168
      %s190 = sphi 0, %s192
      %s193 = sphi 0, %s190
      %s194 = sphi 0, %s193
      %s210 = sphi 0, %s194
      %s216 = sphi 0, %s218
      %s219 = sphi 0, %s216
      %s220 = sphi 0, %s219
      %s236 = sphi 0, %s220
      %s242 = sphi 0, %s244
      %s245 = sphi 0, %s242
      %s246 = sphi 0, %s245
      %s262 = sphi 0, %s246
      %s268 = sphi 0, %s270
      %s271 = sphi 0, %s268
      %s272 = sphi 0, %s271
      %s288 = sphi 0, %s272
      %s294 = sphi 0, %s296
      %s297 = sphi 0, %s294
      %s298 = sphi 0, %s297
      %s314 = sphi 0, %s298
      %s320 = sphi 0, %s322
      %s323 = sphi 0, %s320
      %s324 = sphi 0, %s323
      %s340 = sphi 0, %s324
      %s346 = sphi 0, %s348
      %s349 = sphi 0, %s346
      %s350 = sphi 0, %s349
      %s366 = sphi 0, %s350
      %s372 = sphi 0, %s374
      %s375 = sphi 0, %s372
      %s376 = sphi 0, %s375
      %s392 = sphi 0, %s376
      %s398 = sphi 0, %s400
      %s401 = sphi 0, %s398
      %s402 = sphi 0, %s401
      %s418 = sphi 0, %s402
      %s424 = sphi 0, %s426
      %s427 = sphi 0, %s424
      %s428 = sphi 0, %s427
      %s444 = sphi 0, %s428
      %s450 = sphi 0, %s452
      %s453 = sphi 0, %s450
      %s454 = sphi 0, %s453
      %s470 = sphi 0, %s454
      %s476 = sphi 0, %s478
      %s479 = sphi 0, %s476
      %s480 = sphi 0, %s479
      %s496 = sphi 0, %s480
      %s502 = sphi 0, %s504
      %s505 = sphi 0, %s502
      %s506 = sphi 0, %s505
      %s522 = sphi 0, %s506
      %s528 = sphi 0, %s530
      %s531 = sphi 0, %s528
      %s532 = sphi 0, %s531
      %s548 = sphi 0, %s532
      %s554 = sphi 0, %s556
      %s557 = sphi 0, %s554
      %s558 = sphi 0, %s557
      %s574 = sphi 0, %s558
      %s578 = sphi 0, %s578
      %s580 = sphi 0, %s578
      %s581 = sphi 0, %s580
      %s595 = sphi 0, %s581
      %s599 = sphi 0, %s599
      %s601 = sphi 0, %s599
      %s602 = sphi 0, %s601
      %s616 = sphi 0, %s602
      %s622 = sphi 0, %s624
      %s625 = sphi 0, %s622
      %s626 = sphi 0, %s625
      %s642 = sphi 0, %s626
    $region4: #{tpu_custom_call.1} parent=1 // loop_header_branch
      %35 = sbr.rel (%p33) target = $region8
    $region5: #{tpu_custom_call.1} parent=1 // loop_body
      %s37 = ssub.s32 %s32, 1
      %s38 = ssub.s32 %s32, 2
      %s45 = sadd.s32 1, %s40
      %p46 = scmp.ge.s32.totalorder %s45, 3
      %s47 = scalar_select %p46, 0, %s45
      %s48 = sadd.s32 1, %s39
      %s49 = scalar_select %p46, %s48, %s39
      %p50 = scmp.ge.s32.totalorder %s49, 2
      %s51 = scalar_select %p50, 0, %s49
      %s52 = ssub.s32 %s39, %s51
      %p53 = scmp.eq.s32.totalorder %s52, 0
      %s55 = sadd.s32 %s54, 1
      %s56 = scalar_select %p53, %s54, %s55
      %p59 = pneg %p53
      %p60 = scmp.eq.s32.totalorder %s32, 5
      %p61 = por %p59, %p60
      %p62 = scmp.ne.s32.totalorder %s54, %s57
      %p63 = scmp.eq.s32.totalorder %s32, 0
      %p64 = por %p62, %p63
      %p65 = scmp.ne.s32.totalorder %s54, %s57
      %p66 = scmp.eq.s32.totalorder %s37, 5
      %p67 = por %p65, %p66
      %p68 = scmp.ne.s32.totalorder %s57, %s58
      %p69 = scmp.eq.s32.totalorder %s37, 0
      %p70 = por %p68, %p69
      %p71 = scmp.ne.s32.totalorder %s57, %s58
      %p72 = scmp.eq.s32.totalorder %s38, 5
      %p73 = por %p71, %p72
      %p75 = scmp.ne.s32.totalorder %s58, %s74
      %p76 = scmp.eq.s32.totalorder %s38, 0
      %p77 = por %p75, %p76
      %s79 = sadd.s32 %s78, 1
      %p82 = scmp.eq.s32.totalorder %s32, 5
      %p83 = scmp.ne.s32.totalorder %s78, %s80
      %p84 = scmp.eq.s32.totalorder %s32, 0
      %p85 = por %p83, %p84
      %p86 = scmp.ne.s32.totalorder %s78, %s80
      %p87 = scmp.eq.s32.totalorder %s37, 5
      %p88 = por %p86, %p87
      %p89 = scmp.ne.s32.totalorder %s80, %s81
      %p90 = scmp.eq.s32.totalorder %s37, 0
      %p91 = por %p89, %p90
      %p92 = scmp.ne.s32.totalorder %s80, %s81
      %p93 = scmp.eq.s32.totalorder %s38, 5
      %p94 = por %p92, %p93
      %p96 = scmp.ne.s32.totalorder %s81, %s95
      %p97 = scmp.eq.s32.totalorder %s38, 0
      %p98 = por %p96, %p97
      %s100 = sadd.s32 %s99, 1
      %p103 = scmp.eq.s32.totalorder %s32, 5
      %p104 = scmp.ne.s32.totalorder %s99, %s101
      %p105 = scmp.eq.s32.totalorder %s32, 0
      %p106 = por %p104, %p105
      %p107 = scmp.ne.s32.totalorder %s99, %s101
      %p108 = scmp.eq.s32.totalorder %s37, 5
      %p109 = por %p107, %p108
      %p110 = scmp.ne.s32.totalorder %s101, %s102
      %p111 = scmp.eq.s32.totalorder %s37, 0
      %p112 = por %p110, %p111
      %p113 = scmp.ne.s32.totalorder %s101, %s102
      %p114 = scmp.eq.s32.totalorder %s38, 5
      %p115 = por %p113, %p114
      %p117 = scmp.ne.s32.totalorder %s102, %s116
      %p118 = scmp.eq.s32.totalorder %s38, 0
      %p119 = por %p117, %p118
      %s121 = sadd.s32 %s120, 1
      %p124 = scmp.eq.s32.totalorder %s32, 5
      %p125 = scmp.ne.s32.totalorder %s120, %s122
      %p126 = scmp.eq.s32.totalorder %s32, 0
      %p127 = por %p125, %p126
      %p128 = scmp.ne.s32.totalorder %s120, %s122
      %p129 = scmp.eq.s32.totalorder %s37, 5
      %p130 = por %p128, %p129
      %p131 = scmp.ne.s32.totalorder %s122, %s123
      %p132 = scmp.eq.s32.totalorder %s37, 0
      %p133 = por %p131, %p132
      %p134 = scmp.ne.s32.totalorder %s122, %s123
      %p135 = scmp.eq.s32.totalorder %s38, 5
      %p136 = por %p134, %p135
      %p138 = scmp.ne.s32.totalorder %s123, %s137
      %p139 = scmp.eq.s32.totalorder %s38, 0
      %p140 = por %p138, %p139
      %s142 = sadd.s32 %s141, 1
      %p145 = scmp.eq.s32.totalorder %s32, 5
      %p146 = scmp.ne.s32.totalorder %s141, %s143
      %p147 = scmp.eq.s32.totalorder %s32, 0
      %p148 = por %p146, %p147
      %p149 = scmp.ne.s32.totalorder %s141, %s143
      %p150 = scmp.eq.s32.totalorder %s37, 5
      %p151 = por %p149, %p150
      %p152 = scmp.ne.s32.totalorder %s143, %s144
      %p153 = scmp.eq.s32.totalorder %s37, 0
      %p154 = por %p152, %p153
      %p155 = scmp.ne.s32.totalorder %s143, %s144
      %p156 = scmp.eq.s32.totalorder %s38, 5
      %p157 = por %p155, %p156
      %p159 = scmp.ne.s32.totalorder %s144, %s158
      %p160 = scmp.eq.s32.totalorder %s38, 0
      %p161 = por %p159, %p160
      %s162 = ssub.s32 %s40, %s47
      %p163 = scmp.eq.s32.totalorder %s162, 0
      %s165 = sadd.s32 %s164, 1
      %s166 = scalar_select %p163, %s164, %s165
      %p169 = pneg %p163
      %p170 = scmp.eq.s32.totalorder %s32, 5
      %p171 = por %p169, %p170
      %p172 = scmp.ne.s32.totalorder %s164, %s167
      %p173 = scmp.eq.s32.totalorder %s32, 0
      %p174 = por %p172, %p173
      %p175 = scmp.ne.s32.totalorder %s164, %s167
      %p176 = scmp.eq.s32.totalorder %s37, 5
      %p177 = por %p175, %p176
      %p178 = scmp.ne.s32.totalorder %s167, %s168
      %p179 = scmp.eq.s32.totalorder %s37, 0
      %p180 = por %p178, %p179
      %p181 = scmp.ne.s32.totalorder %s167, %s168
      %p182 = scmp.eq.s32.totalorder %s38, 5
      %p183 = por %p181, %p182
      %p185 = scmp.ne.s32.totalorder %s168, %s184
      %p186 = scmp.eq.s32.totalorder %s38, 0
      %p187 = por %p185, %p186
      %s188 = ssub.s32 %s40, %s47
      %p189 = scmp.eq.s32.totalorder %s188, 0
      %s191 = sadd.s32 %s190, 1
      %s192 = scalar_select %p189, %s190, %s191
      %p195 = pneg %p189
      %p196 = scmp.eq.s32.totalorder %s32, 5
      %p197 = por %p195, %p196
      %p198 = scmp.ne.s32.totalorder %s190, %s193
      %p199 = scmp.eq.s32.totalorder %s32, 0
      %p200 = por %p198, %p199
      %p201 = scmp.ne.s32.totalorder %s190, %s193
      %p202 = scmp.eq.s32.totalorder %s37, 5
      %p203 = por %p201, %p202
      %p204 = scmp.ne.s32.totalorder %s193, %s194
      %p205 = scmp.eq.s32.totalorder %s37, 0
      %p206 = por %p204, %p205
      %p207 = scmp.ne.s32.totalorder %s193, %s194
      %p208 = scmp.eq.s32.totalorder %s38, 5
      %p209 = por %p207, %p208
      %p211 = scmp.ne.s32.totalorder %s194, %s210
      %p212 = scmp.eq.s32.totalorder %s38, 0
      %p213 = por %p211, %p212
      %s214 = ssub.s32 %s40, %s47
      %p215 = scmp.eq.s32.totalorder %s214, 0
      %s217 = sadd.s32 %s216, 1
      %s218 = scalar_select %p215, %s216, %s217
      %p221 = pneg %p215
      %p222 = scmp.eq.s32.totalorder %s32, 5
      %p223 = por %p221, %p222
      %p224 = scmp.ne.s32.totalorder %s216, %s219
      %p225 = scmp.eq.s32.totalorder %s32, 0
      %p226 = por %p224, %p225
      %p227 = scmp.ne.s32.totalorder %s216, %s219
      %p228 = scmp.eq.s32.totalorder %s37, 5
      %p229 = por %p227, %p228
      %p230 = scmp.ne.s32.totalorder %s219, %s220
      %p231 = scmp.eq.s32.totalorder %s37, 0
      %p232 = por %p230, %p231
      %p233 = scmp.ne.s32.totalorder %s219, %s220
      %p234 = scmp.eq.s32.totalorder %s38, 5
      %p235 = por %p233, %p234
      %p237 = scmp.ne.s32.totalorder %s220, %s236
      %p238 = scmp.eq.s32.totalorder %s38, 0
      %p239 = por %p237, %p238
      %s240 = ssub.s32 %s40, %s47
      %p241 = scmp.eq.s32.totalorder %s240, 0
      %s243 = sadd.s32 %s242, 1
      %s244 = scalar_select %p241, %s242, %s243
      %p247 = pneg %p241
      %p248 = scmp.eq.s32.totalorder %s32, 5
      %p249 = por %p247, %p248
      %p250 = scmp.ne.s32.totalorder %s242, %s245
      %p251 = scmp.eq.s32.totalorder %s32, 0
      %p252 = por %p250, %p251
      %p253 = scmp.ne.s32.totalorder %s242, %s245
      %p254 = scmp.eq.s32.totalorder %s37, 5
      %p255 = por %p253, %p254
      %p256 = scmp.ne.s32.totalorder %s245, %s246
      %p257 = scmp.eq.s32.totalorder %s37, 0
      %p258 = por %p256, %p257
      %p259 = scmp.ne.s32.totalorder %s245, %s246
      %p260 = scmp.eq.s32.totalorder %s38, 5
      %p261 = por %p259, %p260
      %p263 = scmp.ne.s32.totalorder %s246, %s262
      %p264 = scmp.eq.s32.totalorder %s38, 0
      %p265 = por %p263, %p264
      %s266 = ssub.s32 %s40, %s47
      %p267 = scmp.eq.s32.totalorder %s266, 0
      %s269 = sadd.s32 %s268, 1
      %s270 = scalar_select %p267, %s268, %s269
      %p273 = pneg %p267
      %p274 = scmp.eq.s32.totalorder %s32, 5
      %p275 = por %p273, %p274
      %p276 = scmp.ne.s32.totalorder %s268, %s271
      %p277 = scmp.eq.s32.totalorder %s32, 0
      %p278 = por %p276, %p277
      %p279 = scmp.ne.s32.totalorder %s268, %s271
      %p280 = scmp.eq.s32.totalorder %s37, 5
      %p281 = por %p279, %p280
      %p282 = scmp.ne.s32.totalorder %s271, %s272
      %p283 = scmp.eq.s32.totalorder %s37, 0
      %p284 = por %p282, %p283
      %p285 = scmp.ne.s32.totalorder %s271, %s272
      %p286 = scmp.eq.s32.totalorder %s38, 5
      %p287 = por %p285, %p286
      %p289 = scmp.ne.s32.totalorder %s272, %s288
      %p290 = scmp.eq.s32.totalorder %s38, 0
      %p291 = por %p289, %p290
      %s292 = ssub.s32 %s40, %s47
      %p293 = scmp.eq.s32.totalorder %s292, 0
      %s295 = sadd.s32 %s294, 1
      %s296 = scalar_select %p293, %s294, %s295
      %p299 = pneg %p293
      %p300 = scmp.eq.s32.totalorder %s32, 5
      %p301 = por %p299, %p300
      %p302 = scmp.ne.s32.totalorder %s294, %s297
      %p303 = scmp.eq.s32.totalorder %s32, 0
      %p304 = por %p302, %p303
      %p305 = scmp.ne.s32.totalorder %s294, %s297
      %p306 = scmp.eq.s32.totalorder %s37, 5
      %p307 = por %p305, %p306
      %p308 = scmp.ne.s32.totalorder %s297, %s298
      %p309 = scmp.eq.s32.totalorder %s37, 0
      %p310 = por %p308, %p309
      %p311 = scmp.ne.s32.totalorder %s297, %s298
      %p312 = scmp.eq.s32.totalorder %s38, 5
      %p313 = por %p311, %p312
      %p315 = scmp.ne.s32.totalorder %s298, %s314
      %p316 = scmp.eq.s32.totalorder %s38, 0
      %p317 = por %p315, %p316
      %s318 = ssub.s32 %s40, %s47
      %p319 = scmp.eq.s32.totalorder %s318, 0
      %s321 = sadd.s32 %s320, 1
      %s322 = scalar_select %p319, %s320, %s321
      %p325 = pneg %p319
      %p326 = scmp.eq.s32.totalorder %s32, 5
      %p327 = por %p325, %p326
      %p328 = scmp.ne.s32.totalorder %s320, %s323
      %p329 = scmp.eq.s32.totalorder %s32, 0
      %p330 = por %p328, %p329
      %p331 = scmp.ne.s32.totalorder %s320, %s323
      %p332 = scmp.eq.s32.totalorder %s37, 5
      %p333 = por %p331, %p332
      %p334 = scmp.ne.s32.totalorder %s323, %s324
      %p335 = scmp.eq.s32.totalorder %s37, 0
      %p336 = por %p334, %p335
      %p337 = scmp.ne.s32.totalorder %s323, %s324
      %p338 = scmp.eq.s32.totalorder %s38, 5
      %p339 = por %p337, %p338
      %p341 = scmp.ne.s32.totalorder %s324, %s340
      %p342 = scmp.eq.s32.totalorder %s38, 0
      %p343 = por %p341, %p342
      %s344 = ssub.s32 %s40, %s47
      %p345 = scmp.eq.s32.totalorder %s344, 0
      %s347 = sadd.s32 %s346, 1
      %s348 = scalar_select %p345, %s346, %s347
      %p351 = pneg %p345
      %p352 = scmp.eq.s32.totalorder %s32, 5
      %p353 = por %p351, %p352
      %p354 = scmp.ne.s32.totalorder %s346, %s349
      %p355 = scmp.eq.s32.totalorder %s32, 0
      %p356 = por %p354, %p355
      %p357 = scmp.ne.s32.totalorder %s346, %s349
      %p358 = scmp.eq.s32.totalorder %s37, 5
      %p359 = por %p357, %p358
      %p360 = scmp.ne.s32.totalorder %s349, %s350
      %p361 = scmp.eq.s32.totalorder %s37, 0
      %p362 = por %p360, %p361
      %p363 = scmp.ne.s32.totalorder %s349, %s350
      %p364 = scmp.eq.s32.totalorder %s38, 5
      %p365 = por %p363, %p364
      %p367 = scmp.ne.s32.totalorder %s350, %s366
      %p368 = scmp.eq.s32.totalorder %s38, 0
      %p369 = por %p367, %p368
      %s370 = ssub.s32 %s40, %s47
      %p371 = scmp.eq.s32.totalorder %s370, 0
      %s373 = sadd.s32 %s372, 1
      %s374 = scalar_select %p371, %s372, %s373
      %p377 = pneg %p371
      %p378 = scmp.eq.s32.totalorder %s32, 5
      %p379 = por %p377, %p378
      %p380 = scmp.ne.s32.totalorder %s372, %s375
      %p381 = scmp.eq.s32.totalorder %s32, 0
      %p382 = por %p380, %p381
      %p383 = scmp.ne.s32.totalorder %s372, %s375
      %p384 = scmp.eq.s32.totalorder %s37, 5
      %p385 = por %p383, %p384
      %p386 = scmp.ne.s32.totalorder %s375, %s376
      %p387 = scmp.eq.s32.totalorder %s37, 0
      %p388 = por %p386, %p387
      %p389 = scmp.ne.s32.totalorder %s375, %s376
      %p390 = scmp.eq.s32.totalorder %s38, 5
      %p391 = por %p389, %p390
      %p393 = scmp.ne.s32.totalorder %s376, %s392
      %p394 = scmp.eq.s32.totalorder %s38, 0
      %p395 = por %p393, %p394
      %s396 = ssub.s32 %s40, %s47
      %p397 = scmp.eq.s32.totalorder %s396, 0
      %s399 = sadd.s32 %s398, 1
      %s400 = scalar_select %p397, %s398, %s399
      %p403 = pneg %p397
      %p404 = scmp.eq.s32.totalorder %s32, 5
      %p405 = por %p403, %p404
      %p406 = scmp.ne.s32.totalorder %s398, %s401
      %p407 = scmp.eq.s32.totalorder %s32, 0
      %p408 = por %p406, %p407
      %p409 = scmp.ne.s32.totalorder %s398, %s401
      %p410 = scmp.eq.s32.totalorder %s37, 5
      %p411 = por %p409, %p410
      %p412 = scmp.ne.s32.totalorder %s401, %s402
      %p413 = scmp.eq.s32.totalorder %s37, 0
      %p414 = por %p412, %p413
      %p415 = scmp.ne.s32.totalorder %s401, %s402
      %p416 = scmp.eq.s32.totalorder %s38, 5
      %p417 = por %p415, %p416
      %p419 = scmp.ne.s32.totalorder %s402, %s418
      %p420 = scmp.eq.s32.totalorder %s38, 0
      %p421 = por %p419, %p420
      %s422 = ssub.s32 %s40, %s47
      %p423 = scmp.eq.s32.totalorder %s422, 0
      %s425 = sadd.s32 %s424, 1
      %s426 = scalar_select %p423, %s424, %s425
      %p429 = pneg %p423
      %p430 = scmp.eq.s32.totalorder %s32, 5
      %p431 = por %p429, %p430
      %p432 = scmp.ne.s32.totalorder %s424, %s427
      %p433 = scmp.eq.s32.totalorder %s32, 0
      %p434 = por %p432, %p433
      %p435 = scmp.ne.s32.totalorder %s424, %s427
      %p436 = scmp.eq.s32.totalorder %s37, 5
      %p437 = por %p435, %p436
      %p438 = scmp.ne.s32.totalorder %s427, %s428
      %p439 = scmp.eq.s32.totalorder %s37, 0
      %p440 = por %p438, %p439
      %p441 = scmp.ne.s32.totalorder %s427, %s428
      %p442 = scmp.eq.s32.totalorder %s38, 5
      %p443 = por %p441, %p442
      %p445 = scmp.ne.s32.totalorder %s428, %s444
      %p446 = scmp.eq.s32.totalorder %s38, 0
      %p447 = por %p445, %p446
      %s448 = ssub.s32 %s40, %s47
      %p449 = scmp.eq.s32.totalorder %s448, 0
      %s451 = sadd.s32 %s450, 1
      %s452 = scalar_select %p449, %s450, %s451
      %p455 = pneg %p449
      %p456 = scmp.eq.s32.totalorder %s32, 5
      %p457 = por %p455, %p456
      %p458 = scmp.ne.s32.totalorder %s450, %s453
      %p459 = scmp.eq.s32.totalorder %s32, 0
      %p460 = por %p458, %p459
      %p461 = scmp.ne.s32.totalorder %s450, %s453
      %p462 = scmp.eq.s32.totalorder %s37, 5
      %p463 = por %p461, %p462
      %p464 = scmp.ne.s32.totalorder %s453, %s454
      %p465 = scmp.eq.s32.totalorder %s37, 0
      %p466 = por %p464, %p465
      %p467 = scmp.ne.s32.totalorder %s453, %s454
      %p468 = scmp.eq.s32.totalorder %s38, 5
      %p469 = por %p467, %p468
      %p471 = scmp.ne.s32.totalorder %s454, %s470
      %p472 = scmp.eq.s32.totalorder %s38, 0
      %p473 = por %p471, %p472
      %s474 = ssub.s32 %s40, %s47
      %p475 = scmp.eq.s32.totalorder %s474, 0
      %s477 = sadd.s32 %s476, 1
      %s478 = scalar_select %p475, %s476, %s477
      %p481 = pneg %p475
      %p482 = scmp.eq.s32.totalorder %s32, 5
      %p483 = por %p481, %p482
      %p484 = scmp.ne.s32.totalorder %s476, %s479
      %p485 = scmp.eq.s32.totalorder %s32, 0
      %p486 = por %p484, %p485
      %p487 = scmp.ne.s32.totalorder %s476, %s479
      %p488 = scmp.eq.s32.totalorder %s37, 5
      %p489 = por %p487, %p488
      %p490 = scmp.ne.s32.totalorder %s479, %s480
      %p491 = scmp.eq.s32.totalorder %s37, 0
      %p492 = por %p490, %p491
      %p493 = scmp.ne.s32.totalorder %s479, %s480
      %p494 = scmp.eq.s32.totalorder %s38, 5
      %p495 = por %p493, %p494
      %p497 = scmp.ne.s32.totalorder %s480, %s496
      %p498 = scmp.eq.s32.totalorder %s38, 0
      %p499 = por %p497, %p498
      %s500 = ssub.s32 %s40, %s47
      %p501 = scmp.eq.s32.totalorder %s500, 0
      %s503 = sadd.s32 %s502, 1
      %s504 = scalar_select %p501, %s502, %s503
      %p507 = pneg %p501
      %p508 = scmp.eq.s32.totalorder %s32, 5
      %p509 = por %p507, %p508
      %p510 = scmp.ne.s32.totalorder %s502, %s505
      %p511 = scmp.eq.s32.totalorder %s32, 0
      %p512 = por %p510, %p511
      %p513 = scmp.ne.s32.totalorder %s502, %s505
      %p514 = scmp.eq.s32.totalorder %s37, 5
      %p515 = por %p513, %p514
      %p516 = scmp.ne.s32.totalorder %s505, %s506
      %p517 = scmp.eq.s32.totalorder %s37, 0
      %p518 = por %p516, %p517
      %p519 = scmp.ne.s32.totalorder %s505, %s506
      %p520 = scmp.eq.s32.totalorder %s38, 5
      %p521 = por %p519, %p520
      %p523 = scmp.ne.s32.totalorder %s506, %s522
      %p524 = scmp.eq.s32.totalorder %s38, 0
      %p525 = por %p523, %p524
      %s526 = ssub.s32 %s40, %s47
      %p527 = scmp.eq.s32.totalorder %s526, 0
      %s529 = sadd.s32 %s528, 1
      %s530 = scalar_select %p527, %s528, %s529
      %p533 = pneg %p527
      %p534 = scmp.eq.s32.totalorder %s32, 5
      %p535 = por %p533, %p534
      %p536 = scmp.ne.s32.totalorder %s528, %s531
      %p537 = scmp.eq.s32.totalorder %s32, 0
      %p538 = por %p536, %p537
      %p539 = scmp.ne.s32.totalorder %s528, %s531
      %p540 = scmp.eq.s32.totalorder %s37, 5
      %p541 = por %p539, %p540
      %p542 = scmp.ne.s32.totalorder %s531, %s532
      %p543 = scmp.eq.s32.totalorder %s37, 0
      %p544 = por %p542, %p543
      %p545 = scmp.ne.s32.totalorder %s531, %s532
      %p546 = scmp.eq.s32.totalorder %s38, 5
      %p547 = por %p545, %p546
      %p549 = scmp.ne.s32.totalorder %s532, %s548
      %p550 = scmp.eq.s32.totalorder %s38, 0
      %p551 = por %p549, %p550
      %s552 = ssub.s32 %s40, %s47
      %p553 = scmp.eq.s32.totalorder %s552, 0
      %s555 = sadd.s32 %s554, 1
      %s556 = scalar_select %p553, %s554, %s555
      %p559 = pneg %p553
      %p560 = scmp.eq.s32.totalorder %s32, 5
      %p561 = por %p559, %p560
      %p562 = scmp.ne.s32.totalorder %s554, %s557
      %p563 = scmp.eq.s32.totalorder %s32, 0
      %p564 = por %p562, %p563
      %p565 = scmp.ne.s32.totalorder %s554, %s557
      %p566 = scmp.eq.s32.totalorder %s37, 5
      %p567 = por %p565, %p566
      %p568 = scmp.ne.s32.totalorder %s557, %s558
      %p569 = scmp.eq.s32.totalorder %s37, 0
      %p570 = por %p568, %p569
      %p571 = scmp.ne.s32.totalorder %s557, %s558
      %p572 = scmp.eq.s32.totalorder %s38, 5
      %p573 = por %p571, %p572
      %p575 = scmp.ne.s32.totalorder %s558, %s574
      %p576 = scmp.eq.s32.totalorder %s38, 0
      %p577 = por %p575, %p576
      %s579 = sadd.s32 %s578, 1
      %p582 = scmp.eq.s32.totalorder %s32, 5
      %p583 = scmp.ne.s32.totalorder %s578, %s580
      %p584 = scmp.eq.s32.totalorder %s32, 0
      %p585 = por %p583, %p584
      %p586 = scmp.ne.s32.totalorder %s578, %s580
      %p587 = scmp.eq.s32.totalorder %s37, 5
      %p588 = por %p586, %p587
      %p589 = scmp.ne.s32.totalorder %s580, %s581
      %p590 = scmp.eq.s32.totalorder %s37, 0
      %p591 = por %p589, %p590
      %p592 = scmp.ne.s32.totalorder %s580, %s581
      %p593 = scmp.eq.s32.totalorder %s38, 5
      %p594 = por %p592, %p593
      %p596 = scmp.ne.s32.totalorder %s581, %s595
      %p597 = scmp.eq.s32.totalorder %s38, 0
      %p598 = por %p596, %p597
      %s600 = sadd.s32 %s599, 1
      %p603 = scmp.eq.s32.totalorder %s32, 5
      %p604 = scmp.ne.s32.totalorder %s599, %s601
      %p605 = scmp.eq.s32.totalorder %s32, 0
      %p606 = por %p604, %p605
      %p607 = scmp.ne.s32.totalorder %s599, %s601
      %p608 = scmp.eq.s32.totalorder %s37, 5
      %p609 = por %p607, %p608
      %p610 = scmp.ne.s32.totalorder %s601, %s602
      %p611 = scmp.eq.s32.totalorder %s37, 0
      %p612 = por %p610, %p611
      %p613 = scmp.ne.s32.totalorder %s601, %s602
      %p614 = scmp.eq.s32.totalorder %s38, 5
      %p615 = por %p613, %p614
      %p617 = scmp.ne.s32.totalorder %s602, %s616
      %p618 = scmp.eq.s32.totalorder %s38, 0
      %p619 = por %p617, %p618
      %s620 = ssub.s32 %s39, %s51
      %p621 = scmp.eq.s32.totalorder %s620, 0
      %s623 = sadd.s32 %s622, 1
      %s624 = scalar_select %p621, %s622, %s623
      %p627 = pneg %p621
      %p628 = scmp.eq.s32.totalorder %s32, 5
      %p629 = por %p627, %p628
      %p630 = scmp.ne.s32.totalorder %s622, %s625
      %p631 = scmp.eq.s32.totalorder %s32, 0
      %p632 = por %p630, %p631
      %p633 = scmp.ne.s32.totalorder %s622, %s625
      %p634 = scmp.eq.s32.totalorder %s37, 5
      %p635 = por %p633, %p634
      %p636 = scmp.ne.s32.totalorder %s625, %s626
      %p637 = scmp.eq.s32.totalorder %s37, 0
      %p638 = por %p636, %p637
      %p639 = scmp.ne.s32.totalorder %s625, %s626
      %p640 = scmp.eq.s32.totalorder %s38, 5
      %p641 = por %p639, %p640
      %p643 = scmp.ne.s32.totalorder %s626, %s642
      %p644 = scmp.eq.s32.totalorder %s38, 0
      %p645 = por %p643, %p644
      %p646 = scmp.le.s32.totalorder 1, %s32
      %p647 = scmp.lt.s32.totalorder %s32, 7
      %p648 = pnand %p646, %p647
      %p649 = pneg %p648
      // Predicated region
      $region9: #{tpu_custom_call.1} parent=5 // pred_check
        _
      $region10: #{tpu_custom_call.1} parent=5 // pred_check_branch
        %651 = sbr.rel (%p648) target = $region12
      $region11: #{tpu_custom_call.1} parent=5 // pred_region
        %s652 = ssub.s32 %s32, 1
        // Predicated region
        $region13: #{tpu_custom_call.1} parent=11 // pred_check
          %p653 = pneg %p91
        $region14: #{tpu_custom_call.1} parent=11 // pred_check_branch
          %655 = sbr.rel (%p653) target = $region16
        $region15: #{tpu_custom_call.1} parent=11 // pred_region
          _
        $region16: #{tpu_custom_call.1} parent=11 // pred_fallthru
          _
        // Predicated region
        $region17: #{tpu_custom_call.1} parent=11 // pred_check
          %p656 = pneg %p112
        $region18: #{tpu_custom_call.1} parent=11 // pred_check_branch
          %658 = sbr.rel (%p656) target = $region20
        $region19: #{tpu_custom_call.1} parent=11 // pred_region
          _
        $region20: #{tpu_custom_call.1} parent=11 // pred_fallthru
          _
        // Predicated region
        $region21: #{tpu_custom_call.1} parent=11 // pred_check
          %p659 = pneg %p133
        $region22: #{tpu_custom_call.1} parent=11 // pred_check_branch
          %661 = sbr.rel (%p659) target = $region24
        $region23: #{tpu_custom_call.1} parent=11 // pred_region
          _
        $region24: #{tpu_custom_call.1} parent=11 // pred_fallthru
          _
        // Predicated region
        $region25: #{tpu_custom_call.1} parent=11 // pred_check
          %p662 = pneg %p154
        $region26: #{tpu_custom_call.1} parent=11 // pred_check_branch
          %664 = sbr.rel (%p662) target = $region28
        $region27: #{tpu_custom_call.1} parent=11 // pred_region
          _
        $region28: #{tpu_custom_call.1} parent=11 // pred_fallthru
          _
        // Predicated region
        $region29: #{tpu_custom_call.1} parent=11 // pred_check
          %p665 = pneg %p591
        $region30: #{tpu_custom_call.1} parent=11 // pred_check_branch
          %667 = sbr.rel (%p665) target = $region32
        $region31: #{tpu_custom_call.1} parent=11 // pred_region
          _
        $region32: #{tpu_custom_call.1} parent=11 // pred_fallthru
          _
        // Predicated region
        $region33: #{tpu_custom_call.1} parent=11 // pred_check
          %p668 = pneg %p612
        $region34: #{tpu_custom_call.1} parent=11 // pred_check_branch
          %670 = sbr.rel (%p668) target = $region36
        $region35: #{tpu_custom_call.1} parent=11 // pred_region
          _
        $region36: #{tpu_custom_call.1} parent=11 // pred_fallthru
          _
      $region12: #{tpu_custom_call.1} parent=5 // pred_fallthru
        _
      %p671 = scmp.lt.s32.totalorder %s32, 6
      // Predicated region
      $region37: #{tpu_custom_call.1} parent=5 // pred_check
        %p672 = pneg %p671
      $region38: #{tpu_custom_call.1} parent=5 // pred_check_branch
        %674 = sbr.rel (%p672) target = $region40
      $region39: #{tpu_custom_call.1} parent=5 // pred_region
        // Predicated region
        $region41: #{tpu_custom_call.1} parent=39 // pred_check
          %p675 = pneg %p64
        $region42: #{tpu_custom_call.1} parent=39 // pred_check_branch
          %677 = sbr.rel (%p675) target = $region44
        $region43: #{tpu_custom_call.1} parent=39 // pred_region
          %p678 = scmp.lt.s32.totalorder %s39, 1
          %s679 = scalar_select %p678, %s39, 1
          %s680 = smul.addr %s679, 2
          %s681 = smul.addr %s680, 8
          %s682 = scalar_lea.vmem %s0, %s681
        $region44: #{tpu_custom_call.1} parent=39 // pred_fallthru
          _
        // Predicated region
        $region45: #{tpu_custom_call.1} parent=39 // pred_check
          %p683 = pneg %p174
        $region46: #{tpu_custom_call.1} parent=39 // pred_check_branch
          %685 = sbr.rel (%p683) target = $region48
        $region47: #{tpu_custom_call.1} parent=39 // pred_region
          %p686 = scmp.lt.s32.totalorder %s40, 2
          %s687 = scalar_select %p686, %s40, 2
          %s688 = scalar_lea.vmem %s5, %s687
        $region48: #{tpu_custom_call.1} parent=39 // pred_fallthru
          _
        // Predicated region
        $region49: #{tpu_custom_call.1} parent=39 // pred_check
          %p689 = pneg %p200
        $region50: #{tpu_custom_call.1} parent=39 // pred_check_branch
          %691 = sbr.rel (%p689) target = $region52
        $region51: #{tpu_custom_call.1} parent=39 // pred_region
          %p692 = scmp.lt.s32.totalorder %s40, 2
          %s693 = scalar_select %p692, %s40, 2
          %s694 = scalar_lea.vmem %s6, %s693
        $region52: #{tpu_custom_call.1} parent=39 // pred_fallthru
          _
        // Predicated region
        $region53: #{tpu_custom_call.1} parent=39 // pred_check
          %p695 = pneg %p226
        $region54: #{tpu_custom_call.1} parent=39 // pred_check_branch
          %697 = sbr.rel (%p695) target = $region56
        $region55: #{tpu_custom_call.1} parent=39 // pred_region
          %p698 = scmp.lt.s32.totalorder %s40, 2
          %s699 = scalar_select %p698, %s40, 2
          %s700 = smul.addr %s699, 16
          %s701 = smul.addr %s700, 8
          %s702 = scalar_lea.vmem %s7, %s701
        $region56: #{tpu_custom_call.1} parent=39 // pred_fallthru
          _
        // Predicated region
        $region57: #{tpu_custom_call.1} parent=39 // pred_check
          %p703 = pneg %p252
        $region58: #{tpu_custom_call.1} parent=39 // pred_check_branch
          %705 = sbr.rel (%p703) target = $region60
        $region59: #{tpu_custom_call.1} parent=39 // pred_region
          %p706 = scmp.lt.s32.totalorder %s40, 2
          %s707 = scalar_select %p706, %s40, 2
          %s708 = smul.addr %s707, 16
          %s709 = smul.addr %s708, 8
          %s710 = scalar_lea.vmem %s8, %s709
        $region60: #{tpu_custom_call.1} parent=39 // pred_fallthru
          _
        // Predicated region
        $region61: #{tpu_custom_call.1} parent=39 // pred_check
          %p711 = pneg %p278
        $region62: #{tpu_custom_call.1} parent=39 // pred_check_branch
          %713 = sbr.rel (%p711) target = $region64
        $region63: #{tpu_custom_call.1} parent=39 // pred_region
          %p714 = scmp.lt.s32.totalorder %s40, 2
          %s715 = scalar_select %p714, %s40, 2
          %s716 = smul.addr %s715, 16
          %s717 = smul.addr %s716, 8
          %s718 = scalar_lea.vmem %s9, %s717
        $region64: #{tpu_custom_call.1} parent=39 // pred_fallthru
          _
        // Predicated region
        $region65: #{tpu_custom_call.1} parent=39 // pred_check
          %p719 = pneg %p304
        $region66: #{tpu_custom_call.1} parent=39 // pred_check_branch
          %721 = sbr.rel (%p719) target = $region68
        $region67: #{tpu_custom_call.1} parent=39 // pred_region
          %p722 = scmp.lt.s32.totalorder %s40, 2
          %s723 = scalar_select %p722, %s40, 2
          %s724 = smul.addr %s723, 4
          %s725 = scalar_lea.vmem %s10, %s724
        $region68: #{tpu_custom_call.1} parent=39 // pred_fallthru
          _
        // Predicated region
        $region69: #{tpu_custom_call.1} parent=39 // pred_check
          %p726 = pneg %p330
        $region70: #{tpu_custom_call.1} parent=39 // pred_check_branch
          %728 = sbr.rel (%p726) target = $region72
        $region71: #{tpu_custom_call.1} parent=39 // pred_region
          %p729 = scmp.lt.s32.totalorder %s40, 2
          %s730 = scalar_select %p729, %s40, 2
          %s731 = smul.addr %s730, 4
          %s732 = scalar_lea.vmem %s11, %s731
        $region72: #{tpu_custom_call.1} parent=39 // pred_fallthru
          _
        // Predicated region
        $region73: #{tpu_custom_call.1} parent=39 // pred_check
          %p733 = pneg %p356
        $region74: #{tpu_custom_call.1} parent=39 // pred_check_branch
          %735 = sbr.rel (%p733) target = $region76
        $region75: #{tpu_custom_call.1} parent=39 // pred_region
          %p736 = scmp.lt.s32.totalorder %s40, 2
          %s737 = scalar_select %p736, %s40, 2
          %s738 = smul.addr %s737, 4
          %s739 = scalar_lea.vmem %s12, %s738
        $region76: #{tpu_custom_call.1} parent=39 // pred_fallthru
          _
        // Predicated region
        $region77: #{tpu_custom_call.1} parent=39 // pred_check
          %p740 = pneg %p382
        $region78: #{tpu_custom_call.1} parent=39 // pred_check_branch
          %742 = sbr.rel (%p740) target = $region80
        $region79: #{tpu_custom_call.1} parent=39 // pred_region
          %p743 = scmp.lt.s32.totalorder %s40, 2
          %s744 = scalar_select %p743, %s40, 2
          %s745 = smul.addr %s744, 4
          %s746 = smul.addr %s745, 8
          %s747 = scalar_lea.vmem %s13, %s746
        $region80: #{tpu_custom_call.1} parent=39 // pred_fallthru
          _
        // Predicated region
        $region81: #{tpu_custom_call.1} parent=39 // pred_check
          %p748 = pneg %p408
        $region82: #{tpu_custom_call.1} parent=39 // pred_check_branch
          %750 = sbr.rel (%p748) target = $region84
        $region83: #{tpu_custom_call.1} parent=39 // pred_region
          %p751 = scmp.lt.s32.totalorder %s40, 2
          %s752 = scalar_select %p751, %s40, 2
          %s753 = scalar_lea.vmem %s14, %s752
        $region84: #{tpu_custom_call.1} parent=39 // pred_fallthru
          _
        // Predicated region
        $region85: #{tpu_custom_call.1} parent=39 // pred_check
          %p754 = pneg %p434
        $region86: #{tpu_custom_call.1} parent=39 // pred_check_branch
          %756 = sbr.rel (%p754) target = $region88
        $region87: #{tpu_custom_call.1} parent=39 // pred_region
          %p757 = scmp.lt.s32.totalorder %s40, 2
          %s758 = scalar_select %p757, %s40, 2
          %s759 = scalar_lea.vmem %s15, %s758
        $region88: #{tpu_custom_call.1} parent=39 // pred_fallthru
          _
        // Predicated region
        $region89: #{tpu_custom_call.1} parent=39 // pred_check
          %p760 = pneg %p460
        $region90: #{tpu_custom_call.1} parent=39 // pred_check_branch
          %762 = sbr.rel (%p760) target = $region92
        $region91: #{tpu_custom_call.1} parent=39 // pred_region
          %p763 = scmp.lt.s32.totalorder %s40, 2
          %s764 = scalar_select %p763, %s40, 2
          %s765 = scalar_lea.vmem %s16, %s764
        $region92: #{tpu_custom_call.1} parent=39 // pred_fallthru
          _
        // Predicated region
        $region93: #{tpu_custom_call.1} parent=39 // pred_check
          %p766 = pneg %p486
        $region94: #{tpu_custom_call.1} parent=39 // pred_check_branch
          %768 = sbr.rel (%p766) target = $region96
        $region95: #{tpu_custom_call.1} parent=39 // pred_region
          %p769 = scmp.lt.s32.totalorder %s40, 2
          %s770 = scalar_select %p769, %s40, 2
          %s771 = smul.addr %s770, 4
          %s772 = smul.addr %s771, 8
          %s773 = scalar_lea.vmem %s17, %s772
        $region96: #{tpu_custom_call.1} parent=39 // pred_fallthru
          _
        // Predicated region
        $region97: #{tpu_custom_call.1} parent=39 // pred_check
          %p774 = pneg %p512
        $region98: #{tpu_custom_call.1} parent=39 // pred_check_branch
          %776 = sbr.rel (%p774) target = $region100
        $region99: #{tpu_custom_call.1} parent=39 // pred_region
          %p777 = scmp.lt.s32.totalorder %s40, 2
          %s778 = scalar_select %p777, %s40, 2
          %s779 = scalar_lea.vmem %s18, %s778
        $region100: #{tpu_custom_call.1} parent=39 // pred_fallthru
          _
        // Predicated region
        $region101: #{tpu_custom_call.1} parent=39 // pred_check
          %p780 = pneg %p538
        $region102: #{tpu_custom_call.1} parent=39 // pred_check_branch
          %782 = sbr.rel (%p780) target = $region104
        $region103: #{tpu_custom_call.1} parent=39 // pred_region
          %p783 = scmp.lt.s32.totalorder %s40, 2
          %s784 = scalar_select %p783, %s40, 2
          %s785 = smul.addr %s784, 8
          %s786 = smul.addr %s785, 8
          %s787 = scalar_lea.vmem %s19, %s786
        $region104: #{tpu_custom_call.1} parent=39 // pred_fallthru
          _
        // Predicated region
        $region105: #{tpu_custom_call.1} parent=39 // pred_check
          %p788 = pneg %p564
        $region106: #{tpu_custom_call.1} parent=39 // pred_check_branch
          %790 = sbr.rel (%p788) target = $region108
        $region107: #{tpu_custom_call.1} parent=39 // pred_region
          %p791 = scmp.lt.s32.totalorder %s40, 2
          %s792 = scalar_select %p791, %s40, 2
          %s793 = scalar_lea.vmem %s20, %s792
        $region108: #{tpu_custom_call.1} parent=39 // pred_fallthru
          _
      $region40: #{tpu_custom_call.1} parent=5 // pred_fallthru
        _
      %p794 = scmp.le.s32.totalorder 1, %s32
      %p795 = scmp.lt.s32.totalorder %s32, 7
      %p796 = pnand %p794, %p795
      %p797 = pneg %p796
      // Predicated region
      $region109: #{tpu_custom_call.1} parent=5 // pred_check
        _
      $region110: #{tpu_custom_call.1} parent=5 // pred_check_branch
        %799 = sbr.rel (%p796) target = $region112
      $region111: #{tpu_custom_call.1} parent=5 // pred_region
        %s800 = ssub.s32 %s32, 1
        %p801 = scmp.lt.s32.totalorder %s41, 1
        %s802 = scalar_select %p801, %s41, 1
        %s803 = smul.addr %s802, 2
        %s804 = smul.addr %s803, 8
        %s805 = scalar_lea.vmem %s0, %s804
        %p806 = pneg %p70
        %p807 = pneg %p67
        %p808 = pneg %p91
        %p809 = pneg %p88
        %p810 = pneg %p112
        %p811 = pneg %p109
        %p812 = pneg %p133
        %p813 = pneg %p130
        %p814 = pneg %p154
        %p815 = pneg %p151
        %p816 = scmp.lt.s32.totalorder %s42, 2
        %s817 = scalar_select %p816, %s42, 2
        %s818 = scalar_lea.vmem %s5, %s817
        %p819 = pneg %p180
        %p820 = pneg %p177
        %p821 = scmp.lt.s32.totalorder %s42, 2
        %s822 = scalar_select %p821, %s42, 2
        %s823 = scalar_lea.vmem %s6, %s822
        %p824 = pneg %p206
        %p825 = pneg %p203
        %p826 = scmp.lt.s32.totalorder %s42, 2
        %s827 = scalar_select %p826, %s42, 2
        %s828 = smul.addr %s827, 16
        %s829 = smul.addr %s828, 8
        %s830 = scalar_lea.vmem %s7, %s829
        %p831 = pneg %p232
        %p832 = pneg %p229
        %p833 = scmp.lt.s32.totalorder %s42, 2
        %s834 = scalar_select %p833, %s42, 2
        %s835 = smul.addr %s834, 16
        %s836 = smul.addr %s835, 8
        %s837 = scalar_lea.vmem %s8, %s836
        %p838 = pneg %p258
        %p839 = pneg %p255
        %p840 = scmp.lt.s32.totalorder %s42, 2
        %s841 = scalar_select %p840, %s42, 2
        %s842 = smul.addr %s841, 16
        %s843 = smul.addr %s842, 8
        %s844 = scalar_lea.vmem %s9, %s843
        %p845 = pneg %p284
        %p846 = pneg %p281
        %p847 = scmp.lt.s32.totalorder %s42, 2
        %s848 = scalar_select %p847, %s42, 2
        %s849 = smul.addr %s848, 4
        %s850 = scalar_lea.vmem %s10, %s849
        %p851 = pneg %p310
        %p852 = pneg %p307
        %p853 = scmp.lt.s32.totalorder %s42, 2
        %s854 = scalar_select %p853, %s42, 2
        %s855 = smul.addr %s854, 4
        %s856 = scalar_lea.vmem %s11, %s855
        %p857 = pneg %p336
        %p858 = pneg %p333
        %p859 = scmp.lt.s32.totalorder %s42, 2
        %s860 = scalar_select %p859, %s42, 2
        %s861 = smul.addr %s860, 4
        %s862 = scalar_lea.vmem %s12, %s861
        %p863 = pneg %p362
        %p864 = pneg %p359
        %p865 = scmp.lt.s32.totalorder %s42, 2
        %s866 = scalar_select %p865, %s42, 2
        %s867 = smul.addr %s866, 4
        %s868 = smul.addr %s867, 8
        %s869 = scalar_lea.vmem %s13, %s868
        %p870 = pneg %p388
        %p871 = pneg %p385
        %p872 = scmp.lt.s32.totalorder %s42, 2
        %s873 = scalar_select %p872, %s42, 2
        %s874 = scalar_lea.vmem %s14, %s873
        %p875 = pneg %p414
        %p876 = pneg %p411
        %p877 = scmp.lt.s32.totalorder %s42, 2
        %s878 = scalar_select %p877, %s42, 2
        %s879 = scalar_lea.vmem %s15, %s878
        %p880 = pneg %p440
        %p881 = pneg %p437
        %p882 = scmp.lt.s32.totalorder %s42, 2
        %s883 = scalar_select %p882, %s42, 2
        %s884 = scalar_lea.vmem %s16, %s883
        %p885 = pneg %p466
        %p886 = pneg %p463
        %p887 = scmp.lt.s32.totalorder %s42, 2
        %s888 = scalar_select %p887, %s42, 2
        %s889 = smul.addr %s888, 4
        %s890 = smul.addr %s889, 8
        %s891 = scalar_lea.vmem %s17, %s890
        %p892 = pneg %p492
        %p893 = pneg %p489
        %p894 = scmp.lt.s32.totalorder %s42, 2
        %s895 = scalar_select %p894, %s42, 2
        %s896 = scalar_lea.vmem %s18, %s895
        %p897 = pneg %p518
        %p898 = pneg %p515
        %p899 = scmp.lt.s32.totalorder %s42, 2
        %s900 = scalar_select %p899, %s42, 2
        %s901 = smul.addr %s900, 8
        %s902 = smul.addr %s901, 8
        %s903 = scalar_lea.vmem %s19, %s902
        %p904 = pneg %p544
        %p905 = pneg %p541
        %p906 = scmp.lt.s32.totalorder %s42, 2
        %s907 = scalar_select %p906, %s42, 2
        %s908 = scalar_lea.vmem %s20, %s907
        %p909 = pneg %p570
        %p910 = pneg %p567
        %p911 = pneg %p591
        %p912 = pneg %p588
        %p913 = pneg %p612
        %p914 = pneg %p609
        %p915 = pneg %p638
        %p916 = pneg %p635
        %s917 = sand.u32 %s625, 1
        %s918 = scalar_lea.sflag [#allocation4], %s917
        %s919 = sand.u32 %s625, 1
        %s920 = scalar_lea.vmem [#allocation3], %s919
        %p921 = scmp.lt.s32.totalorder %s41, 1
        %s922 = scalar_select %p921, %s41, 1
        %s923 = smul.addr %s922, 2
        %s924 = smul.addr %s923, 8
        %s925 = scalar_lea.vmem %s0, %s924
        %p926 = scmp.lt.s32.totalorder %s42, 2
        %s927 = scalar_select %p926, %s42, 2
        %s928 = scalar_lea.vmem %s5, %s927
        %p929 = scmp.lt.s32.totalorder %s42, 2
        %s930 = scalar_select %p929, %s42, 2
        %s931 = scalar_lea.vmem %s6, %s930
        %p932 = scmp.lt.s32.totalorder %s42, 2
        %s933 = scalar_select %p932, %s42, 2
        %s934 = smul.addr %s933, 16
        %s935 = smul.addr %s934, 8
        %s936 = scalar_lea.vmem %s7, %s935
        %p937 = scmp.lt.s32.totalorder %s42, 2
        %s938 = scalar_select %p937, %s42, 2
        %s939 = smul.addr %s938, 16
        %s940 = smul.addr %s939, 8
        %s941 = scalar_lea.vmem %s8, %s940
        %p942 = scmp.lt.s32.totalorder %s42, 2
        %s943 = scalar_select %p942, %s42, 2
        %s944 = smul.addr %s943, 16
        %s945 = smul.addr %s944, 8
        %s946 = scalar_lea.vmem %s9, %s945
        %p947 = scmp.lt.s32.totalorder %s42, 2
        %s948 = scalar_select %p947, %s42, 2
        %s949 = smul.addr %s948, 4
        %s950 = scalar_lea.vmem %s10, %s949
        %p951 = scmp.lt.s32.totalorder %s42, 2
        %s952 = scalar_select %p951, %s42, 2
        %s953 = smul.addr %s952, 4
        %s954 = scalar_lea.vmem %s11, %s953
        %p955 = scmp.lt.s32.totalorder %s42, 2
        %s956 = scalar_select %p955, %s42, 2
        %s957 = smul.addr %s956, 4
        %s958 = scalar_lea.vmem %s12, %s957
        %p959 = scmp.lt.s32.totalorder %s42, 2
        %s960 = scalar_select %p959, %s42, 2
        %s961 = smul.addr %s960, 4
        %s962 = smul.addr %s961, 8
        %s963 = scalar_lea.vmem %s13, %s962
        %p964 = scmp.lt.s32.totalorder %s42, 2
        %s965 = scalar_select %p964, %s42, 2
        %s966 = scalar_lea.vmem %s14, %s965
        %p967 = scmp.lt.s32.totalorder %s42, 2
        %s968 = scalar_select %p967, %s42, 2
        %s969 = scalar_lea.vmem %s15, %s968
        %p970 = scmp.lt.s32.totalorder %s42, 2
        %s971 = scalar_select %p970, %s42, 2
        %s972 = scalar_lea.vmem %s16, %s971
        %p973 = scmp.lt.s32.totalorder %s42, 2
        %s974 = scalar_select %p973, %s42, 2
        %s975 = smul.addr %s974, 4
        %s976 = smul.addr %s975, 8
        %s977 = scalar_lea.vmem %s17, %s976
        %p978 = scmp.lt.s32.totalorder %s42, 2
        %s979 = scalar_select %p978, %s42, 2
        %s980 = scalar_lea.vmem %s18, %s979
        %p981 = scmp.lt.s32.totalorder %s42, 2
        %s982 = scalar_select %p981, %s42, 2
        %s983 = smul.addr %s982, 8
        %s984 = smul.addr %s983, 8
        %s985 = scalar_lea.vmem %s19, %s984
        %p986 = scmp.lt.s32.totalorder %s42, 2
        %s987 = scalar_select %p986, %s42, 2
        %s988 = scalar_lea.vmem %s20, %s987
        %p989 = scmp.eq.s32.totalorder %s42, 0
        // Predicated region
        $region113: #{tpu_custom_call.1} parent=111 // pred_check
          %p990 = pneg %p989
        $region114: #{tpu_custom_call.1} parent=111 // pred_check_branch
          %992 = sbr.rel (%p990) target = $region116
        $region115: #{tpu_custom_call.1} parent=111 // pred_region
          %v993 = vld [vmem:[%s925] sm:$0xff]
          %v994 = vld [vmem:[%s925 + $0x8] sm:$0xff]
          %v995 = vld [vmem:[%s1] sm:$0xff]
          %v996 = vld [vmem:[%s1 + $0x8] sm:$0xff]
          %v997 = vld [vmem:[%s1 + $0x10] sm:$0xff]
          %v998 = vld [vmem:[%s1 + $0x18] sm:$0xff]
          %v999 = vld [vmem:[%s1 + $0x20] sm:$0xff]
          %v1000 = vld [vmem:[%s1 + $0x28] sm:$0xff]
          %v1001 = vld [vmem:[%s1 + $0x30] sm:$0xff]
          %v1002 = vld [vmem:[%s1 + $0x38] sm:$0xff]
          %v1003 = vld [vmem:[%s2] sm:$0x1]
          %v1005 = vlaneseq
          %v1006 = vshrl.u32 %v1005, 7
          %v1007 = vsub.s32 0, %v1006
          %v1008 = vrot.slane %v1003, %v1007
          %vm1010 = vcmask 523264
          %v1012 = vsel %vm1010, %v993, 0
          %v1015 = vsel %vm1010, %v994, 0
          %1017 = vmatprep.subr.mxu0 0.0
          %1018 = vmatpush1.msra.mxu0 %v995
          %1019 = vmatprep.subr.mxu0 0.0
          %1020 = vmatpush1.msra.mxu0 %v996
          %1021 = vmatprep.subr.mxu0 0.0
          %1022 = vmatpush1.msra.mxu0 %v997
          %1023 = vmatprep.subr.mxu0 0.0
          %1024 = vmatpush1.msra.mxu0 %v998
          %1025 = vmatprep.subr.mxu0 0.0
          %1026 = vmatpush1.msra.mxu0 %v999
          %1027 = vmatprep.subr.mxu0 0.0
          %1028 = vmatpush1.msra.mxu0 %v1000
          %1029 = vmatprep.subr.mxu0 0.0
          %1030 = vmatpush1.msra.mxu0 %v1001
          %1031 = vmatprep.subr.mxu0 0.0
          %1032 = vmatpush1.msra.mxu0 %v1002
          %1033 = vmatprep.subr.mxu0 0.0
          %1034 = vmatpush1.msra.mxu0 0.0
          %1035 = vmatprep.subr.mxu0 0.0
          %1036 = vmatpush1.msra.mxu0 0.0
          %1037 = vmatprep.subr.mxu0 0.0
          %1038 = vmatpush1.msra.mxu0 0.0
          %1039 = vmatprep.subr.mxu0 0.0
          %1040 = vmatpush1.msra.mxu0 0.0
          %1041 = vmatprep.subr.mxu0 0.0
          %1042 = vmatpush1.msra.mxu0 0.0
          %1043 = vmatprep.subr.mxu0 0.0
          %1044 = vmatpush1.msra.mxu0 0.0
          %1045 = vmatprep.subr.mxu0 0.0
          %1046 = vmatpush1.msra.mxu0 0.0
          %1047 = vmatprep.subr.mxu0 0.0
          %1048 = vmatpush1.msra.mxu0 0.0
          %1049 = vmatprep.subr.mxu0 0.0
          %1050 = vmatpush1.msra.mxu0 0.0
          %1051 = vmatprep.subr.mxu0 0.0
          %1052 = vmatpush1.msra.mxu0 0.0
          %1053 = vmatprep.subr.mxu0 0.0
          %1054 = vmatpush1.msra.mxu0 0.0
          %1055 = vmatprep.subr.mxu0 0.0
          %1056 = vmatpush1.msra.mxu0 0.0
          %1057 = vmatprep.subr.mxu0 0.0
          %1058 = vmatpush1.msra.mxu0 0.0
          %1059 = vmatprep.subr.mxu0 0.0
          %1060 = vmatpush1.msra.mxu0 0.0
          %1061 = vmatprep.subr.mxu0 0.0
          %1062 = vmatpush1.msra.mxu0 0.0
          %1063 = vmatprep.subr.mxu0 0.0
          %1064 = vmatpush1.msra.mxu0 0.0
          %1065 = vmatprep.subr.mxu0 0.0
          %1066 = vmatpush1.msra.mxu0 0.0
          %1067 = vmatprep.subr.mxu0 0.0
          %1068 = vmatpush1.msra.mxu0 0.0
          %1069 = vmatprep.subr.mxu0 0.0
          %1070 = vmatpush1.msra.mxu0 0.0
          %1071 = vmatprep.subr.mxu0 0.0
          %1072 = vmatpush1.msra.mxu0 0.0
          %1073 = vmatprep.subr.mxu0 0.0
          %1074 = vmatpush1.msra.mxu0 0.0
          %1075 = vmatprep.subr.mxu0 0.0
          %1076 = vmatpush1.msra.mxu0 0.0
          %1077 = vmatprep.subr.mxu0 0.0
          %1078 = vmatpush1.msra.mxu0 0.0
          %1079 = vmatprep.subr.mxu0 0.0
          %1080 = vmatpush1.msra.mxu0 0.0
          %1081 = vmatprep.mubr.f32.mxu0 0.0
          %1082 = vmatmul.mubr.f32.gmra.mrb[0].mxu0 %v1012
          %v1083 = vpop.f32.mrb[0].mxu0
          %v1084 = vadd.f32 %v1008, %v1083
          %v1085 = vpop.f32.mrb[0].mxu0
          %1086 = vmatprep.mubr.f32.mxu0 0.0
          %1087 = vmatmul.mubr.f32.gmra.mrb[0].mxu0 %v1015
          %v1088 = vpop.f32.mrb[0].mxu0
          %v1089 = vadd.f32 %v1008, %v1088
          %v1090 = vpop.f32.mrb[0].mxu0
          %1091 = vdwg.mxu0
          %v1092 = vld [vmem:[%s3] sm:$0xff]
          %v1093 = vld [vmem:[%s3 + $0x8] sm:$0xff]
          %v1094 = vadd.f32 %v1084, %v1092
          %v1095 = vadd.f32 %v1089, %v1093
          %vm1096 = vcmask 261120
          %1097 = vst.msk [vmem:[#allocation2] sm:$0xff] %vm1096, %v1094
          %1098 = vst.msk [vmem:[#allocation2 + $0x8] sm:$0xff] %vm1096, %v1095
          %v1099 = vld [vmem:[%s4] sm:$0xff]
          %1100 = vst.msk [vmem:[#allocation2 + $0x10] sm:$0xff] %vm1096, %v1099
        $region116: #{tpu_custom_call.1} parent=111 // pred_fallthru
          _
        %v1101 = vld [vmem:[#allocation2] sm:$0xff]
        %v1102 = vld [vmem:[#allocation2 + $0x8] sm:$0xff]
        %v1103 = vld [vmem:[#allocation2 + $0x10] sm:$0xff]
        %v1104 = vld [vmem:[%s928] sm:$0x1]
        %v1105 = vld [vmem:[%s931] sm:$0x1]
        %vm1106 = vcmask 261120
        %v1107 = vsel %vm1106, %v1101, 0.0
        %1108 = vadd.xlane.f32.xlu0 %v1107
        %v1109 = vpop.xlane.xlu0 %1108
        %v1110 = vsel %vm1106, %v1102, 0.0
        %1111 = vadd.xlane.f32.xlu0 %v1110
        %v1112 = vpop.xlane.xlu0 %1111
        %v1113 = vsel %vm1106, %v1103, 0.0
        %1114 = vadd.xlane.f32.xlu0 %v1113
        %v1115 = vpop.xlane.xlu0 %1114
        %v1116 = vrcp.pop 32.0
        %v1117 = vmul.f32 %v1109, %v1116
        %v1118 = vmul.f32 %v1112, %v1116
        %v1119 = vmul.f32 %v1115, %v1116
        %v1120 = vsub.f32 %v1101, %v1117
        %v1121 = vsub.f32 %v1102, %v1118
        %v1122 = vsub.f32 %v1103, %v1119
        %v1123 = vmul.f32 %v1120, %v1120
        %v1124 = vmul.f32 %v1121, %v1121
        %v1125 = vmul.f32 %v1122, %v1122
        %v1126 = vsel %vm1106, %v1123, 0.0
        %1127 = vadd.xlane.f32.xlu0 %v1126
        %v1128 = vpop.xlane.xlu0 %1127
        %v1129 = vsel %vm1106, %v1124, 0.0
        %1130 = vadd.xlane.f32.xlu0 %v1129
        %v1131 = vpop.xlane.xlu0 %1130
        %v1132 = vsel %vm1106, %v1125, 0.0
        %1133 = vadd.xlane.f32.xlu0 %v1132
        %v1134 = vpop.xlane.xlu0 %1133
        %v1135 = vmul.f32 %v1128, %v1116
        %v1136 = vmul.f32 %v1131, %v1116
        %v1137 = vmul.f32 %v1134, %v1116
        %v1138 = vadd.f32 %v1135, 1e-05
        %v1139 = vadd.f32 %v1136, 1e-05
        %v1140 = vadd.f32 %v1137, 1e-05
        %v1141 = vrsqrt.pop %v1138
        %v1142 = vrsqrt.pop %v1139
        %v1143 = vrsqrt.pop %v1140
        %v1144 = vmul.f32 %v1120, %v1141
        %v1145 = vmul.f32 %v1121, %v1142
        %v1146 = vmul.f32 %v1122, %v1143
        %v1148 = vlaneseq
        %v1149 = vshrl.u32 %v1148, 7
        %v1150 = vsub.s32 0, %v1149
        %v1151 = vrot.slane %v1104, %v1150
        %v1153 = vmul.f32 %v1144, %v1151
        %v1154 = vmul.f32 %v1145, %v1151
        %v1155 = vmul.f32 %v1146, %v1151
        %v1157 = vlaneseq
        %v1158 = vshrl.u32 %v1157, 7
        %v1159 = vsub.s32 0, %v1158
        %v1160 = vrot.slane %v1105, %v1159
        %v1162 = vadd.f32 %v1153, %v1160
        %v1163 = vadd.f32 %v1154, %v1160
        %v1164 = vadd.f32 %v1155, %v1160
        %v1165 = vlaneseq
        %v1166 = vand.u32 %v1165, 127
        %vm1167 = vcmp.lt.s32.totalorder %v1166, 17
        %v1168 = vld [vmem:[%s936] sm:$0xff]
        %v1169 = vld [vmem:[%s936 + $0x8] sm:$0xff]
        %v1170 = vld [vmem:[%s936 + $0x10] sm:$0xff]
        %v1171 = vld [vmem:[%s936 + $0x18] sm:$0xff]
        %v1172 = vld [vmem:[%s950] sm:$0x1]
        %v1174 = vlaneseq
        %v1175 = vshrl.u32 %v1174, 7
        %v1176 = vsub.s32 0, %v1175
        %v1177 = vrot.slane %v1172, %v1176
        %v1180 = vsel %vm1106, %v1162, 0
        %v1183 = vsel %vm1106, %v1163, 0
        %v1186 = vsel %vm1106, %v1164, 0
        %1188 = vmatprep.subr.mxu0 0.0
        %1189 = vmatpush1.msra.mxu0 %v1168
        %1190 = vmatprep.subr.mxu0 0.0
        %1191 = vmatpush1.msra.mxu0 %v1169
        %1192 = vmatprep.subr.mxu0 0.0
        %1193 = vmatpush1.msra.mxu0 %v1170
        %1194 = vmatprep.subr.mxu0 0.0
        %1195 = vmatpush1.msra.mxu0 %v1171
        %1196 = vmatprep.subr.mxu0 0.0
        %1197 = vmatpush1.msra.mxu0 0.0
        %1198 = vmatprep.subr.mxu0 0.0
        %1199 = vmatpush1.msra.mxu0 0.0
        %1200 = vmatprep.subr.mxu0 0.0
        %1201 = vmatpush1.msra.mxu0 0.0
        %1202 = vmatprep.subr.mxu0 0.0
        %1203 = vmatpush1.msra.mxu0 0.0
        %1204 = vmatprep.subr.mxu0 0.0
        %1205 = vmatpush1.msra.mxu0 0.0
        %1206 = vmatprep.subr.mxu0 0.0
        %1207 = vmatpush1.msra.mxu0 0.0
        %1208 = vmatprep.subr.mxu0 0.0
        %1209 = vmatpush1.msra.mxu0 0.0
        %1210 = vmatprep.subr.mxu0 0.0
        %1211 = vmatpush1.msra.mxu0 0.0
        %1212 = vmatprep.subr.mxu0 0.0
        %1213 = vmatpush1.msra.mxu0 0.0
        %1214 = vmatprep.subr.mxu0 0.0
        %1215 = vmatpush1.msra.mxu0 0.0
        %1216 = vmatprep.subr.mxu0 0.0
        %1217 = vmatpush1.msra.mxu0 0.0
        %1218 = vmatprep.subr.mxu0 0.0
        %1219 = vmatpush1.msra.mxu0 0.0
        %1220 = vmatprep.subr.mxu0 0.0
        %1221 = vmatpush1.msra.mxu0 0.0
        %1222 = vmatprep.subr.mxu0 0.0
        %1223 = vmatpush1.msra.mxu0 0.0
        %1224 = vmatprep.subr.mxu0 0.0
        %1225 = vmatpush1.msra.mxu0 0.0
        %1226 = vmatprep.subr.mxu0 0.0
        %1227 = vmatpush1.msra.mxu0 0.0
        %1228 = vmatprep.subr.mxu0 0.0
        %1229 = vmatpush1.msra.mxu0 0.0
        %1230 = vmatprep.subr.mxu0 0.0
        %1231 = vmatpush1.msra.mxu0 0.0
        %1232 = vmatprep.subr.mxu0 0.0
        %1233 = vmatpush1.msra.mxu0 0.0
        %1234 = vmatprep.subr.mxu0 0.0
        %1235 = vmatpush1.msra.mxu0 0.0
        %1236 = vmatprep.subr.mxu0 0.0
        %1237 = vmatpush1.msra.mxu0 0.0
        %1238 = vmatprep.subr.mxu0 0.0
        %1239 = vmatpush1.msra.mxu0 0.0
        %1240 = vmatprep.subr.mxu0 0.0
        %1241 = vmatpush1.msra.mxu0 0.0
        %1242 = vmatprep.subr.mxu0 0.0
        %1243 = vmatpush1.msra.mxu0 0.0
        %1244 = vmatprep.subr.mxu0 0.0
        %1245 = vmatpush1.msra.mxu0 0.0
        %1246 = vmatprep.subr.mxu0 0.0
        %1247 = vmatpush1.msra.mxu0 0.0
        %1248 = vmatprep.subr.mxu0 0.0
        %1249 = vmatpush1.msra.mxu0 0.0
        %1250 = vmatprep.subr.mxu0 0.0
        %1251 = vmatpush1.msra.mxu0 0.0
        %1252 = vmatprep.mubr.f32.mxu0 0.0
        %1253 = vmatmul.mubr.f32.gmra.mrb[0].mxu0 %v1180
        %v1254 = vpop.f32.mrb[0].mxu0
        %v1255 = vadd.f32 %v1177, %v1254
        %v1256 = vpop.f32.mrb[0].mxu0
        %1257 = vmatprep.mubr.f32.mxu0 0.0
        %1258 = vmatmul.mubr.f32.gmra.mrb[0].mxu0 %v1183
        %v1259 = vpop.f32.mrb[0].mxu0
        %v1260 = vadd.f32 %v1177, %v1259
        %v1261 = vpop.f32.mrb[0].mxu0
        %1262 = vmatprep.mubr.f32.mxu0 0.0
        %1263 = vmatmul.mubr.f32.gmra.mrb[0].mxu0 %v1186
        %v1264 = vpop.f32.mrb[0].mxu0
        %v1265 = vadd.f32 %v1177, %v1264
        %v1266 = vpop.f32.mrb[0].mxu0
        %1267 = vdwg.mxu0
        %v1268 = vld [vmem:[%s941] sm:$0xff]
        %v1269 = vld [vmem:[%s941 + $0x8] sm:$0xff]
        %v1270 = vld [vmem:[%s941 + $0x10] sm:$0xff]
        %v1271 = vld [vmem:[%s941 + $0x18] sm:$0xff]
        %v1272 = vld [vmem:[%s954] sm:$0x1]
        %v1274 = vlaneseq
        %v1275 = vshrl.u32 %v1274, 7
        %v1276 = vsub.s32 0, %v1275
        %v1277 = vrot.slane %v1272, %v1276
        %1279 = vmatprep.subr.mxu0 0.0
        %1280 = vmatpush1.msra.mxu0 %v1268
        %1281 = vmatprep.subr.mxu0 0.0
        %1282 = vmatpush1.msra.mxu0 %v1269
        %1283 = vmatprep.subr.mxu0 0.0
        %1284 = vmatpush1.msra.mxu0 %v1270
        %1285 = vmatprep.subr.mxu0 0.0
        %1286 = vmatpush1.msra.mxu0 %v1271
        %1287 = vmatprep.subr.mxu0 0.0
        %1288 = vmatpush1.msra.mxu0 0.0
        %1289 = vmatprep.subr.mxu0 0.0
        %1290 = vmatpush1.msra.mxu0 0.0
        %1291 = vmatprep.subr.mxu0 0.0
        %1292 = vmatpush1.msra.mxu0 0.0
        %1293 = vmatprep.subr.mxu0 0.0
        %1294 = vmatpush1.msra.mxu0 0.0
        %1295 = vmatprep.subr.mxu0 0.0
        %1296 = vmatpush1.msra.mxu0 0.0
        %1297 = vmatprep.subr.mxu0 0.0
        %1298 = vmatpush1.msra.mxu0 0.0
        %1299 = vmatprep.subr.mxu0 0.0
        %1300 = vmatpush1.msra.mxu0 0.0
        %1301 = vmatprep.subr.mxu0 0.0
        %1302 = vmatpush1.msra.mxu0 0.0
        %1303 = vmatprep.subr.mxu0 0.0
        %1304 = vmatpush1.msra.mxu0 0.0
        %1305 = vmatprep.subr.mxu0 0.0
        %1306 = vmatpush1.msra.mxu0 0.0
        %1307 = vmatprep.subr.mxu0 0.0
        %1308 = vmatpush1.msra.mxu0 0.0
        %1309 = vmatprep.subr.mxu0 0.0
        %1310 = vmatpush1.msra.mxu0 0.0
        %1311 = vmatprep.subr.mxu0 0.0
        %1312 = vmatpush1.msra.mxu0 0.0
        %1313 = vmatprep.subr.mxu0 0.0
        %1314 = vmatpush1.msra.mxu0 0.0
        %1315 = vmatprep.subr.mxu0 0.0
        %1316 = vmatpush1.msra.mxu0 0.0
        %1317 = vmatprep.subr.mxu0 0.0
        %1318 = vmatpush1.msra.mxu0 0.0
        %1319 = vmatprep.subr.mxu0 0.0
        %1320 = vmatpush1.msra.mxu0 0.0
        %1321 = vmatprep.subr.mxu0 0.0
        %1322 = vmatpush1.msra.mxu0 0.0
        %1323 = vmatprep.subr.mxu0 0.0
        %1324 = vmatpush1.msra.mxu0 0.0
        %1325 = vmatprep.subr.mxu0 0.0
        %1326 = vmatpush1.msra.mxu0 0.0
        %1327 = vmatprep.subr.mxu0 0.0
        %1328 = vmatpush1.msra.mxu0 0.0
        %1329 = vmatprep.subr.mxu0 0.0
        %1330 = vmatpush1.msra.mxu0 0.0
        %1331 = vmatprep.subr.mxu0 0.0
        %1332 = vmatpush1.msra.mxu0 0.0
        %1333 = vmatprep.subr.mxu0 0.0
        %1334 = vmatpush1.msra.mxu0 0.0
        %1335 = vmatprep.subr.mxu0 0.0
        %1336 = vmatpush1.msra.mxu0 0.0
        %1337 = vmatprep.subr.mxu0 0.0
        %1338 = vmatpush1.msra.mxu0 0.0
        %1339 = vmatprep.subr.mxu0 0.0
        %1340 = vmatpush1.msra.mxu0 0.0
        %1341 = vmatprep.subr.mxu0 0.0
        %1342 = vmatpush1.msra.mxu0 0.0
        %1343 = vmatprep.mubr.f32.mxu0 0.0
        %1344 = vmatmul.mubr.f32.gmra.mrb[0].mxu0 %v1180
        %v1345 = vpop.f32.mrb[0].mxu0
        %v1346 = vadd.f32 %v1277, %v1345
        %v1347 = vpop.f32.mrb[0].mxu0
        %1348 = vmatprep.mubr.f32.mxu0 0.0
        %1349 = vmatmul.mubr.f32.gmra.mrb[0].mxu0 %v1183
        %v1350 = vpop.f32.mrb[0].mxu0
        %v1351 = vadd.f32 %v1277, %v1350
        %v1352 = vpop.f32.mrb[0].mxu0
        %1353 = vmatprep.mubr.f32.mxu0 0.0
        %1354 = vmatmul.mubr.f32.gmra.mrb[0].mxu0 %v1186
        %v1355 = vpop.f32.mrb[0].mxu0
        %v1356 = vadd.f32 %v1277, %v1355
        %v1357 = vpop.f32.mrb[0].mxu0
        %1358 = vdwg.mxu0
        %v1359 = vld [vmem:[%s946] sm:$0xff]
        %v1360 = vld [vmem:[%s946 + $0x8] sm:$0xff]
        %v1361 = vld [vmem:[%s946 + $0x10] sm:$0xff]
        %v1362 = vld [vmem:[%s946 + $0x18] sm:$0xff]
        %v1363 = vld [vmem:[%s958] sm:$0x1]
        %v1365 = vlaneseq
        %v1366 = vshrl.u32 %v1365, 7
        %v1367 = vsub.s32 0, %v1366
        %v1368 = vrot.slane %v1363, %v1367
        %1370 = vmatprep.subr.mxu0 0.0
        %1371 = vmatpush1.msra.mxu0 %v1359
        %1372 = vmatprep.subr.mxu0 0.0
        %1373 = vmatpush1.msra.mxu0 %v1360
        %1374 = vmatprep.subr.mxu0 0.0
        %1375 = vmatpush1.msra.mxu0 %v1361
        %1376 = vmatprep.subr.mxu0 0.0
        %1377 = vmatpush1.msra.mxu0 %v1362
        %1378 = vmatprep.subr.mxu0 0.0
        %1379 = vmatpush1.msra.mxu0 0.0
        %1380 = vmatprep.subr.mxu0 0.0
        %1381 = vmatpush1.msra.mxu0 0.0
        %1382 = vmatprep.subr.mxu0 0.0
        %1383 = vmatpush1.msra.mxu0 0.0
        %1384 = vmatprep.subr.mxu0 0.0
        %1385 = vmatpush1.msra.mxu0 0.0
        %1386 = vmatprep.subr.mxu0 0.0
        %1387 = vmatpush1.msra.mxu0 0.0
        %1388 = vmatprep.subr.mxu0 0.0
        %1389 = vmatpush1.msra.mxu0 0.0
        %1390 = vmatprep.subr.mxu0 0.0
        %1391 = vmatpush1.msra.mxu0 0.0
        %1392 = vmatprep.subr.mxu0 0.0
        %1393 = vmatpush1.msra.mxu0 0.0
        %1394 = vmatprep.subr.mxu0 0.0
        %1395 = vmatpush1.msra.mxu0 0.0
        %1396 = vmatprep.subr.mxu0 0.0
        %1397 = vmatpush1.msra.mxu0 0.0
        %1398 = vmatprep.subr.mxu0 0.0
        %1399 = vmatpush1.msra.mxu0 0.0
        %1400 = vmatprep.subr.mxu0 0.0
        %1401 = vmatpush1.msra.mxu0 0.0
        %1402 = vmatprep.subr.mxu0 0.0
        %1403 = vmatpush1.msra.mxu0 0.0
        %1404 = vmatprep.subr.mxu0 0.0
        %1405 = vmatpush1.msra.mxu0 0.0
        %1406 = vmatprep.subr.mxu0 0.0
        %1407 = vmatpush1.msra.mxu0 0.0
        %1408 = vmatprep.subr.mxu0 0.0
        %1409 = vmatpush1.msra.mxu0 0.0
        %1410 = vmatprep.subr.mxu0 0.0
        %1411 = vmatpush1.msra.mxu0 0.0
        %1412 = vmatprep.subr.mxu0 0.0
        %1413 = vmatpush1.msra.mxu0 0.0
        %1414 = vmatprep.subr.mxu0 0.0
        %1415 = vmatpush1.msra.mxu0 0.0
        %1416 = vmatprep.subr.mxu0 0.0
        %1417 = vmatpush1.msra.mxu0 0.0
        %1418 = vmatprep.subr.mxu0 0.0
        %1419 = vmatpush1.msra.mxu0 0.0
        %1420 = vmatprep.subr.mxu0 0.0
        %1421 = vmatpush1.msra.mxu0 0.0
        %1422 = vmatprep.subr.mxu0 0.0
        %1423 = vmatpush1.msra.mxu0 0.0
        %1424 = vmatprep.subr.mxu0 0.0
        %1425 = vmatpush1.msra.mxu0 0.0
        %1426 = vmatprep.subr.mxu0 0.0
        %1427 = vmatpush1.msra.mxu0 0.0
        %1428 = vmatprep.subr.mxu0 0.0
        %1429 = vmatpush1.msra.mxu0 0.0
        %1430 = vmatprep.subr.mxu0 0.0
        %1431 = vmatpush1.msra.mxu0 0.0
        %1432 = vmatprep.subr.mxu0 0.0
        %1433 = vmatpush1.msra.mxu0 0.0
        %1434 = vmatprep.mubr.f32.mxu0 0.0
        %1435 = vmatmul.mubr.f32.gmra.mrb[0].mxu0 %v1180
        %v1436 = vpop.f32.mrb[0].mxu0
        %v1437 = vadd.f32 %v1368, %v1436
        %v1438 = vpop.f32.mrb[0].mxu0
        %1439 = vmatprep.mubr.f32.mxu0 0.0
        %1440 = vmatmul.mubr.f32.gmra.mrb[0].mxu0 %v1183
        %v1441 = vpop.f32.mrb[0].mxu0
        %v1442 = vadd.f32 %v1368, %v1441
        %v1443 = vpop.f32.mrb[0].mxu0
        %1444 = vmatprep.mubr.f32.mxu0 0.0
        %1445 = vmatmul.mubr.f32.gmra.mrb[0].mxu0 %v1186
        %v1446 = vpop.f32.mrb[0].mxu0
        %v1447 = vadd.f32 %v1368, %v1446
        %v1448 = vpop.f32.mrb[0].mxu0
        %1449 = vdwg.mxu0
        %vm1450 = vcmask 64512
        %v1452 = vsel %vm1450, %v1255, 0
        %v1455 = vsel %vm1450, %v1260, 0
        %v1458 = vsel %vm1450, %v1265, 0
        %v1461 = vsel %vm1450, %v1346, 0
        %v1464 = vsel %vm1450, %v1351, 0
        %v1467 = vsel %vm1450, %v1356, 0
        %1469 = vmatprep.subr.mxu0 0.0
        %1470 = vmatpush1.xpose.msra.mxu0 %v1461
        %1471 = vmatprep.subr.mxu0 0.0
        %1472 = vmatpush1.xpose.msra.mxu0 %v1464
        %1473 = vmatprep.subr.mxu0 0.0
        %1474 = vmatpush1.xpose.msra.mxu0 %v1467
        %1475 = vmatprep.subr.mxu0 0.0
        %1476 = vmatpush1.xpose.msra.mxu0 0.0
        %1477 = vmatprep.subr.mxu0 0.0
        %1478 = vmatpush1.xpose.msra.mxu0 0.0
        %1479 = vmatprep.subr.mxu0 0.0
        %1480 = vmatpush1.xpose.msra.mxu0 0.0
        %1481 = vmatprep.subr.mxu0 0.0
        %1482 = vmatpush1.xpose.msra.mxu0 0.0
        %1483 = vmatprep.subr.mxu0 0.0
        %1484 = vmatpush1.xpose.msra.mxu0 0.0
        %1485 = vmatprep.subr.mxu0 0.0
        %1486 = vmatpush1.xpose.msra.mxu0 0.0
        %1487 = vmatprep.subr.mxu0 0.0
        %1488 = vmatpush1.xpose.msra.mxu0 0.0
        %1489 = vmatprep.subr.mxu0 0.0
        %1490 = vmatpush1.xpose.msra.mxu0 0.0
        %1491 = vmatprep.subr.mxu0 0.0
        %1492 = vmatpush1.xpose.msra.mxu0 0.0
        %1493 = vmatprep.subr.mxu0 0.0
        %1494 = vmatpush1.xpose.msra.mxu0 0.0
        %1495 = vmatprep.subr.mxu0 0.0
        %1496 = vmatpush1.xpose.msra.mxu0 0.0
        %1497 = vmatprep.subr.mxu0 0.0
        %1498 = vmatpush1.xpose.msra.mxu0 0.0
        %1499 = vmatprep.subr.mxu0 0.0
        %1500 = vmatpush1.xpose.msra.mxu0 0.0
        %1501 = vmatprep.subr.mxu0 0.0
        %1502 = vmatpush1.xpose.msra.mxu0 0.0
        %1503 = vmatprep.subr.mxu0 0.0
        %1504 = vmatpush1.xpose.msra.mxu0 0.0
        %1505 = vmatprep.subr.mxu0 0.0
        %1506 = vmatpush1.xpose.msra.mxu0 0.0
        %1507 = vmatprep.subr.mxu0 0.0
        %1508 = vmatpush1.xpose.msra.mxu0 0.0
        %1509 = vmatprep.subr.mxu0 0.0
        %1510 = vmatpush1.xpose.msra.mxu0 0.0
        %1511 = vmatprep.subr.mxu0 0.0
        %1512 = vmatpush1.xpose.msra.mxu0 0.0
        %1513 = vmatprep.subr.mxu0 0.0
        %1514 = vmatpush1.xpose.msra.mxu0 0.0
        %1515 = vmatprep.subr.mxu0 0.0
        %1516 = vmatpush1.xpose.msra.mxu0 0.0
        %1517 = vmatprep.subr.mxu0 0.0
        %1518 = vmatpush1.xpose.msra.mxu0 0.0
        %1519 = vmatprep.subr.mxu0 0.0
        %1520 = vmatpush1.xpose.msra.mxu0 0.0
        %1521 = vmatprep.subr.mxu0 0.0
        %1522 = vmatpush1.xpose.msra.mxu0 0.0
        %1523 = vmatprep.subr.mxu0 0.0
        %1524 = vmatpush1.xpose.msra.mxu0 0.0
        %1525 = vmatprep.subr.mxu0 0.0
        %1526 = vmatpush1.xpose.msra.mxu0 0.0
        %1527 = vmatprep.subr.mxu0 0.0
        %1528 = vmatpush1.xpose.msra.mxu0 0.0
        %1529 = vmatprep.subr.mxu0 0.0
        %1530 = vmatpush1.xpose.msra.mxu0 0.0
        %1531 = vmatprep.subr.mxu0 0.0
        %1532 = vmatpush1.xpose.msra.mxu0 0.0
        %1533 = vmatprep.mubr.f32.mxu0 0.0
        %1534 = vmatmul.mubr.f32.gmra.mrb[0].mxu0 %v1452
        %v1535 = vpop.f32.mrb[0].mxu0
        %v1536 = vadd.f32 0.0, %v1535
        %v1537 = vpop.f32.mrb[0].mxu0
        %1538 = vmatprep.mubr.f32.mxu0 0.0
        %1539 = vmatmul.mubr.f32.gmra.mrb[0].mxu0 %v1455
        %v1540 = vpop.f32.mrb[0].mxu0
        %v1541 = vadd.f32 0.0, %v1540
        %v1542 = vpop.f32.mrb[0].mxu0
        %1543 = vmatprep.mubr.f32.mxu0 0.0
        %1544 = vmatmul.mubr.f32.gmra.mrb[0].mxu0 %v1458
        %v1545 = vpop.f32.mrb[0].mxu0
        %v1546 = vadd.f32 0.0, %v1545
        %v1547 = vpop.f32.mrb[0].mxu0
        %1548 = vdwg.mxu0
        %v1549 = vmul.f32 %v1536, 0.35355338
        %v1550 = vmul.f32 %v1541, 0.35355338
        %v1551 = vmul.f32 %v1546, 0.35355338
        %v1552 = vsel %vm1167, %v1549, -1e+30
        %v1553 = vsel %vm1167, %v1550, -1e+30
        %v1554 = vsel %vm1167, %v1551, -1e+30
        %vm1555 = vcmask 195584
        %v1556 = vsel %vm1555, %v1552, -inf
        %1557 = vmax.xlane.f32.xlu0 %v1556
        %v1558 = vpop.xlane.xlu0 %1557
        %v1559 = vsel %vm1555, %v1553, -inf
        %1560 = vmax.xlane.f32.xlu0 %v1559
        %v1561 = vpop.xlane.xlu0 %1560
        %v1562 = vsel %vm1555, %v1554, -inf
        %1563 = vmax.xlane.f32.xlu0 %v1562
        %v1564 = vpop.xlane.xlu0 %1563
        %v1565 = vsub.f32 %v1552, %v1558
        %v1566 = vsub.f32 %v1553, %v1561
        %v1567 = vsub.f32 %v1554, %v1564
        %v1568 = vmul.f32 %v1565, 1.442695
        %v1569 = vpow.pop %v1568
        %v1570 = vmul.f32 %v1566, 1.442695
        %v1571 = vpow.pop %v1570
        %v1572 = vmul.f32 %v1567, 1.442695
        %v1573 = vpow.pop %v1572
        %v1574 = vsel %vm1555, %v1569, 0.0
        %1575 = vadd.xlane.f32.xlu0 %v1574
        %v1576 = vpop.xlane.xlu0 %1575
        %v1577 = vsel %vm1555, %v1571, 0.0
        %1578 = vadd.xlane.f32.xlu0 %v1577
        %v1579 = vpop.xlane.xlu0 %1578
        %v1580 = vsel %vm1555, %v1573, 0.0
        %1581 = vadd.xlane.f32.xlu0 %v1580
        %v1582 = vpop.xlane.xlu0 %1581
        %v1583 = vrcp.pop %v1576
        %v1584 = vrcp.pop %v1579
        %v1585 = vrcp.pop %v1582
        %v1586 = vmul.f32 %v1569, %v1583
        %v1587 = vmul.f32 %v1571, %v1584
        %v1588 = vmul.f32 %v1573, %v1585
        %v1590 = vsel %vm1555, %v1586, 0
        %v1593 = vsel %vm1555, %v1587, 0
        %v1596 = vsel %vm1555, %v1588, 0
        %1598 = vmatprep.subr.mxu0 0.0
        %1599 = vmatpush1.msra.mxu0 %v1437
        %1600 = vmatprep.subr.mxu0 0.0
        %1601 = vmatpush1.msra.mxu0 %v1442
        %1602 = vmatprep.subr.mxu0 0.0
        %1603 = vmatpush1.msra.mxu0 %v1447
        %1604 = vmatprep.subr.mxu0 0.0
        %1605 = vmatpush1.msra.mxu0 0.0
        %1606 = vmatprep.subr.mxu0 0.0
        %1607 = vmatpush1.msra.mxu0 0.0
        %1608 = vmatprep.subr.mxu0 0.0
        %1609 = vmatpush1.msra.mxu0 0.0
        %1610 = vmatprep.subr.mxu0 0.0
        %1611 = vmatpush1.msra.mxu0 0.0
        %1612 = vmatprep.subr.mxu0 0.0
        %1613 = vmatpush1.msra.mxu0 0.0
        %1614 = vmatprep.subr.mxu0 0.0
        %1615 = vmatpush1.msra.mxu0 0.0
        %1616 = vmatprep.subr.mxu0 0.0
        %1617 = vmatpush1.msra.mxu0 0.0
        %1618 = vmatprep.subr.mxu0 0.0
        %1619 = vmatpush1.msra.mxu0 0.0
        %1620 = vmatprep.subr.mxu0 0.0
        %1621 = vmatpush1.msra.mxu0 0.0
        %1622 = vmatprep.subr.mxu0 0.0
        %1623 = vmatpush1.msra.mxu0 0.0
        %1624 = vmatprep.subr.mxu0 0.0
        %1625 = vmatpush1.msra.mxu0 0.0
        %1626 = vmatprep.subr.mxu0 0.0
        %1627 = vmatpush1.msra.mxu0 0.0
        %1628 = vmatprep.subr.mxu0 0.0
        %1629 = vmatpush1.msra.mxu0 0.0
        %1630 = vmatprep.subr.mxu0 0.0
        %1631 = vmatpush1.msra.mxu0 0.0
        %1632 = vmatprep.subr.mxu0 0.0
        %1633 = vmatpush1.msra.mxu0 0.0
        %1634 = vmatprep.subr.mxu0 0.0
        %1635 = vmatpush1.msra.mxu0 0.0
        %1636 = vmatprep.subr.mxu0 0.0
        %1637 = vmatpush1.msra.mxu0 0.0
        %1638 = vmatprep.subr.mxu0 0.0
        %1639 = vmatpush1.msra.mxu0 0.0
        %1640 = vmatprep.subr.mxu0 0.0
        %1641 = vmatpush1.msra.mxu0 0.0
        %1642 = vmatprep.subr.mxu0 0.0
        %1643 = vmatpush1.msra.mxu0 0.0
        %1644 = vmatprep.subr.mxu0 0.0
        %1645 = vmatpush1.msra.mxu0 0.0
        %1646 = vmatprep.subr.mxu0 0.0
        %1647 = vmatpush1.msra.mxu0 0.0
        %1648 = vmatprep.subr.mxu0 0.0
        %1649 = vmatpush1.msra.mxu0 0.0
        %1650 = vmatprep.subr.mxu0 0.0
        %1651 = vmatpush1.msra.mxu0 0.0
        %1652 = vmatprep.subr.mxu0 0.0
        %1653 = vmatpush1.msra.mxu0 0.0
        %1654 = vmatprep.subr.mxu0 0.0
        %1655 = vmatpush1.msra.mxu0 0.0
        %1656 = vmatprep.subr.mxu0 0.0
        %1657 = vmatpush1.msra.mxu0 0.0
        %1658 = vmatprep.subr.mxu0 0.0
        %1659 = vmatpush1.msra.mxu0 0.0
        %1660 = vmatprep.subr.mxu0 0.0
        %1661 = vmatpush1.msra.mxu0 0.0
        %1662 = vmatprep.mubr.f32.mxu0 0.0
        %1663 = vmatmul.mubr.f32.gmra.mrb[0].mxu0 %v1590
        %v1664 = vpop.f32.mrb[0].mxu0
        %v1665 = vadd.f32 0.0, %v1664
        %v1666 = vpop.f32.mrb[0].mxu0
        %1667 = vmatprep.mubr.f32.mxu0 0.0
        %1668 = vmatmul.mubr.f32.gmra.mrb[0].mxu0 %v1593
        %v1669 = vpop.f32.mrb[0].mxu0
        %v1670 = vadd.f32 0.0, %v1669
        %v1671 = vpop.f32.mrb[0].mxu0
        %1672 = vmatprep.mubr.f32.mxu0 0.0
        %1673 = vmatmul.mubr.f32.gmra.mrb[0].mxu0 %v1596
        %v1674 = vpop.f32.mrb[0].mxu0
        %v1675 = vadd.f32 0.0, %v1674
        %v1676 = vpop.f32.mrb[0].mxu0
        %1677 = vdwg.mxu0
        %v1678 = vld [vmem:[%s963] sm:$0xff]
        %s1679 = scalar_lea.vmem %s936, 32
        %v1680 = vld [vmem:[%s1679] sm:$0xff]
        %v1681 = vld [vmem:[%s1679 + $0x8] sm:$0xff]
        %v1682 = vld [vmem:[%s1679 + $0x10] sm:$0xff]
        %v1683 = vld [vmem:[%s1679 + $0x18] sm:$0xff]
        %s1684 = scalar_lea.vmem %s950, 1
        %v1685 = vld [vmem:[%s1684] sm:$0x1]
        %v1687 = vlaneseq
        %v1688 = vshrl.u32 %v1687, 7
        %v1689 = vsub.s32 0, %v1688
        %v1690 = vrot.slane %v1685, %v1689
        %1692 = vmatprep.subr.mxu0 0.0
        %1693 = vmatpush1.msra.mxu0 %v1680
        %1694 = vmatprep.subr.mxu0 0.0
        %1695 = vmatpush1.msra.mxu0 %v1681
        %1696 = vmatprep.subr.mxu0 0.0
        %1697 = vmatpush1.msra.mxu0 %v1682
        %1698 = vmatprep.subr.mxu0 0.0
        %1699 = vmatpush1.msra.mxu0 %v1683
        %1700 = vmatprep.subr.mxu0 0.0
        %1701 = vmatpush1.msra.mxu0 0.0
        %1702 = vmatprep.subr.mxu0 0.0
        %1703 = vmatpush1.msra.mxu0 0.0
        %1704 = vmatprep.subr.mxu0 0.0
        %1705 = vmatpush1.msra.mxu0 0.0
        %1706 = vmatprep.subr.mxu0 0.0
        %1707 = vmatpush1.msra.mxu0 0.0
        %1708 = vmatprep.subr.mxu0 0.0
        %1709 = vmatpush1.msra.mxu0 0.0
        %1710 = vmatprep.subr.mxu0 0.0
        %1711 = vmatpush1.msra.mxu0 0.0
        %1712 = vmatprep.subr.mxu0 0.0
        %1713 = vmatpush1.msra.mxu0 0.0
        %1714 = vmatprep.subr.mxu0 0.0
        %1715 = vmatpush1.msra.mxu0 0.0
        %1716 = vmatprep.subr.mxu0 0.0
        %1717 = vmatpush1.msra.mxu0 0.0
        %1718 = vmatprep.subr.mxu0 0.0
        %1719 = vmatpush1.msra.mxu0 0.0
        %1720 = vmatprep.subr.mxu0 0.0
        %1721 = vmatpush1.msra.mxu0 0.0
        %1722 = vmatprep.subr.mxu0 0.0
        %1723 = vmatpush1.msra.mxu0 0.0
        %1724 = vmatprep.subr.mxu0 0.0
        %1725 = vmatpush1.msra.mxu0 0.0
        %1726 = vmatprep.subr.mxu0 0.0
        %1727 = vmatpush1.msra.mxu0 0.0
        %1728 = vmatprep.subr.mxu0 0.0
        %1729 = vmatpush1.msra.mxu0 0.0
        %1730 = vmatprep.subr.mxu0 0.0
        %1731 = vmatpush1.msra.mxu0 0.0
        %1732 = vmatprep.subr.mxu0 0.0
        %1733 = vmatpush1.msra.mxu0 0.0
        %1734 = vmatprep.subr.mxu0 0.0
        %1735 = vmatpush1.msra.mxu0 0.0
        %1736 = vmatprep.subr.mxu0 0.0
        %1737 = vmatpush1.msra.mxu0 0.0
        %1738 = vmatprep.subr.mxu0 0.0
        %1739 = vmatpush1.msra.mxu0 0.0
        %1740 = vmatprep.subr.mxu0 0.0
        %1741 = vmatpush1.msra.mxu0 0.0
        %1742 = vmatprep.subr.mxu0 0.0
        %1743 = vmatpush1.msra.mxu0 0.0
        %1744 = vmatprep.subr.mxu0 0.0
        %1745 = vmatpush1.msra.mxu0 0.0
        %1746 = vmatprep.subr.mxu0 0.0
        %1747 = vmatpush1.msra.mxu0 0.0
        %1748 = vmatprep.subr.mxu0 0.0
        %1749 = vmatpush1.msra.mxu0 0.0
        %1750 = vmatprep.subr.mxu0 0.0
        %1751 = vmatpush1.msra.mxu0 0.0
        %1752 = vmatprep.subr.mxu0 0.0
        %1753 = vmatpush1.msra.mxu0 0.0
        %1754 = vmatprep.subr.mxu0 0.0
        %1755 = vmatpush1.msra.mxu0 0.0
        %1756 = vmatprep.mubr.f32.mxu0 0.0
        %1757 = vmatmul.mubr.f32.gmra.mrb[0].mxu0 %v1180
        %v1758 = vpop.f32.mrb[0].mxu0
        %v1759 = vadd.f32 %v1690, %v1758
        %v1760 = vpop.f32.mrb[0].mxu0
        %1761 = vmatprep.mubr.f32.mxu0 0.0
        %1762 = vmatmul.mubr.f32.gmra.mrb[0].mxu0 %v1183
        %v1763 = vpop.f32.mrb[0].mxu0
        %v1764 = vadd.f32 %v1690, %v1763
        %v1765 = vpop.f32.mrb[0].mxu0
        %1766 = vmatprep.mubr.f32.mxu0 0.0
        %1767 = vmatmul.mubr.f32.gmra.mrb[0].mxu0 %v1186
        %v1768 = vpop.f32.mrb[0].mxu0
        %v1769 = vadd.f32 %v1690, %v1768
        %v1770 = vpop.f32.mrb[0].mxu0
        %1771 = vdwg.mxu0
        %s1772 = scalar_lea.vmem %s941, 32
        %v1773 = vld [vmem:[%s1772] sm:$0xff]
        %v1774 = vld [vmem:[%s1772 + $0x8] sm:$0xff]
        %v1775 = vld [vmem:[%s1772 + $0x10] sm:$0xff]
        %v1776 = vld [vmem:[%s1772 + $0x18] sm:$0xff]
        %s1777 = scalar_lea.vmem %s954, 1
        %v1778 = vld [vmem:[%s1777] sm:$0x1]
        %v1780 = vlaneseq
        %v1781 = vshrl.u32 %v1780, 7
        %v1782 = vsub.s32 0, %v1781
        %v1783 = vrot.slane %v1778, %v1782
        %1785 = vmatprep.subr.mxu0 0.0
        %1786 = vmatpush1.msra.mxu0 %v1773
        %1787 = vmatprep.subr.mxu0 0.0
        %1788 = vmatpush1.msra.mxu0 %v1774
        %1789 = vmatprep.subr.mxu0 0.0
        %1790 = vmatpush1.msra.mxu0 %v1775
        %1791 = vmatprep.subr.mxu0 0.0
        %1792 = vmatpush1.msra.mxu0 %v1776
        %1793 = vmatprep.subr.mxu0 0.0
        %1794 = vmatpush1.msra.mxu0 0.0
        %1795 = vmatprep.subr.mxu0 0.0
        %1796 = vmatpush1.msra.mxu0 0.0
        %1797 = vmatprep.subr.mxu0 0.0
        %1798 = vmatpush1.msra.mxu0 0.0
        %1799 = vmatprep.subr.mxu0 0.0
        %1800 = vmatpush1.msra.mxu0 0.0
        %1801 = vmatprep.subr.mxu0 0.0
        %1802 = vmatpush1.msra.mxu0 0.0
        %1803 = vmatprep.subr.mxu0 0.0
        %1804 = vmatpush1.msra.mxu0 0.0
        %1805 = vmatprep.subr.mxu0 0.0
        %1806 = vmatpush1.msra.mxu0 0.0
        %1807 = vmatprep.subr.mxu0 0.0
        %1808 = vmatpush1.msra.mxu0 0.0
        %1809 = vmatprep.subr.mxu0 0.0
        %1810 = vmatpush1.msra.mxu0 0.0
        %1811 = vmatprep.subr.mxu0 0.0
        %1812 = vmatpush1.msra.mxu0 0.0
        %1813 = vmatprep.subr.mxu0 0.0
        %1814 = vmatpush1.msra.mxu0 0.0
        %1815 = vmatprep.subr.mxu0 0.0
        %1816 = vmatpush1.msra.mxu0 0.0
        %1817 = vmatprep.subr.mxu0 0.0
        %1818 = vmatpush1.msra.mxu0 0.0
        %1819 = vmatprep.subr.mxu0 0.0
        %1820 = vmatpush1.msra.mxu0 0.0
        %1821 = vmatprep.subr.mxu0 0.0
        %1822 = vmatpush1.msra.mxu0 0.0
        %1823 = vmatprep.subr.mxu0 0.0
        %1824 = vmatpush1.msra.mxu0 0.0
        %1825 = vmatprep.subr.mxu0 0.0
        %1826 = vmatpush1.msra.mxu0 0.0
        %1827 = vmatprep.subr.mxu0 0.0
        %1828 = vmatpush1.msra.mxu0 0.0
        %1829 = vmatprep.subr.mxu0 0.0
        %1830 = vmatpush1.msra.mxu0 0.0
        %1831 = vmatprep.subr.mxu0 0.0
        %1832 = vmatpush1.msra.mxu0 0.0
        %1833 = vmatprep.subr.mxu0 0.0
        %1834 = vmatpush1.msra.mxu0 0.0
        %1835 = vmatprep.subr.mxu0 0.0
        %1836 = vmatpush1.msra.mxu0 0.0
        %1837 = vmatprep.subr.mxu0 0.0
        %1838 = vmatpush1.msra.mxu0 0.0
        %1839 = vmatprep.subr.mxu0 0.0
        %1840 = vmatpush1.msra.mxu0 0.0
        %1841 = vmatprep.subr.mxu0 0.0
        %1842 = vmatpush1.msra.mxu0 0.0
        %1843 = vmatprep.subr.mxu0 0.0
        %1844 = vmatpush1.msra.mxu0 0.0
        %1845 = vmatprep.subr.mxu0 0.0
        %1846 = vmatpush1.msra.mxu0 0.0
        %1847 = vmatprep.subr.mxu0 0.0
        %1848 = vmatpush1.msra.mxu0 0.0
        %1849 = vmatprep.mubr.f32.mxu0 0.0
        %1850 = vmatmul.mubr.f32.gmra.mrb[0].mxu0 %v1180
        %v1851 = vpop.f32.mrb[0].mxu0
        %v1852 = vadd.f32 %v1783, %v1851
        %v1853 = vpop.f32.mrb[0].mxu0
        %1854 = vmatprep.mubr.f32.mxu0 0.0
        %1855 = vmatmul.mubr.f32.gmra.mrb[0].mxu0 %v1183
        %v1856 = vpop.f32.mrb[0].mxu0
        %v1857 = vadd.f32 %v1783, %v1856
        %v1858 = vpop.f32.mrb[0].mxu0
        %1859 = vmatprep.mubr.f32.mxu0 0.0
        %1860 = vmatmul.mubr.f32.gmra.mrb[0].mxu0 %v1186
        %v1861 = vpop.f32.mrb[0].mxu0
        %v1862 = vadd.f32 %v1783, %v1861
        %v1863 = vpop.f32.mrb[0].mxu0
        %1864 = vdwg.mxu0
        %s1865 = scalar_lea.vmem %s946, 32
        %v1866 = vld [vmem:[%s1865] sm:$0xff]
        %v1867 = vld [vmem:[%s1865 + $0x8] sm:$0xff]
        %v1868 = vld [vmem:[%s1865 + $0x10] sm:$0xff]
        %v1869 = vld [vmem:[%s1865 + $0x18] sm:$0xff]
        %s1870 = scalar_lea.vmem %s958, 1
        %v1871 = vld [vmem:[%s1870] sm:$0x1]
        %v1873 = vlaneseq
        %v1874 = vshrl.u32 %v1873, 7
        %v1875 = vsub.s32 0, %v1874
        %v1876 = vrot.slane %v1871, %v1875
        %1878 = vmatprep.subr.mxu0 0.0
        %1879 = vmatpush1.msra.mxu0 %v1866
        %1880 = vmatprep.subr.mxu0 0.0
        %1881 = vmatpush1.msra.mxu0 %v1867
        %1882 = vmatprep.subr.mxu0 0.0
        %1883 = vmatpush1.msra.mxu0 %v1868
        %1884 = vmatprep.subr.mxu0 0.0
        %1885 = vmatpush1.msra.mxu0 %v1869
        %1886 = vmatprep.subr.mxu0 0.0
        %1887 = vmatpush1.msra.mxu0 0.0
        %1888 = vmatprep.subr.mxu0 0.0
        %1889 = vmatpush1.msra.mxu0 0.0
        %1890 = vmatprep.subr.mxu0 0.0
        %1891 = vmatpush1.msra.mxu0 0.0
        %1892 = vmatprep.subr.mxu0 0.0
        %1893 = vmatpush1.msra.mxu0 0.0
        %1894 = vmatprep.subr.mxu0 0.0
        %1895 = vmatpush1.msra.mxu0 0.0
        %1896 = vmatprep.subr.mxu0 0.0
        %1897 = vmatpush1.msra.mxu0 0.0
        %1898 = vmatprep.subr.mxu0 0.0
        %1899 = vmatpush1.msra.mxu0 0.0
        %1900 = vmatprep.subr.mxu0 0.0
        %1901 = vmatpush1.msra.mxu0 0.0
        %1902 = vmatprep.subr.mxu0 0.0
        %1903 = vmatpush1.msra.mxu0 0.0
        %1904 = vmatprep.subr.mxu0 0.0
        %1905 = vmatpush1.msra.mxu0 0.0
        %1906 = vmatprep.subr.mxu0 0.0
        %1907 = vmatpush1.msra.mxu0 0.0
        %1908 = vmatprep.subr.mxu0 0.0
        %1909 = vmatpush1.msra.mxu0 0.0
        %1910 = vmatprep.subr.mxu0 0.0
        %1911 = vmatpush1.msra.mxu0 0.0
        %1912 = vmatprep.subr.mxu0 0.0
        %1913 = vmatpush1.msra.mxu0 0.0
        %1914 = vmatprep.subr.mxu0 0.0
        %1915 = vmatpush1.msra.mxu0 0.0
        %1916 = vmatprep.subr.mxu0 0.0
        %1917 = vmatpush1.msra.mxu0 0.0
        %1918 = vmatprep.subr.mxu0 0.0
        %1919 = vmatpush1.msra.mxu0 0.0
        %1920 = vmatprep.subr.mxu0 0.0
        %1921 = vmatpush1.msra.mxu0 0.0
        %1922 = vmatprep.subr.mxu0 0.0
        %1923 = vmatpush1.msra.mxu0 0.0
        %1924 = vmatprep.subr.mxu0 0.0
        %1925 = vmatpush1.msra.mxu0 0.0
        %1926 = vmatprep.subr.mxu0 0.0
        %1927 = vmatpush1.msra.mxu0 0.0
        %1928 = vmatprep.subr.mxu0 0.0
        %1929 = vmatpush1.msra.mxu0 0.0
        %1930 = vmatprep.subr.mxu0 0.0
        %1931 = vmatpush1.msra.mxu0 0.0
        %1932 = vmatprep.subr.mxu0 0.0
        %1933 = vmatpush1.msra.mxu0 0.0
        %1934 = vmatprep.subr.mxu0 0.0
        %1935 = vmatpush1.msra.mxu0 0.0
        %1936 = vmatprep.subr.mxu0 0.0
        %1937 = vmatpush1.msra.mxu0 0.0
        %1938 = vmatprep.subr.mxu0 0.0
        %1939 = vmatpush1.msra.mxu0 0.0
        %1940 = vmatprep.subr.mxu0 0.0
        %1941 = vmatpush1.msra.mxu0 0.0
        %1942 = vmatprep.mubr.f32.mxu0 0.0
        %1943 = vmatmul.mubr.f32.gmra.mrb[0].mxu0 %v1180
        %v1944 = vpop.f32.mrb[0].mxu0
        %v1945 = vadd.f32 %v1876, %v1944
        %v1946 = vpop.f32.mrb[0].mxu0
        %1947 = vmatprep.mubr.f32.mxu0 0.0
        %1948 = vmatmul.mubr.f32.gmra.mrb[0].mxu0 %v1183
        %v1949 = vpop.f32.mrb[0].mxu0
        %v1950 = vadd.f32 %v1876, %v1949
        %v1951 = vpop.f32.mrb[0].mxu0
        %1952 = vmatprep.mubr.f32.mxu0 0.0
        %1953 = vmatmul.mubr.f32.gmra.mrb[0].mxu0 %v1186
        %v1954 = vpop.f32.mrb[0].mxu0
        %v1955 = vadd.f32 %v1876, %v1954
        %v1956 = vpop.f32.mrb[0].mxu0
        %1957 = vdwg.mxu0
        %v1959 = vsel %vm1450, %v1759, 0
        %v1962 = vsel %vm1450, %v1764, 0
        %v1965 = vsel %vm1450, %v1769, 0
        %v1968 = vsel %vm1450, %v1852, 0
        %v1971 = vsel %vm1450, %v1857, 0
        %v1974 = vsel %vm1450, %v1862, 0
        %1976 = vmatprep.subr.mxu0 0.0
        %1977 = vmatpush1.xpose.msra.mxu0 %v1968
        %1978 = vmatprep.subr.mxu0 0.0
        %1979 = vmatpush1.xpose.msra.mxu0 %v1971
        %1980 = vmatprep.subr.mxu0 0.0
        %1981 = vmatpush1.xpose.msra.mxu0 %v1974
        %1982 = vmatprep.subr.mxu0 0.0
        %1983 = vmatpush1.xpose.msra.mxu0 0.0
        %1984 = vmatprep.subr.mxu0 0.0
        %1985 = vmatpush1.xpose.msra.mxu0 0.0
        %1986 = vmatprep.subr.mxu0 0.0
        %1987 = vmatpush1.xpose.msra.mxu0 0.0
        %1988 = vmatprep.subr.mxu0 0.0
        %1989 = vmatpush1.xpose.msra.mxu0 0.0
        %1990 = vmatprep.subr.mxu0 0.0
        %1991 = vmatpush1.xpose.msra.mxu0 0.0
        %1992 = vmatprep.subr.mxu0 0.0
        %1993 = vmatpush1.xpose.msra.mxu0 0.0
        %1994 = vmatprep.subr.mxu0 0.0
        %1995 = vmatpush1.xpose.msra.mxu0 0.0
        %1996 = vmatprep.subr.mxu0 0.0
        %1997 = vmatpush1.xpose.msra.mxu0 0.0
        %1998 = vmatprep.subr.mxu0 0.0
        %1999 = vmatpush1.xpose.msra.mxu0 0.0
        %2000 = vmatprep.subr.mxu0 0.0
        %2001 = vmatpush1.xpose.msra.mxu0 0.0
        %2002 = vmatprep.subr.mxu0 0.0
        %2003 = vmatpush1.xpose.msra.mxu0 0.0
        %2004 = vmatprep.subr.mxu0 0.0
        %2005 = vmatpush1.xpose.msra.mxu0 0.0
        %2006 = vmatprep.subr.mxu0 0.0
        %2007 = vmatpush1.xpose.msra.mxu0 0.0
        %2008 = vmatprep.subr.mxu0 0.0
        %2009 = vmatpush1.xpose.msra.mxu0 0.0
        %2010 = vmatprep.subr.mxu0 0.0
        %2011 = vmatpush1.xpose.msra.mxu0 0.0
        %2012 = vmatprep.subr.mxu0 0.0
        %2013 = vmatpush1.xpose.msra.mxu0 0.0
        %2014 = vmatprep.subr.mxu0 0.0
        %2015 = vmatpush1.xpose.msra.mxu0 0.0
        %2016 = vmatprep.subr.mxu0 0.0
        %2017 = vmatpush1.xpose.msra.mxu0 0.0
        %2018 = vmatprep.subr.mxu0 0.0
        %2019 = vmatpush1.xpose.msra.mxu0 0.0
        %2020 = vmatprep.subr.mxu0 0.0
        %2021 = vmatpush1.xpose.msra.mxu0 0.0
        %2022 = vmatprep.subr.mxu0 0.0
        %2023 = vmatpush1.xpose.msra.mxu0 0.0
        %2024 = vmatprep.subr.mxu0 0.0
        %2025 = vmatpush1.xpose.msra.mxu0 0.0
        %2026 = vmatprep.subr.mxu0 0.0
        %2027 = vmatpush1.xpose.msra.mxu0 0.0
        %2028 = vmatprep.subr.mxu0 0.0
        %2029 = vmatpush1.xpose.msra.mxu0 0.0
        %2030 = vmatprep.subr.mxu0 0.0
        %2031 = vmatpush1.xpose.msra.mxu0 0.0
        %2032 = vmatprep.subr.mxu0 0.0
        %2033 = vmatpush1.xpose.msra.mxu0 0.0
        %2034 = vmatprep.subr.mxu0 0.0
        %2035 = vmatpush1.xpose.msra.mxu0 0.0
        %2036 = vmatprep.subr.mxu0 0.0
        %2037 = vmatpush1.xpose.msra.mxu0 0.0
        %2038 = vmatprep.subr.mxu0 0.0
        %2039 = vmatpush1.xpose.msra.mxu0 0.0
        %2040 = vmatprep.mubr.f32.mxu0 0.0
        %2041 = vmatmul.mubr.f32.gmra.mrb[0].mxu0 %v1959
        %v2042 = vpop.f32.mrb[0].mxu0
        %v2043 = vadd.f32 0.0, %v2042
        %v2044 = vpop.f32.mrb[0].mxu0
        %2045 = vmatprep.mubr.f32.mxu0 0.0
        %2046 = vmatmul.mubr.f32.gmra.mrb[0].mxu0 %v1962
        %v2047 = vpop.f32.mrb[0].mxu0
        %v2048 = vadd.f32 0.0, %v2047
        %v2049 = vpop.f32.mrb[0].mxu0
        %2050 = vmatprep.mubr.f32.mxu0 0.0
        %2051 = vmatmul.mubr.f32.gmra.mrb[0].mxu0 %v1965
        %v2052 = vpop.f32.mrb[0].mxu0
        %v2053 = vadd.f32 0.0, %v2052
        %v2054 = vpop.f32.mrb[0].mxu0
        %2055 = vdwg.mxu0
        %v2056 = vmul.f32 %v2043, 0.35355338
        %v2057 = vmul.f32 %v2048, 0.35355338
        %v2058 = vmul.f32 %v2053, 0.35355338
        %v2059 = vsel %vm1167, %v2056, -1e+30
        %v2060 = vsel %vm1167, %v2057, -1e+30
        %v2061 = vsel %vm1167, %v2058, -1e+30
        %v2062 = vsel %vm1555, %v2059, -inf
        %2063 = vmax.xlane.f32.xlu0 %v2062
        %v2064 = vpop.xlane.xlu0 %2063
        %v2065 = vsel %vm1555, %v2060, -inf
        %2066 = vmax.xlane.f32.xlu0 %v2065
        %v2067 = vpop.xlane.xlu0 %2066
        %v2068 = vsel %vm1555, %v2061, -inf
        %2069 = vmax.xlane.f32.xlu0 %v2068
        %v2070 = vpop.xlane.xlu0 %2069
        %v2071 = vsub.f32 %v2059, %v2064
        %v2072 = vsub.f32 %v2060, %v2067
        %v2073 = vsub.f32 %v2061, %v2070
        %v2074 = vmul.f32 %v2071, 1.442695
        %v2075 = vpow.pop %v2074
        %v2076 = vmul.f32 %v2072, 1.442695
        %v2077 = vpow.pop %v2076
        %v2078 = vmul.f32 %v2073, 1.442695
        %v2079 = vpow.pop %v2078
        %v2080 = vsel %vm1555, %v2075, 0.0
        %2081 = vadd.xlane.f32.xlu0 %v2080
        %v2082 = vpop.xlane.xlu0 %2081
        %v2083 = vsel %vm1555, %v2077, 0.0
        %2084 = vadd.xlane.f32.xlu0 %v2083
        %v2085 = vpop.xlane.xlu0 %2084
        %v2086 = vsel %vm1555, %v2079, 0.0
        %2087 = vadd.xlane.f32.xlu0 %v2086
        %v2088 = vpop.xlane.xlu0 %2087
        %v2089 = vrcp.pop %v2082
        %v2090 = vrcp.pop %v2085
        %v2091 = vrcp.pop %v2088
        %v2092 = vmul.f32 %v2075, %v2089
        %v2093 = vmul.f32 %v2077, %v2090
        %v2094 = vmul.f32 %v2079, %v2091
        %v2096 = vsel %vm1555, %v2092, 0
        %v2099 = vsel %vm1555, %v2093, 0
        %v2102 = vsel %vm1555, %v2094, 0
        %2104 = vmatprep.subr.mxu0 0.0
        %2105 = vmatpush1.msra.mxu0 %v1945
        %2106 = vmatprep.subr.mxu0 0.0
        %2107 = vmatpush1.msra.mxu0 %v1950
        %2108 = vmatprep.subr.mxu0 0.0
        %2109 = vmatpush1.msra.mxu0 %v1955
        %2110 = vmatprep.subr.mxu0 0.0
        %2111 = vmatpush1.msra.mxu0 0.0
        %2112 = vmatprep.subr.mxu0 0.0
        %2113 = vmatpush1.msra.mxu0 0.0
        %2114 = vmatprep.subr.mxu0 0.0
        %2115 = vmatpush1.msra.mxu0 0.0
        %2116 = vmatprep.subr.mxu0 0.0
        %2117 = vmatpush1.msra.mxu0 0.0
        %2118 = vmatprep.subr.mxu0 0.0
        %2119 = vmatpush1.msra.mxu0 0.0
        %2120 = vmatprep.subr.mxu0 0.0
        %2121 = vmatpush1.msra.mxu0 0.0
        %2122 = vmatprep.subr.mxu0 0.0
        %2123 = vmatpush1.msra.mxu0 0.0
        %2124 = vmatprep.subr.mxu0 0.0
        %2125 = vmatpush1.msra.mxu0 0.0
        %2126 = vmatprep.subr.mxu0 0.0
        %2127 = vmatpush1.msra.mxu0 0.0
        %2128 = vmatprep.subr.mxu0 0.0
        %2129 = vmatpush1.msra.mxu0 0.0
        %2130 = vmatprep.subr.mxu0 0.0
        %2131 = vmatpush1.msra.mxu0 0.0
        %2132 = vmatprep.subr.mxu0 0.0
        %2133 = vmatpush1.msra.mxu0 0.0
        %2134 = vmatprep.subr.mxu0 0.0
        %2135 = vmatpush1.msra.mxu0 0.0
        %2136 = vmatprep.subr.mxu0 0.0
        %2137 = vmatpush1.msra.mxu0 0.0
        %2138 = vmatprep.subr.mxu0 0.0
        %2139 = vmatpush1.msra.mxu0 0.0
        %2140 = vmatprep.subr.mxu0 0.0
        %2141 = vmatpush1.msra.mxu0 0.0
        %2142 = vmatprep.subr.mxu0 0.0
        %2143 = vmatpush1.msra.mxu0 0.0
        %2144 = vmatprep.subr.mxu0 0.0
        %2145 = vmatpush1.msra.mxu0 0.0
        %2146 = vmatprep.subr.mxu0 0.0
        %2147 = vmatpush1.msra.mxu0 0.0
        %2148 = vmatprep.subr.mxu0 0.0
        %2149 = vmatpush1.msra.mxu0 0.0
        %2150 = vmatprep.subr.mxu0 0.0
        %2151 = vmatpush1.msra.mxu0 0.0
        %2152 = vmatprep.subr.mxu0 0.0
        %2153 = vmatpush1.msra.mxu0 0.0
        %2154 = vmatprep.subr.mxu0 0.0
        %2155 = vmatpush1.msra.mxu0 0.0
        %2156 = vmatprep.subr.mxu0 0.0
        %2157 = vmatpush1.msra.mxu0 0.0
        %2158 = vmatprep.subr.mxu0 0.0
        %2159 = vmatpush1.msra.mxu0 0.0
        %2160 = vmatprep.subr.mxu0 0.0
        %2161 = vmatpush1.msra.mxu0 0.0
        %2162 = vmatprep.subr.mxu0 0.0
        %2163 = vmatpush1.msra.mxu0 0.0
        %2164 = vmatprep.subr.mxu0 0.0
        %2165 = vmatpush1.msra.mxu0 0.0
        %2166 = vmatprep.subr.mxu0 0.0
        %2167 = vmatpush1.msra.mxu0 0.0
        %2168 = vmatprep.mubr.f32.mxu0 0.0
        %2169 = vmatmul.mubr.f32.gmra.mrb[0].mxu0 %v2096
        %v2170 = vpop.f32.mrb[0].mxu0
        %v2171 = vadd.f32 0.0, %v2170
        %v2172 = vpop.f32.mrb[0].mxu0
        %2173 = vmatprep.mubr.f32.mxu0 0.0
        %2174 = vmatmul.mubr.f32.gmra.mrb[0].mxu0 %v2099
        %v2175 = vpop.f32.mrb[0].mxu0
        %v2176 = vadd.f32 0.0, %v2175
        %v2177 = vpop.f32.mrb[0].mxu0
        %2178 = vmatprep.mubr.f32.mxu0 0.0
        %2179 = vmatmul.mubr.f32.gmra.mrb[0].mxu0 %v2102
        %v2180 = vpop.f32.mrb[0].mxu0
        %v2181 = vadd.f32 0.0, %v2180
        %v2182 = vpop.f32.mrb[0].mxu0
        %2183 = vdwg.mxu0
        %s2184 = scalar_lea.vmem %s963, 8
        %v2185 = vld [vmem:[%s2184] sm:$0xff]
        %v2187 = vsel %vm1450, %v2171, 0
        %v2190 = vsel %vm1450, %v2176, 0
        %v2193 = vsel %vm1450, %v2181, 0
        %2195 = vmatprep.subr.mxu0 0.0
        %2196 = vmatpush1.msra.mxu0 %v2185
        %2197 = vmatprep.subr.mxu0 0.0
        %2198 = vmatpush1.msra.mxu0 0.0
        %2199 = vmatprep.subr.mxu0 0.0
        %2200 = vmatpush1.msra.mxu0 0.0
        %2201 = vmatprep.subr.mxu0 0.0
        %2202 = vmatpush1.msra.mxu0 0.0
        %2203 = vmatprep.subr.mxu0 0.0
        %2204 = vmatpush1.msra.mxu0 0.0
        %2205 = vmatprep.subr.mxu0 0.0
        %2206 = vmatpush1.msra.mxu0 0.0
        %2207 = vmatprep.subr.mxu0 0.0
        %2208 = vmatpush1.msra.mxu0 0.0
        %2209 = vmatprep.subr.mxu0 0.0
        %2210 = vmatpush1.msra.mxu0 0.0
        %2211 = vmatprep.subr.mxu0 0.0
        %2212 = vmatpush1.msra.mxu0 0.0
        %2213 = vmatprep.subr.mxu0 0.0
        %2214 = vmatpush1.msra.mxu0 0.0
        %2215 = vmatprep.subr.mxu0 0.0
        %2216 = vmatpush1.msra.mxu0 0.0
        %2217 = vmatprep.subr.mxu0 0.0
        %2218 = vmatpush1.msra.mxu0 0.0
        %2219 = vmatprep.subr.mxu0 0.0
        %2220 = vmatpush1.msra.mxu0 0.0
        %2221 = vmatprep.subr.mxu0 0.0
        %2222 = vmatpush1.msra.mxu0 0.0
        %2223 = vmatprep.subr.mxu0 0.0
        %2224 = vmatpush1.msra.mxu0 0.0
        %2225 = vmatprep.subr.mxu0 0.0
        %2226 = vmatpush1.msra.mxu0 0.0
        %2227 = vmatprep.subr.mxu0 0.0
        %2228 = vmatpush1.msra.mxu0 0.0
        %2229 = vmatprep.subr.mxu0 0.0
        %2230 = vmatpush1.msra.mxu0 0.0
        %2231 = vmatprep.subr.mxu0 0.0
        %2232 = vmatpush1.msra.mxu0 0.0
        %2233 = vmatprep.subr.mxu0 0.0
        %2234 = vmatpush1.msra.mxu0 0.0
        %2235 = vmatprep.subr.mxu0 0.0
        %2236 = vmatpush1.msra.mxu0 0.0
        %2237 = vmatprep.subr.mxu0 0.0
        %2238 = vmatpush1.msra.mxu0 0.0
        %2239 = vmatprep.subr.mxu0 0.0
        %2240 = vmatpush1.msra.mxu0 0.0
        %2241 = vmatprep.subr.mxu0 0.0
        %2242 = vmatpush1.msra.mxu0 0.0
        %2243 = vmatprep.subr.mxu0 0.0
        %2244 = vmatpush1.msra.mxu0 0.0
        %2245 = vmatprep.subr.mxu0 0.0
        %2246 = vmatpush1.msra.mxu0 0.0
        %2247 = vmatprep.subr.mxu0 0.0
        %2248 = vmatpush1.msra.mxu0 0.0
        %2249 = vmatprep.subr.mxu0 0.0
        %2250 = vmatpush1.msra.mxu0 0.0
        %2251 = vmatprep.subr.mxu0 0.0
        %2252 = vmatpush1.msra.mxu0 0.0
        %2253 = vmatprep.subr.mxu0 0.0
        %2254 = vmatpush1.msra.mxu0 0.0
        %2255 = vmatprep.subr.mxu0 0.0
        %2256 = vmatpush1.msra.mxu0 0.0
        %2257 = vmatprep.subr.mxu0 0.0
        %2258 = vmatpush1.msra.mxu0 0.0
        %2259 = vmatprep.mubr.f32.mxu0 0.0
        %2260 = vmatmul.mubr.f32.gmra.mrb[0].mxu0 %v2187
        %v2261 = vpop.f32.mrb[0].mxu0
        %v2262 = vadd.f32 0.0, %v2261
        %v2263 = vpop.f32.mrb[0].mxu0
        %2264 = vmatprep.mubr.f32.mxu0 0.0
        %2265 = vmatmul.mubr.f32.gmra.mrb[0].mxu0 %v2190
        %v2266 = vpop.f32.mrb[0].mxu0
        %v2267 = vadd.f32 0.0, %v2266
        %v2268 = vpop.f32.mrb[0].mxu0
        %2269 = vmatprep.mubr.f32.mxu0 0.0
        %2270 = vmatmul.mubr.f32.gmra.mrb[0].mxu0 %v2193
        %v2271 = vpop.f32.mrb[0].mxu0
        %v2272 = vadd.f32 0.0, %v2271
        %v2273 = vpop.f32.mrb[0].mxu0
        %2274 = vdwg.mxu0
        %v2276 = vsel %vm1450, %v1665, 0
        %v2279 = vsel %vm1450, %v1670, 0
        %v2282 = vsel %vm1450, %v1675, 0
        %2284 = vmatprep.subr.mxu0 0.0
        %2285 = vmatpush1.msra.mxu0 %v1678
        %2286 = vmatprep.subr.mxu0 0.0
        %2287 = vmatpush1.msra.mxu0 0.0
        %2288 = vmatprep.subr.mxu0 0.0
        %2289 = vmatpush1.msra.mxu0 0.0
        %2290 = vmatprep.subr.mxu0 0.0
        %2291 = vmatpush1.msra.mxu0 0.0
        %2292 = vmatprep.subr.mxu0 0.0
        %2293 = vmatpush1.msra.mxu0 0.0
        %2294 = vmatprep.subr.mxu0 0.0
        %2295 = vmatpush1.msra.mxu0 0.0
        %2296 = vmatprep.subr.mxu0 0.0
        %2297 = vmatpush1.msra.mxu0 0.0
        %2298 = vmatprep.subr.mxu0 0.0
        %2299 = vmatpush1.msra.mxu0 0.0
        %2300 = vmatprep.subr.mxu0 0.0
        %2301 = vmatpush1.msra.mxu0 0.0
        %2302 = vmatprep.subr.mxu0 0.0
        %2303 = vmatpush1.msra.mxu0 0.0
        %2304 = vmatprep.subr.mxu0 0.0
        %2305 = vmatpush1.msra.mxu0 0.0
        %2306 = vmatprep.subr.mxu0 0.0
        %2307 = vmatpush1.msra.mxu0 0.0
        %2308 = vmatprep.subr.mxu0 0.0
        %2309 = vmatpush1.msra.mxu0 0.0
        %2310 = vmatprep.subr.mxu0 0.0
        %2311 = vmatpush1.msra.mxu0 0.0
        %2312 = vmatprep.subr.mxu0 0.0
        %2313 = vmatpush1.msra.mxu0 0.0
        %2314 = vmatprep.subr.mxu0 0.0
        %2315 = vmatpush1.msra.mxu0 0.0
        %2316 = vmatprep.subr.mxu0 0.0
        %2317 = vmatpush1.msra.mxu0 0.0
        %2318 = vmatprep.subr.mxu0 0.0
        %2319 = vmatpush1.msra.mxu0 0.0
        %2320 = vmatprep.subr.mxu0 0.0
        %2321 = vmatpush1.msra.mxu0 0.0
        %2322 = vmatprep.subr.mxu0 0.0
        %2323 = vmatpush1.msra.mxu0 0.0
        %2324 = vmatprep.subr.mxu0 0.0
        %2325 = vmatpush1.msra.mxu0 0.0
        %2326 = vmatprep.subr.mxu0 0.0
        %2327 = vmatpush1.msra.mxu0 0.0
        %2328 = vmatprep.subr.mxu0 0.0
        %2329 = vmatpush1.msra.mxu0 0.0
        %2330 = vmatprep.subr.mxu0 0.0
        %2331 = vmatpush1.msra.mxu0 0.0
        %2332 = vmatprep.subr.mxu0 0.0
        %2333 = vmatpush1.msra.mxu0 0.0
        %2334 = vmatprep.subr.mxu0 0.0
        %2335 = vmatpush1.msra.mxu0 0.0
        %2336 = vmatprep.subr.mxu0 0.0
        %2337 = vmatpush1.msra.mxu0 0.0
        %2338 = vmatprep.subr.mxu0 0.0
        %2339 = vmatpush1.msra.mxu0 0.0
        %2340 = vmatprep.subr.mxu0 0.0
        %2341 = vmatpush1.msra.mxu0 0.0
        %2342 = vmatprep.subr.mxu0 0.0
        %2343 = vmatpush1.msra.mxu0 0.0
        %2344 = vmatprep.subr.mxu0 0.0
        %2345 = vmatpush1.msra.mxu0 0.0
        %2346 = vmatprep.subr.mxu0 0.0
        %2347 = vmatpush1.msra.mxu0 0.0
        %2348 = vmatprep.mubr.f32.mxu0 0.0
        %2349 = vmatmul.mubr.f32.gmra.mrb[0].mxu0 %v2276
        %v2350 = vpop.f32.mrb[0].mxu0
        %v2351 = vadd.f32 %v2262, %v2350
        %v2352 = vpop.f32.mrb[0].mxu0
        %2353 = vmatprep.mubr.f32.mxu0 0.0
        %2354 = vmatmul.mubr.f32.gmra.mrb[0].mxu0 %v2279
        %v2355 = vpop.f32.mrb[0].mxu0
        %v2356 = vadd.f32 %v2267, %v2355
        %v2357 = vpop.f32.mrb[0].mxu0
        %2358 = vmatprep.mubr.f32.mxu0 0.0
        %2359 = vmatmul.mubr.f32.gmra.mrb[0].mxu0 %v2282
        %v2360 = vpop.f32.mrb[0].mxu0
        %v2361 = vadd.f32 %v2272, %v2360
        %v2362 = vpop.f32.mrb[0].mxu0
        %2363 = vdwg.mxu0
        %s2364 = scalar_lea.vmem %s936, 64
        %v2365 = vld [vmem:[%s2364] sm:$0xff]
        %v2366 = vld [vmem:[%s2364 + $0x8] sm:$0xff]
        %v2367 = vld [vmem:[%s2364 + $0x10] sm:$0xff]
        %v2368 = vld [vmem:[%s2364 + $0x18] sm:$0xff]
        %s2369 = scalar_lea.vmem %s950, 2
        %v2370 = vld [vmem:[%s2369] sm:$0x1]
        %v2372 = vlaneseq
        %v2373 = vshrl.u32 %v2372, 7
        %v2374 = vsub.s32 0, %v2373
        %v2375 = vrot.slane %v2370, %v2374
        %2377 = vmatprep.subr.mxu0 0.0
        %2378 = vmatpush1.msra.mxu0 %v2365
        %2379 = vmatprep.subr.mxu0 0.0
        %2380 = vmatpush1.msra.mxu0 %v2366
        %2381 = vmatprep.subr.mxu0 0.0
        %2382 = vmatpush1.msra.mxu0 %v2367
        %2383 = vmatprep.subr.mxu0 0.0
        %2384 = vmatpush1.msra.mxu0 %v2368
        %2385 = vmatprep.subr.mxu0 0.0
        %2386 = vmatpush1.msra.mxu0 0.0
        %2387 = vmatprep.subr.mxu0 0.0
        %2388 = vmatpush1.msra.mxu0 0.0
        %2389 = vmatprep.subr.mxu0 0.0
        %2390 = vmatpush1.msra.mxu0 0.0
        %2391 = vmatprep.subr.mxu0 0.0
        %2392 = vmatpush1.msra.mxu0 0.0
        %2393 = vmatprep.subr.mxu0 0.0
        %2394 = vmatpush1.msra.mxu0 0.0
        %2395 = vmatprep.subr.mxu0 0.0
        %2396 = vmatpush1.msra.mxu0 0.0
        %2397 = vmatprep.subr.mxu0 0.0
        %2398 = vmatpush1.msra.mxu0 0.0
        %2399 = vmatprep.subr.mxu0 0.0
        %2400 = vmatpush1.msra.mxu0 0.0
        %2401 = vmatprep.subr.mxu0 0.0
        %2402 = vmatpush1.msra.mxu0 0.0
        %2403 = vmatprep.subr.mxu0 0.0
        %2404 = vmatpush1.msra.mxu0 0.0
        %2405 = vmatprep.subr.mxu0 0.0
        %2406 = vmatpush1.msra.mxu0 0.0
        %2407 = vmatprep.subr.mxu0 0.0
        %2408 = vmatpush1.msra.mxu0 0.0
        %2409 = vmatprep.subr.mxu0 0.0
        %2410 = vmatpush1.msra.mxu0 0.0
        %2411 = vmatprep.subr.mxu0 0.0
        %2412 = vmatpush1.msra.mxu0 0.0
        %2413 = vmatprep.subr.mxu0 0.0
        %2414 = vmatpush1.msra.mxu0 0.0
        %2415 = vmatprep.subr.mxu0 0.0
        %2416 = vmatpush1.msra.mxu0 0.0
        %2417 = vmatprep.subr.mxu0 0.0
        %2418 = vmatpush1.msra.mxu0 0.0
        %2419 = vmatprep.subr.mxu0 0.0
        %2420 = vmatpush1.msra.mxu0 0.0
        %2421 = vmatprep.subr.mxu0 0.0
        %2422 = vmatpush1.msra.mxu0 0.0
        %2423 = vmatprep.subr.mxu0 0.0
        %2424 = vmatpush1.msra.mxu0 0.0
        %2425 = vmatprep.subr.mxu0 0.0
        %2426 = vmatpush1.msra.mxu0 0.0
        %2427 = vmatprep.subr.mxu0 0.0
        %2428 = vmatpush1.msra.mxu0 0.0
        %2429 = vmatprep.subr.mxu0 0.0
        %2430 = vmatpush1.msra.mxu0 0.0
        %2431 = vmatprep.subr.mxu0 0.0
        %2432 = vmatpush1.msra.mxu0 0.0
        %2433 = vmatprep.subr.mxu0 0.0
        %2434 = vmatpush1.msra.mxu0 0.0
        %2435 = vmatprep.subr.mxu0 0.0
        %2436 = vmatpush1.msra.mxu0 0.0
        %2437 = vmatprep.subr.mxu0 0.0
        %2438 = vmatpush1.msra.mxu0 0.0
        %2439 = vmatprep.subr.mxu0 0.0
        %2440 = vmatpush1.msra.mxu0 0.0
        %2441 = vmatprep.mubr.f32.mxu0 0.0
        %2442 = vmatmul.mubr.f32.gmra.mrb[0].mxu0 %v1180
        %v2443 = vpop.f32.mrb[0].mxu0
        %v2444 = vadd.f32 %v2375, %v2443
        %v2445 = vpop.f32.mrb[0].mxu0
        %2446 = vmatprep.mubr.f32.mxu0 0.0
        %2447 = vmatmul.mubr.f32.gmra.mrb[0].mxu0 %v1183
        %v2448 = vpop.f32.mrb[0].mxu0
        %v2449 = vadd.f32 %v2375, %v2448
        %v2450 = vpop.f32.mrb[0].mxu0
        %2451 = vmatprep.mubr.f32.mxu0 0.0
        %2452 = vmatmul.mubr.f32.gmra.mrb[0].mxu0 %v1186
        %v2453 = vpop.f32.mrb[0].mxu0
        %v2454 = vadd.f32 %v2375, %v2453
        %v2455 = vpop.f32.mrb[0].mxu0
        %2456 = vdwg.mxu0
        %s2457 = scalar_lea.vmem %s941, 64
        %v2458 = vld [vmem:[%s2457] sm:$0xff]
        %v2459 = vld [vmem:[%s2457 + $0x8] sm:$0xff]
        %v2460 = vld [vmem:[%s2457 + $0x10] sm:$0xff]
        %v2461 = vld [vmem:[%s2457 + $0x18] sm:$0xff]
        %s2462 = scalar_lea.vmem %s954, 2
        %v2463 = vld [vmem:[%s2462] sm:$0x1]
        %v2465 = vlaneseq
        %v2466 = vshrl.u32 %v2465, 7
        %v2467 = vsub.s32 0, %v2466
        %v2468 = vrot.slane %v2463, %v2467
        %2470 = vmatprep.subr.mxu0 0.0
        %2471 = vmatpush1.msra.mxu0 %v2458
        %2472 = vmatprep.subr.mxu0 0.0
        %2473 = vmatpush1.msra.mxu0 %v2459
        %2474 = vmatprep.subr.mxu0 0.0
        %2475 = vmatpush1.msra.mxu0 %v2460
        %2476 = vmatprep.subr.mxu0 0.0
        %2477 = vmatpush1.msra.mxu0 %v2461
        %2478 = vmatprep.subr.mxu0 0.0
        %2479 = vmatpush1.msra.mxu0 0.0
        %2480 = vmatprep.subr.mxu0 0.0
        %2481 = vmatpush1.msra.mxu0 0.0
        %2482 = vmatprep.subr.mxu0 0.0
        %2483 = vmatpush1.msra.mxu0 0.0
        %2484 = vmatprep.subr.mxu0 0.0
        %2485 = vmatpush1.msra.mxu0 0.0
        %2486 = vmatprep.subr.mxu0 0.0
        %2487 = vmatpush1.msra.mxu0 0.0
        %2488 = vmatprep.subr.mxu0 0.0
        %2489 = vmatpush1.msra.mxu0 0.0
        %2490 = vmatprep.subr.mxu0 0.0
        %2491 = vmatpush1.msra.mxu0 0.0
        %2492 = vmatprep.subr.mxu0 0.0
        %2493 = vmatpush1.msra.mxu0 0.0
        %2494 = vmatprep.subr.mxu0 0.0
        %2495 = vmatpush1.msra.mxu0 0.0
        %2496 = vmatprep.subr.mxu0 0.0
        %2497 = vmatpush1.msra.mxu0 0.0
        %2498 = vmatprep.subr.mxu0 0.0
        %2499 = vmatpush1.msra.mxu0 0.0
        %2500 = vmatprep.subr.mxu0 0.0
        %2501 = vmatpush1.msra.mxu0 0.0
        %2502 = vmatprep.subr.mxu0 0.0
        %2503 = vmatpush1.msra.mxu0 0.0
        %2504 = vmatprep.subr.mxu0 0.0
        %2505 = vmatpush1.msra.mxu0 0.0
        %2506 = vmatprep.subr.mxu0 0.0
        %2507 = vmatpush1.msra.mxu0 0.0
        %2508 = vmatprep.subr.mxu0 0.0
        %2509 = vmatpush1.msra.mxu0 0.0
        %2510 = vmatprep.subr.mxu0 0.0
        %2511 = vmatpush1.msra.mxu0 0.0
        %2512 = vmatprep.subr.mxu0 0.0
        %2513 = vmatpush1.msra.mxu0 0.0
        %2514 = vmatprep.subr.mxu0 0.0
        %2515 = vmatpush1.msra.mxu0 0.0
        %2516 = vmatprep.subr.mxu0 0.0
        %2517 = vmatpush1.msra.mxu0 0.0
        %2518 = vmatprep.subr.mxu0 0.0
        %2519 = vmatpush1.msra.mxu0 0.0
        %2520 = vmatprep.subr.mxu0 0.0
        %2521 = vmatpush1.msra.mxu0 0.0
        %2522 = vmatprep.subr.mxu0 0.0
        %2523 = vmatpush1.msra.mxu0 0.0
        %2524 = vmatprep.subr.mxu0 0.0
        %2525 = vmatpush1.msra.mxu0 0.0
        %2526 = vmatprep.subr.mxu0 0.0
        %2527 = vmatpush1.msra.mxu0 0.0
        %2528 = vmatprep.subr.mxu0 0.0
        %2529 = vmatpush1.msra.mxu0 0.0
        %2530 = vmatprep.subr.mxu0 0.0
        %2531 = vmatpush1.msra.mxu0 0.0
        %2532 = vmatprep.subr.mxu0 0.0
        %2533 = vmatpush1.msra.mxu0 0.0
        %2534 = vmatprep.mubr.f32.mxu0 0.0
        %2535 = vmatmul.mubr.f32.gmra.mrb[0].mxu0 %v1180
        %v2536 = vpop.f32.mrb[0].mxu0
        %v2537 = vadd.f32 %v2468, %v2536
        %v2538 = vpop.f32.mrb[0].mxu0
        %2539 = vmatprep.mubr.f32.mxu0 0.0
        %2540 = vmatmul.mubr.f32.gmra.mrb[0].mxu0 %v1183
        %v2541 = vpop.f32.mrb[0].mxu0
        %v2542 = vadd.f32 %v2468, %v2541
        %v2543 = vpop.f32.mrb[0].mxu0
        %2544 = vmatprep.mubr.f32.mxu0 0.0
        %2545 = vmatmul.mubr.f32.gmra.mrb[0].mxu0 %v1186
        %v2546 = vpop.f32.mrb[0].mxu0
        %v2547 = vadd.f32 %v2468, %v2546
        %v2548 = vpop.f32.mrb[0].mxu0
        %2549 = vdwg.mxu0
        %s2550 = scalar_lea.vmem %s946, 64
        %v2551 = vld [vmem:[%s2550] sm:$0xff]
        %v2552 = vld [vmem:[%s2550 + $0x8] sm:$0xff]
        %v2553 = vld [vmem:[%s2550 + $0x10] sm:$0xff]
        %v2554 = vld [vmem:[%s2550 + $0x18] sm:$0xff]
        %s2555 = scalar_lea.vmem %s958, 2
        %v2556 = vld [vmem:[%s2555] sm:$0x1]
        %v2558 = vlaneseq
        %v2559 = vshrl.u32 %v2558, 7
        %v2560 = vsub.s32 0, %v2559
        %v2561 = vrot.slane %v2556, %v2560
        %2563 = vmatprep.subr.mxu0 0.0
        %2564 = vmatpush1.msra.mxu0 %v2551
        %2565 = vmatprep.subr.mxu0 0.0
        %2566 = vmatpush1.msra.mxu0 %v2552
        %2567 = vmatprep.subr.mxu0 0.0
        %2568 = vmatpush1.msra.mxu0 %v2553
        %2569 = vmatprep.subr.mxu0 0.0
        %2570 = vmatpush1.msra.mxu0 %v2554
        %2571 = vmatprep.subr.mxu0 0.0
        %2572 = vmatpush1.msra.mxu0 0.0
        %2573 = vmatprep.subr.mxu0 0.0
        %2574 = vmatpush1.msra.mxu0 0.0
        %2575 = vmatprep.subr.mxu0 0.0
        %2576 = vmatpush1.msra.mxu0 0.0
        %2577 = vmatprep.subr.mxu0 0.0
        %2578 = vmatpush1.msra.mxu0 0.0
        %2579 = vmatprep.subr.mxu0 0.0
        %2580 = vmatpush1.msra.mxu0 0.0
        %2581 = vmatprep.subr.mxu0 0.0
        %2582 = vmatpush1.msra.mxu0 0.0
        %2583 = vmatprep.subr.mxu0 0.0
        %2584 = vmatpush1.msra.mxu0 0.0
        %2585 = vmatprep.subr.mxu0 0.0
        %2586 = vmatpush1.msra.mxu0 0.0
        %2587 = vmatprep.subr.mxu0 0.0
        %2588 = vmatpush1.msra.mxu0 0.0
        %2589 = vmatprep.subr.mxu0 0.0
        %2590 = vmatpush1.msra.mxu0 0.0
        %2591 = vmatprep.subr.mxu0 0.0
        %2592 = vmatpush1.msra.mxu0 0.0
        %2593 = vmatprep.subr.mxu0 0.0
        %2594 = vmatpush1.msra.mxu0 0.0
        %2595 = vmatprep.subr.mxu0 0.0
        %2596 = vmatpush1.msra.mxu0 0.0
        %2597 = vmatprep.subr.mxu0 0.0
        %2598 = vmatpush1.msra.mxu0 0.0
        %2599 = vmatprep.subr.mxu0 0.0
        %2600 = vmatpush1.msra.mxu0 0.0
        %2601 = vmatprep.subr.mxu0 0.0
        %2602 = vmatpush1.msra.mxu0 0.0
        %2603 = vmatprep.subr.mxu0 0.0
        %2604 = vmatpush1.msra.mxu0 0.0
        %2605 = vmatprep.subr.mxu0 0.0
        %2606 = vmatpush1.msra.mxu0 0.0
        %2607 = vmatprep.subr.mxu0 0.0
        %2608 = vmatpush1.msra.mxu0 0.0
        %2609 = vmatprep.subr.mxu0 0.0
        %2610 = vmatpush1.msra.mxu0 0.0
        %2611 = vmatprep.subr.mxu0 0.0
        %2612 = vmatpush1.msra.mxu0 0.0
        %2613 = vmatprep.subr.mxu0 0.0
        %2614 = vmatpush1.msra.mxu0 0.0
        %2615 = vmatprep.subr.mxu0 0.0
        %2616 = vmatpush1.msra.mxu0 0.0
        %2617 = vmatprep.subr.mxu0 0.0
        %2618 = vmatpush1.msra.mxu0 0.0
        %2619 = vmatprep.subr.mxu0 0.0
        %2620 = vmatpush1.msra.mxu0 0.0
        %2621 = vmatprep.subr.mxu0 0.0
        %2622 = vmatpush1.msra.mxu0 0.0
        %2623 = vmatprep.subr.mxu0 0.0
        %2624 = vmatpush1.msra.mxu0 0.0
        %2625 = vmatprep.subr.mxu0 0.0
        %2626 = vmatpush1.msra.mxu0 0.0
        %2627 = vmatprep.mubr.f32.mxu0 0.0
        %2628 = vmatmul.mubr.f32.gmra.mrb[0].mxu0 %v1180
        %v2629 = vpop.f32.mrb[0].mxu0
        %v2630 = vadd.f32 %v2561, %v2629
        %v2631 = vpop.f32.mrb[0].mxu0
        %2632 = vmatprep.mubr.f32.mxu0 0.0
        %2633 = vmatmul.mubr.f32.gmra.mrb[0].mxu0 %v1183
        %v2634 = vpop.f32.mrb[0].mxu0
        %v2635 = vadd.f32 %v2561, %v2634
        %v2636 = vpop.f32.mrb[0].mxu0
        %2637 = vmatprep.mubr.f32.mxu0 0.0
        %2638 = vmatmul.mubr.f32.gmra.mrb[0].mxu0 %v1186
        %v2639 = vpop.f32.mrb[0].mxu0
        %v2640 = vadd.f32 %v2561, %v2639
        %v2641 = vpop.f32.mrb[0].mxu0
        %2642 = vdwg.mxu0
        %v2644 = vsel %vm1450, %v2444, 0
        %v2647 = vsel %vm1450, %v2449, 0
        %v2650 = vsel %vm1450, %v2454, 0
        %v2653 = vsel %vm1450, %v2537, 0
        %v2656 = vsel %vm1450, %v2542, 0
        %v2659 = vsel %vm1450, %v2547, 0
        %2661 = vmatprep.subr.mxu0 0.0
        %2662 = vmatpush1.xpose.msra.mxu0 %v2653
        %2663 = vmatprep.subr.mxu0 0.0
        %2664 = vmatpush1.xpose.msra.mxu0 %v2656
        %2665 = vmatprep.subr.mxu0 0.0
        %2666 = vmatpush1.xpose.msra.mxu0 %v2659
        %2667 = vmatprep.subr.mxu0 0.0
        %2668 = vmatpush1.xpose.msra.mxu0 0.0
        %2669 = vmatprep.subr.mxu0 0.0
        %2670 = vmatpush1.xpose.msra.mxu0 0.0
        %2671 = vmatprep.subr.mxu0 0.0
        %2672 = vmatpush1.xpose.msra.mxu0 0.0
        %2673 = vmatprep.subr.mxu0 0.0
        %2674 = vmatpush1.xpose.msra.mxu0 0.0
        %2675 = vmatprep.subr.mxu0 0.0
        %2676 = vmatpush1.xpose.msra.mxu0 0.0
        %2677 = vmatprep.subr.mxu0 0.0
        %2678 = vmatpush1.xpose.msra.mxu0 0.0
        %2679 = vmatprep.subr.mxu0 0.0
        %2680 = vmatpush1.xpose.msra.mxu0 0.0
        %2681 = vmatprep.subr.mxu0 0.0
        %2682 = vmatpush1.xpose.msra.mxu0 0.0
        %2683 = vmatprep.subr.mxu0 0.0
        %2684 = vmatpush1.xpose.msra.mxu0 0.0
        %2685 = vmatprep.subr.mxu0 0.0
        %2686 = vmatpush1.xpose.msra.mxu0 0.0
        %2687 = vmatprep.subr.mxu0 0.0
        %2688 = vmatpush1.xpose.msra.mxu0 0.0
        %2689 = vmatprep.subr.mxu0 0.0
        %2690 = vmatpush1.xpose.msra.mxu0 0.0
        %2691 = vmatprep.subr.mxu0 0.0
        %2692 = vmatpush1.xpose.msra.mxu0 0.0
        %2693 = vmatprep.subr.mxu0 0.0
        %2694 = vmatpush1.xpose.msra.mxu0 0.0
        %2695 = vmatprep.subr.mxu0 0.0
        %2696 = vmatpush1.xpose.msra.mxu0 0.0
        %2697 = vmatprep.subr.mxu0 0.0
        %2698 = vmatpush1.xpose.msra.mxu0 0.0
        %2699 = vmatprep.subr.mxu0 0.0
        %2700 = vmatpush1.xpose.msra.mxu0 0.0
        %2701 = vmatprep.subr.mxu0 0.0
        %2702 = vmatpush1.xpose.msra.mxu0 0.0
        %2703 = vmatprep.subr.mxu0 0.0
        %2704 = vmatpush1.xpose.msra.mxu0 0.0
        %2705 = vmatprep.subr.mxu0 0.0
        %2706 = vmatpush1.xpose.msra.mxu0 0.0
        %2707 = vmatprep.subr.mxu0 0.0
        %2708 = vmatpush1.xpose.msra.mxu0 0.0
        %2709 = vmatprep.subr.mxu0 0.0
        %2710 = vmatpush1.xpose.msra.mxu0 0.0
        %2711 = vmatprep.subr.mxu0 0.0
        %2712 = vmatpush1.xpose.msra.mxu0 0.0
        %2713 = vmatprep.subr.mxu0 0.0
        %2714 = vmatpush1.xpose.msra.mxu0 0.0
        %2715 = vmatprep.subr.mxu0 0.0
        %2716 = vmatpush1.xpose.msra.mxu0 0.0
        %2717 = vmatprep.subr.mxu0 0.0
        %2718 = vmatpush1.xpose.msra.mxu0 0.0
        %2719 = vmatprep.subr.mxu0 0.0
        %2720 = vmatpush1.xpose.msra.mxu0 0.0
        %2721 = vmatprep.subr.mxu0 0.0
        %2722 = vmatpush1.xpose.msra.mxu0 0.0
        %2723 = vmatprep.subr.mxu0 0.0
        %2724 = vmatpush1.xpose.msra.mxu0 0.0
        %2725 = vmatprep.mubr.f32.mxu0 0.0
        %2726 = vmatmul.mubr.f32.gmra.mrb[0].mxu0 %v2644
        %v2727 = vpop.f32.mrb[0].mxu0
        %v2728 = vadd.f32 0.0, %v2727
        %v2729 = vpop.f32.mrb[0].mxu0
        %2730 = vmatprep.mubr.f32.mxu0 0.0
        %2731 = vmatmul.mubr.f32.gmra.mrb[0].mxu0 %v2647
        %v2732 = vpop.f32.mrb[0].mxu0
        %v2733 = vadd.f32 0.0, %v2732
        %v2734 = vpop.f32.mrb[0].mxu0
        %2735 = vmatprep.mubr.f32.mxu0 0.0
        %2736 = vmatmul.mubr.f32.gmra.mrb[0].mxu0 %v2650
        %v2737 = vpop.f32.mrb[0].mxu0
        %v2738 = vadd.f32 0.0, %v2737
        %v2739 = vpop.f32.mrb[0].mxu0
        %2740 = vdwg.mxu0
        %v2741 = vmul.f32 %v2728, 0.35355338
        %v2742 = vmul.f32 %v2733, 0.35355338
        %v2743 = vmul.f32 %v2738, 0.35355338
        %v2744 = vsel %vm1167, %v2741, -1e+30
        %v2745 = vsel %vm1167, %v2742, -1e+30
        %v2746 = vsel %vm1167, %v2743, -1e+30
        %v2747 = vsel %vm1555, %v2744, -inf
        %2748 = vmax.xlane.f32.xlu0 %v2747
        %v2749 = vpop.xlane.xlu0 %2748
        %v2750 = vsel %vm1555, %v2745, -inf
        %2751 = vmax.xlane.f32.xlu0 %v2750
        %v2752 = vpop.xlane.xlu0 %2751
        %v2753 = vsel %vm1555, %v2746, -inf
        %2754 = vmax.xlane.f32.xlu0 %v2753
        %v2755 = vpop.xlane.xlu0 %2754
        %v2756 = vsub.f32 %v2744, %v2749
        %v2757 = vsub.f32 %v2745, %v2752
        %v2758 = vsub.f32 %v2746, %v2755
        %v2759 = vmul.f32 %v2756, 1.442695
        %v2760 = vpow.pop %v2759
        %v2761 = vmul.f32 %v2757, 1.442695
        %v2762 = vpow.pop %v2761
        %v2763 = vmul.f32 %v2758, 1.442695
        %v2764 = vpow.pop %v2763
        %v2765 = vsel %vm1555, %v2760, 0.0
        %2766 = vadd.xlane.f32.xlu0 %v2765
        %v2767 = vpop.xlane.xlu0 %2766
        %v2768 = vsel %vm1555, %v2762, 0.0
        %2769 = vadd.xlane.f32.xlu0 %v2768
        %v2770 = vpop.xlane.xlu0 %2769
        %v2771 = vsel %vm1555, %v2764, 0.0
        %2772 = vadd.xlane.f32.xlu0 %v2771
        %v2773 = vpop.xlane.xlu0 %2772
        %v2774 = vrcp.pop %v2767
        %v2775 = vrcp.pop %v2770
        %v2776 = vrcp.pop %v2773
        %v2777 = vmul.f32 %v2760, %v2774
        %v2778 = vmul.f32 %v2762, %v2775
        %v2779 = vmul.f32 %v2764, %v2776
        %v2781 = vsel %vm1555, %v2777, 0
        %v2784 = vsel %vm1555, %v2778, 0
        %v2787 = vsel %vm1555, %v2779, 0
        %2789 = vmatprep.subr.mxu0 0.0
        %2790 = vmatpush1.msra.mxu0 %v2630
        %2791 = vmatprep.subr.mxu0 0.0
        %2792 = vmatpush1.msra.mxu0 %v2635
        %2793 = vmatprep.subr.mxu0 0.0
        %2794 = vmatpush1.msra.mxu0 %v2640
        %2795 = vmatprep.subr.mxu0 0.0
        %2796 = vmatpush1.msra.mxu0 0.0
        %2797 = vmatprep.subr.mxu0 0.0
        %2798 = vmatpush1.msra.mxu0 0.0
        %2799 = vmatprep.subr.mxu0 0.0
        %2800 = vmatpush1.msra.mxu0 0.0
        %2801 = vmatprep.subr.mxu0 0.0
        %2802 = vmatpush1.msra.mxu0 0.0
        %2803 = vmatprep.subr.mxu0 0.0
        %2804 = vmatpush1.msra.mxu0 0.0
        %2805 = vmatprep.subr.mxu0 0.0
        %2806 = vmatpush1.msra.mxu0 0.0
        %2807 = vmatprep.subr.mxu0 0.0
        %2808 = vmatpush1.msra.mxu0 0.0
        %2809 = vmatprep.subr.mxu0 0.0
        %2810 = vmatpush1.msra.mxu0 0.0
        %2811 = vmatprep.subr.mxu0 0.0
        %2812 = vmatpush1.msra.mxu0 0.0
        %2813 = vmatprep.subr.mxu0 0.0
        %2814 = vmatpush1.msra.mxu0 0.0
        %2815 = vmatprep.subr.mxu0 0.0
        %2816 = vmatpush1.msra.mxu0 0.0
        %2817 = vmatprep.subr.mxu0 0.0
        %2818 = vmatpush1.msra.mxu0 0.0
        %2819 = vmatprep.subr.mxu0 0.0
        %2820 = vmatpush1.msra.mxu0 0.0
        %2821 = vmatprep.subr.mxu0 0.0
        %2822 = vmatpush1.msra.mxu0 0.0
        %2823 = vmatprep.subr.mxu0 0.0
        %2824 = vmatpush1.msra.mxu0 0.0
        %2825 = vmatprep.subr.mxu0 0.0
        %2826 = vmatpush1.msra.mxu0 0.0
        %2827 = vmatprep.subr.mxu0 0.0
        %2828 = vmatpush1.msra.mxu0 0.0
        %2829 = vmatprep.subr.mxu0 0.0
        %2830 = vmatpush1.msra.mxu0 0.0
        %2831 = vmatprep.subr.mxu0 0.0
        %2832 = vmatpush1.msra.mxu0 0.0
        %2833 = vmatprep.subr.mxu0 0.0
        %2834 = vmatpush1.msra.mxu0 0.0
        %2835 = vmatprep.subr.mxu0 0.0
        %2836 = vmatpush1.msra.mxu0 0.0
        %2837 = vmatprep.subr.mxu0 0.0
        %2838 = vmatpush1.msra.mxu0 0.0
        %2839 = vmatprep.subr.mxu0 0.0
        %2840 = vmatpush1.msra.mxu0 0.0
        %2841 = vmatprep.subr.mxu0 0.0
        %2842 = vmatpush1.msra.mxu0 0.0
        %2843 = vmatprep.subr.mxu0 0.0
        %2844 = vmatpush1.msra.mxu0 0.0
        %2845 = vmatprep.subr.mxu0 0.0
        %2846 = vmatpush1.msra.mxu0 0.0
        %2847 = vmatprep.subr.mxu0 0.0
        %2848 = vmatpush1.msra.mxu0 0.0
        %2849 = vmatprep.subr.mxu0 0.0
        %2850 = vmatpush1.msra.mxu0 0.0
        %2851 = vmatprep.subr.mxu0 0.0
        %2852 = vmatpush1.msra.mxu0 0.0
        %2853 = vmatprep.mubr.f32.mxu0 0.0
        %2854 = vmatmul.mubr.f32.gmra.mrb[0].mxu0 %v2781
        %v2855 = vpop.f32.mrb[0].mxu0
        %v2856 = vadd.f32 0.0, %v2855
        %v2857 = vpop.f32.mrb[0].mxu0
        %2858 = vmatprep.mubr.f32.mxu0 0.0
        %2859 = vmatmul.mubr.f32.gmra.mrb[0].mxu0 %v2784
        %v2860 = vpop.f32.mrb[0].mxu0
        %v2861 = vadd.f32 0.0, %v2860
        %v2862 = vpop.f32.mrb[0].mxu0
        %2863 = vmatprep.mubr.f32.mxu0 0.0
        %2864 = vmatmul.mubr.f32.gmra.mrb[0].mxu0 %v2787
        %v2865 = vpop.f32.mrb[0].mxu0
        %v2866 = vadd.f32 0.0, %v2865
        %v2867 = vpop.f32.mrb[0].mxu0
        %2868 = vdwg.mxu0
        %s2869 = scalar_lea.vmem %s963, 16
        %v2870 = vld [vmem:[%s2869] sm:$0xff]
        %v2872 = vsel %vm1450, %v2856, 0
        %v2875 = vsel %vm1450, %v2861, 0
        %v2878 = vsel %vm1450, %v2866, 0
        %2880 = vmatprep.subr.mxu0 0.0
        %2881 = vmatpush1.msra.mxu0 %v2870
        %2882 = vmatprep.subr.mxu0 0.0
        %2883 = vmatpush1.msra.mxu0 0.0
        %2884 = vmatprep.subr.mxu0 0.0
        %2885 = vmatpush1.msra.mxu0 0.0
        %2886 = vmatprep.subr.mxu0 0.0
        %2887 = vmatpush1.msra.mxu0 0.0
        %2888 = vmatprep.subr.mxu0 0.0
        %2889 = vmatpush1.msra.mxu0 0.0
        %2890 = vmatprep.subr.mxu0 0.0
        %2891 = vmatpush1.msra.mxu0 0.0
        %2892 = vmatprep.subr.mxu0 0.0
        %2893 = vmatpush1.msra.mxu0 0.0
        %2894 = vmatprep.subr.mxu0 0.0
        %2895 = vmatpush1.msra.mxu0 0.0
        %2896 = vmatprep.subr.mxu0 0.0
        %2897 = vmatpush1.msra.mxu0 0.0
        %2898 = vmatprep.subr.mxu0 0.0
        %2899 = vmatpush1.msra.mxu0 0.0
        %2900 = vmatprep.subr.mxu0 0.0
        %2901 = vmatpush1.msra.mxu0 0.0
        %2902 = vmatprep.subr.mxu0 0.0
        %2903 = vmatpush1.msra.mxu0 0.0
        %2904 = vmatprep.subr.mxu0 0.0
        %2905 = vmatpush1.msra.mxu0 0.0
        %2906 = vmatprep.subr.mxu0 0.0
        %2907 = vmatpush1.msra.mxu0 0.0
        %2908 = vmatprep.subr.mxu0 0.0
        %2909 = vmatpush1.msra.mxu0 0.0
        %2910 = vmatprep.subr.mxu0 0.0
        %2911 = vmatpush1.msra.mxu0 0.0
        %2912 = vmatprep.subr.mxu0 0.0
        %2913 = vmatpush1.msra.mxu0 0.0
        %2914 = vmatprep.subr.mxu0 0.0
        %2915 = vmatpush1.msra.mxu0 0.0
        %2916 = vmatprep.subr.mxu0 0.0
        %2917 = vmatpush1.msra.mxu0 0.0
        %2918 = vmatprep.subr.mxu0 0.0
        %2919 = vmatpush1.msra.mxu0 0.0
        %2920 = vmatprep.subr.mxu0 0.0
        %2921 = vmatpush1.msra.mxu0 0.0
        %2922 = vmatprep.subr.mxu0 0.0
        %2923 = vmatpush1.msra.mxu0 0.0
        %2924 = vmatprep.subr.mxu0 0.0
        %2925 = vmatpush1.msra.mxu0 0.0
        %2926 = vmatprep.subr.mxu0 0.0
        %2927 = vmatpush1.msra.mxu0 0.0
        %2928 = vmatprep.subr.mxu0 0.0
        %2929 = vmatpush1.msra.mxu0 0.0
        %2930 = vmatprep.subr.mxu0 0.0
        %2931 = vmatpush1.msra.mxu0 0.0
        %2932 = vmatprep.subr.mxu0 0.0
        %2933 = vmatpush1.msra.mxu0 0.0
        %2934 = vmatprep.subr.mxu0 0.0
        %2935 = vmatpush1.msra.mxu0 0.0
        %2936 = vmatprep.subr.mxu0 0.0
        %2937 = vmatpush1.msra.mxu0 0.0
        %2938 = vmatprep.subr.mxu0 0.0
        %2939 = vmatpush1.msra.mxu0 0.0
        %2940 = vmatprep.subr.mxu0 0.0
        %2941 = vmatpush1.msra.mxu0 0.0
        %2942 = vmatprep.subr.mxu0 0.0
        %2943 = vmatpush1.msra.mxu0 0.0
        %2944 = vmatprep.mubr.f32.mxu0 0.0
        %2945 = vmatmul.mubr.f32.gmra.mrb[0].mxu0 %v2872
        %v2946 = vpop.f32.mrb[0].mxu0
        %v2947 = vadd.f32 0.0, %v2946
        %v2948 = vpop.f32.mrb[0].mxu0
        %2949 = vmatprep.mubr.f32.mxu0 0.0
        %2950 = vmatmul.mubr.f32.gmra.mrb[0].mxu0 %v2875
        %v2951 = vpop.f32.mrb[0].mxu0
        %v2952 = vadd.f32 0.0, %v2951
        %v2953 = vpop.f32.mrb[0].mxu0
        %2954 = vmatprep.mubr.f32.mxu0 0.0
        %2955 = vmatmul.mubr.f32.gmra.mrb[0].mxu0 %v2878
        %v2956 = vpop.f32.mrb[0].mxu0
        %v2957 = vadd.f32 0.0, %v2956
        %v2958 = vpop.f32.mrb[0].mxu0
        %2959 = vdwg.mxu0
        %v2960 = vadd.f32 %v2351, %v2947
        %v2961 = vadd.f32 %v2356, %v2952
        %v2962 = vadd.f32 %v2361, %v2957
        %s2963 = scalar_lea.vmem %s936, 96
        %v2964 = vld [vmem:[%s2963] sm:$0xff]
        %v2965 = vld [vmem:[%s2963 + $0x8] sm:$0xff]
        %v2966 = vld [vmem:[%s2963 + $0x10] sm:$0xff]
        %v2967 = vld [vmem:[%s2963 + $0x18] sm:$0xff]
        %s2968 = scalar_lea.vmem %s950, 3
        %v2969 = vld [vmem:[%s2968] sm:$0x1]
        %v2971 = vlaneseq
        %v2972 = vshrl.u32 %v2971, 7
        %v2973 = vsub.s32 0, %v2972
        %v2974 = vrot.slane %v2969, %v2973
        %2976 = vmatprep.subr.mxu0 0.0
        %2977 = vmatpush1.msra.mxu0 %v2964
        %2978 = vmatprep.subr.mxu0 0.0
        %2979 = vmatpush1.msra.mxu0 %v2965
        %2980 = vmatprep.subr.mxu0 0.0
        %2981 = vmatpush1.msra.mxu0 %v2966
        %2982 = vmatprep.subr.mxu0 0.0
        %2983 = vmatpush1.msra.mxu0 %v2967
        %2984 = vmatprep.subr.mxu0 0.0
        %2985 = vmatpush1.msra.mxu0 0.0
        %2986 = vmatprep.subr.mxu0 0.0
        %2987 = vmatpush1.msra.mxu0 0.0
        %2988 = vmatprep.subr.mxu0 0.0
        %2989 = vmatpush1.msra.mxu0 0.0
        %2990 = vmatprep.subr.mxu0 0.0
        %2991 = vmatpush1.msra.mxu0 0.0
        %2992 = vmatprep.subr.mxu0 0.0
        %2993 = vmatpush1.msra.mxu0 0.0
        %2994 = vmatprep.subr.mxu0 0.0
        %2995 = vmatpush1.msra.mxu0 0.0
        %2996 = vmatprep.subr.mxu0 0.0
        %2997 = vmatpush1.msra.mxu0 0.0
        %2998 = vmatprep.subr.mxu0 0.0
        %2999 = vmatpush1.msra.mxu0 0.0
        %3000 = vmatprep.subr.mxu0 0.0
        %3001 = vmatpush1.msra.mxu0 0.0
        %3002 = vmatprep.subr.mxu0 0.0
        %3003 = vmatpush1.msra.mxu0 0.0
        %3004 = vmatprep.subr.mxu0 0.0
        %3005 = vmatpush1.msra.mxu0 0.0
        %3006 = vmatprep.subr.mxu0 0.0
        %3007 = vmatpush1.msra.mxu0 0.0
        %3008 = vmatprep.subr.mxu0 0.0
        %3009 = vmatpush1.msra.mxu0 0.0
        %3010 = vmatprep.subr.mxu0 0.0
        %3011 = vmatpush1.msra.mxu0 0.0
        %3012 = vmatprep.subr.mxu0 0.0
        %3013 = vmatpush1.msra.mxu0 0.0
        %3014 = vmatprep.subr.mxu0 0.0
        %3015 = vmatpush1.msra.mxu0 0.0
        %3016 = vmatprep.subr.mxu0 0.0
        %3017 = vmatpush1.msra.mxu0 0.0
        %3018 = vmatprep.subr.mxu0 0.0
        %3019 = vmatpush1.msra.mxu0 0.0
        %3020 = vmatprep.subr.mxu0 0.0
        %3021 = vmatpush1.msra.mxu0 0.0
        %3022 = vmatprep.subr.mxu0 0.0
        %3023 = vmatpush1.msra.mxu0 0.0
        %3024 = vmatprep.subr.mxu0 0.0
        %3025 = vmatpush1.msra.mxu0 0.0
        %3026 = vmatprep.subr.mxu0 0.0
        %3027 = vmatpush1.msra.mxu0 0.0
        %3028 = vmatprep.subr.mxu0 0.0
        %3029 = vmatpush1.msra.mxu0 0.0
        %3030 = vmatprep.subr.mxu0 0.0
        %3031 = vmatpush1.msra.mxu0 0.0
        %3032 = vmatprep.subr.mxu0 0.0
        %3033 = vmatpush1.msra.mxu0 0.0
        %3034 = vmatprep.subr.mxu0 0.0
        %3035 = vmatpush1.msra.mxu0 0.0
        %3036 = vmatprep.subr.mxu0 0.0
        %3037 = vmatpush1.msra.mxu0 0.0
        %3038 = vmatprep.subr.mxu0 0.0
        %3039 = vmatpush1.msra.mxu0 0.0
        %3040 = vmatprep.mubr.f32.mxu0 0.0
        %3041 = vmatmul.mubr.f32.gmra.mrb[0].mxu0 %v1180
        %v3042 = vpop.f32.mrb[0].mxu0
        %v3043 = vadd.f32 %v2974, %v3042
        %v3044 = vpop.f32.mrb[0].mxu0
        %3045 = vmatprep.mubr.f32.mxu0 0.0
        %3046 = vmatmul.mubr.f32.gmra.mrb[0].mxu0 %v1183
        %v3047 = vpop.f32.mrb[0].mxu0
        %v3048 = vadd.f32 %v2974, %v3047
        %v3049 = vpop.f32.mrb[0].mxu0
        %3050 = vmatprep.mubr.f32.mxu0 0.0
        %3051 = vmatmul.mubr.f32.gmra.mrb[0].mxu0 %v1186
        %v3052 = vpop.f32.mrb[0].mxu0
        %v3053 = vadd.f32 %v2974, %v3052
        %v3054 = vpop.f32.mrb[0].mxu0
        %3055 = vdwg.mxu0
        %s3056 = scalar_lea.vmem %s941, 96
        %v3057 = vld [vmem:[%s3056] sm:$0xff]
        %v3058 = vld [vmem:[%s3056 + $0x8] sm:$0xff]
        %v3059 = vld [vmem:[%s3056 + $0x10] sm:$0xff]
        %v3060 = vld [vmem:[%s3056 + $0x18] sm:$0xff]
        %s3061 = scalar_lea.vmem %s954, 3
        %v3062 = vld [vmem:[%s3061] sm:$0x1]
        %v3064 = vlaneseq
        %v3065 = vshrl.u32 %v3064, 7
        %v3066 = vsub.s32 0, %v3065
        %v3067 = vrot.slane %v3062, %v3066
        %3069 = vmatprep.subr.mxu0 0.0
        %3070 = vmatpush1.msra.mxu0 %v3057
        %3071 = vmatprep.subr.mxu0 0.0
        %3072 = vmatpush1.msra.mxu0 %v3058
        %3073 = vmatprep.subr.mxu0 0.0
        %3074 = vmatpush1.msra.mxu0 %v3059
        %3075 = vmatprep.subr.mxu0 0.0
        %3076 = vmatpush1.msra.mxu0 %v3060
        %3077 = vmatprep.subr.mxu0 0.0
        %3078 = vmatpush1.msra.mxu0 0.0
        %3079 = vmatprep.subr.mxu0 0.0
        %3080 = vmatpush1.msra.mxu0 0.0
        %3081 = vmatprep.subr.mxu0 0.0
        %3082 = vmatpush1.msra.mxu0 0.0
        %3083 = vmatprep.subr.mxu0 0.0
        %3084 = vmatpush1.msra.mxu0 0.0
        %3085 = vmatprep.subr.mxu0 0.0
        %3086 = vmatpush1.msra.mxu0 0.0
        %3087 = vmatprep.subr.mxu0 0.0
        %3088 = vmatpush1.msra.mxu0 0.0
        %3089 = vmatprep.subr.mxu0 0.0
        %3090 = vmatpush1.msra.mxu0 0.0
        %3091 = vmatprep.subr.mxu0 0.0
        %3092 = vmatpush1.msra.mxu0 0.0
        %3093 = vmatprep.subr.mxu0 0.0
        %3094 = vmatpush1.msra.mxu0 0.0
        %3095 = vmatprep.subr.mxu0 0.0
        %3096 = vmatpush1.msra.mxu0 0.0
        %3097 = vmatprep.subr.mxu0 0.0
        %3098 = vmatpush1.msra.mxu0 0.0
        %3099 = vmatprep.subr.mxu0 0.0
        %3100 = vmatpush1.msra.mxu0 0.0
        %3101 = vmatprep.subr.mxu0 0.0
        %3102 = vmatpush1.msra.mxu0 0.0
        %3103 = vmatprep.subr.mxu0 0.0
        %3104 = vmatpush1.msra.mxu0 0.0
        %3105 = vmatprep.subr.mxu0 0.0
        %3106 = vmatpush1.msra.mxu0 0.0
        %3107 = vmatprep.subr.mxu0 0.0
        %3108 = vmatpush1.msra.mxu0 0.0
        %3109 = vmatprep.subr.mxu0 0.0
        %3110 = vmatpush1.msra.mxu0 0.0
        %3111 = vmatprep.subr.mxu0 0.0
        %3112 = vmatpush1.msra.mxu0 0.0
        %3113 = vmatprep.subr.mxu0 0.0
        %3114 = vmatpush1.msra.mxu0 0.0
        %3115 = vmatprep.subr.mxu0 0.0
        %3116 = vmatpush1.msra.mxu0 0.0
        %3117 = vmatprep.subr.mxu0 0.0
        %3118 = vmatpush1.msra.mxu0 0.0
        %3119 = vmatprep.subr.mxu0 0.0
        %3120 = vmatpush1.msra.mxu0 0.0
        %3121 = vmatprep.subr.mxu0 0.0
        %3122 = vmatpush1.msra.mxu0 0.0
        %3123 = vmatprep.subr.mxu0 0.0
        %3124 = vmatpush1.msra.mxu0 0.0
        %3125 = vmatprep.subr.mxu0 0.0
        %3126 = vmatpush1.msra.mxu0 0.0
        %3127 = vmatprep.subr.mxu0 0.0
        %3128 = vmatpush1.msra.mxu0 0.0
        %3129 = vmatprep.subr.mxu0 0.0
        %3130 = vmatpush1.msra.mxu0 0.0
        %3131 = vmatprep.subr.mxu0 0.0
        %3132 = vmatpush1.msra.mxu0 0.0
        %3133 = vmatprep.mubr.f32.mxu0 0.0
        %3134 = vmatmul.mubr.f32.gmra.mrb[0].mxu0 %v1180
        %v3135 = vpop.f32.mrb[0].mxu0
        %v3136 = vadd.f32 %v3067, %v3135
        %v3137 = vpop.f32.mrb[0].mxu0
        %3138 = vmatprep.mubr.f32.mxu0 0.0
        %3139 = vmatmul.mubr.f32.gmra.mrb[0].mxu0 %v1183
        %v3140 = vpop.f32.mrb[0].mxu0
        %v3141 = vadd.f32 %v3067, %v3140
        %v3142 = vpop.f32.mrb[0].mxu0
        %3143 = vmatprep.mubr.f32.mxu0 0.0
        %3144 = vmatmul.mubr.f32.gmra.mrb[0].mxu0 %v1186
        %v3145 = vpop.f32.mrb[0].mxu0
        %v3146 = vadd.f32 %v3067, %v3145
        %v3147 = vpop.f32.mrb[0].mxu0
        %3148 = vdwg.mxu0
        %s3149 = scalar_lea.vmem %s946, 96
        %v3150 = vld [vmem:[%s3149] sm:$0xff]
        %v3151 = vld [vmem:[%s3149 + $0x8] sm:$0xff]
        %v3152 = vld [vmem:[%s3149 + $0x10] sm:$0xff]
        %v3153 = vld [vmem:[%s3149 + $0x18] sm:$0xff]
        %s3154 = scalar_lea.vmem %s958, 3
        %v3155 = vld [vmem:[%s3154] sm:$0x1]
        %v3157 = vlaneseq
        %v3158 = vshrl.u32 %v3157, 7
        %v3159 = vsub.s32 0, %v3158
        %v3160 = vrot.slane %v3155, %v3159
        %3162 = vmatprep.subr.mxu0 0.0
        %3163 = vmatpush1.msra.mxu0 %v3150
        %3164 = vmatprep.subr.mxu0 0.0
        %3165 = vmatpush1.msra.mxu0 %v3151
        %3166 = vmatprep.subr.mxu0 0.0
        %3167 = vmatpush1.msra.mxu0 %v3152
        %3168 = vmatprep.subr.mxu0 0.0
        %3169 = vmatpush1.msra.mxu0 %v3153
        %3170 = vmatprep.subr.mxu0 0.0
        %3171 = vmatpush1.msra.mxu0 0.0
        %3172 = vmatprep.subr.mxu0 0.0
        %3173 = vmatpush1.msra.mxu0 0.0
        %3174 = vmatprep.subr.mxu0 0.0
        %3175 = vmatpush1.msra.mxu0 0.0
        %3176 = vmatprep.subr.mxu0 0.0
        %3177 = vmatpush1.msra.mxu0 0.0
        %3178 = vmatprep.subr.mxu0 0.0
        %3179 = vmatpush1.msra.mxu0 0.0
        %3180 = vmatprep.subr.mxu0 0.0
        %3181 = vmatpush1.msra.mxu0 0.0
        %3182 = vmatprep.subr.mxu0 0.0
        %3183 = vmatpush1.msra.mxu0 0.0
        %3184 = vmatprep.subr.mxu0 0.0
        %3185 = vmatpush1.msra.mxu0 0.0
        %3186 = vmatprep.subr.mxu0 0.0
        %3187 = vmatpush1.msra.mxu0 0.0
        %3188 = vmatprep.subr.mxu0 0.0
        %3189 = vmatpush1.msra.mxu0 0.0
        %3190 = vmatprep.subr.mxu0 0.0
        %3191 = vmatpush1.msra.mxu0 0.0
        %3192 = vmatprep.subr.mxu0 0.0
        %3193 = vmatpush1.msra.mxu0 0.0
        %3194 = vmatprep.subr.mxu0 0.0
        %3195 = vmatpush1.msra.mxu0 0.0
        %3196 = vmatprep.subr.mxu0 0.0
        %3197 = vmatpush1.msra.mxu0 0.0
        %3198 = vmatprep.subr.mxu0 0.0
        %3199 = vmatpush1.msra.mxu0 0.0
        %3200 = vmatprep.subr.mxu0 0.0
        %3201 = vmatpush1.msra.mxu0 0.0
        %3202 = vmatprep.subr.mxu0 0.0
        %3203 = vmatpush1.msra.mxu0 0.0
        %3204 = vmatprep.subr.mxu0 0.0
        %3205 = vmatpush1.msra.mxu0 0.0
        %3206 = vmatprep.subr.mxu0 0.0
        %3207 = vmatpush1.msra.mxu0 0.0
        %3208 = vmatprep.subr.mxu0 0.0
        %3209 = vmatpush1.msra.mxu0 0.0
        %3210 = vmatprep.subr.mxu0 0.0
        %3211 = vmatpush1.msra.mxu0 0.0
        %3212 = vmatprep.subr.mxu0 0.0
        %3213 = vmatpush1.msra.mxu0 0.0
        %3214 = vmatprep.subr.mxu0 0.0
        %3215 = vmatpush1.msra.mxu0 0.0
        %3216 = vmatprep.subr.mxu0 0.0
        %3217 = vmatpush1.msra.mxu0 0.0
        %3218 = vmatprep.subr.mxu0 0.0
        %3219 = vmatpush1.msra.mxu0 0.0
        %3220 = vmatprep.subr.mxu0 0.0
        %3221 = vmatpush1.msra.mxu0 0.0
        %3222 = vmatprep.subr.mxu0 0.0
        %3223 = vmatpush1.msra.mxu0 0.0
        %3224 = vmatprep.subr.mxu0 0.0
        %3225 = vmatpush1.msra.mxu0 0.0
        %3226 = vmatprep.mubr.f32.mxu0 0.0
        %3227 = vmatmul.mubr.f32.gmra.mrb[0].mxu0 %v1180
        %v3228 = vpop.f32.mrb[0].mxu0
        %v3229 = vadd.f32 %v3160, %v3228
        %v3230 = vpop.f32.mrb[0].mxu0
        %3231 = vmatprep.mubr.f32.mxu0 0.0
        %3232 = vmatmul.mubr.f32.gmra.mrb[0].mxu0 %v1183
        %v3233 = vpop.f32.mrb[0].mxu0
        %v3234 = vadd.f32 %v3160, %v3233
        %v3235 = vpop.f32.mrb[0].mxu0
        %3236 = vmatprep.mubr.f32.mxu0 0.0
        %3237 = vmatmul.mubr.f32.gmra.mrb[0].mxu0 %v1186
        %v3238 = vpop.f32.mrb[0].mxu0
        %v3239 = vadd.f32 %v3160, %v3238
        %v3240 = vpop.f32.mrb[0].mxu0
        %3241 = vdwg.mxu0
        %v3243 = vsel %vm1450, %v3043, 0
        %v3246 = vsel %vm1450, %v3048, 0
        %v3249 = vsel %vm1450, %v3053, 0
        %v3252 = vsel %vm1450, %v3136, 0
        %v3255 = vsel %vm1450, %v3141, 0
        %v3258 = vsel %vm1450, %v3146, 0
        %3260 = vmatprep.subr.mxu0 0.0
        %3261 = vmatpush1.xpose.msra.mxu0 %v3252
        %3262 = vmatprep.subr.mxu0 0.0
        %3263 = vmatpush1.xpose.msra.mxu0 %v3255
        %3264 = vmatprep.subr.mxu0 0.0
        %3265 = vmatpush1.xpose.msra.mxu0 %v3258
        %3266 = vmatprep.subr.mxu0 0.0
        %3267 = vmatpush1.xpose.msra.mxu0 0.0
        %3268 = vmatprep.subr.mxu0 0.0
        %3269 = vmatpush1.xpose.msra.mxu0 0.0
        %3270 = vmatprep.subr.mxu0 0.0
        %3271 = vmatpush1.xpose.msra.mxu0 0.0
        %3272 = vmatprep.subr.mxu0 0.0
        %3273 = vmatpush1.xpose.msra.mxu0 0.0
        %3274 = vmatprep.subr.mxu0 0.0
        %3275 = vmatpush1.xpose.msra.mxu0 0.0
        %3276 = vmatprep.subr.mxu0 0.0
        %3277 = vmatpush1.xpose.msra.mxu0 0.0
        %3278 = vmatprep.subr.mxu0 0.0
        %3279 = vmatpush1.xpose.msra.mxu0 0.0
        %3280 = vmatprep.subr.mxu0 0.0
        %3281 = vmatpush1.xpose.msra.mxu0 0.0
        %3282 = vmatprep.subr.mxu0 0.0
        %3283 = vmatpush1.xpose.msra.mxu0 0.0
        %3284 = vmatprep.subr.mxu0 0.0
        %3285 = vmatpush1.xpose.msra.mxu0 0.0
        %3286 = vmatprep.subr.mxu0 0.0
        %3287 = vmatpush1.xpose.msra.mxu0 0.0
        %3288 = vmatprep.subr.mxu0 0.0
        %3289 = vmatpush1.xpose.msra.mxu0 0.0
        %3290 = vmatprep.subr.mxu0 0.0
        %3291 = vmatpush1.xpose.msra.mxu0 0.0
        %3292 = vmatprep.subr.mxu0 0.0
        %3293 = vmatpush1.xpose.msra.mxu0 0.0
        %3294 = vmatprep.subr.mxu0 0.0
        %3295 = vmatpush1.xpose.msra.mxu0 0.0
        %3296 = vmatprep.subr.mxu0 0.0
        %3297 = vmatpush1.xpose.msra.mxu0 0.0
        %3298 = vmatprep.subr.mxu0 0.0
        %3299 = vmatpush1.xpose.msra.mxu0 0.0
        %3300 = vmatprep.subr.mxu0 0.0
        %3301 = vmatpush1.xpose.msra.mxu0 0.0
        %3302 = vmatprep.subr.mxu0 0.0
        %3303 = vmatpush1.xpose.msra.mxu0 0.0
        %3304 = vmatprep.subr.mxu0 0.0
        %3305 = vmatpush1.xpose.msra.mxu0 0.0
        %3306 = vmatprep.subr.mxu0 0.0
        %3307 = vmatpush1.xpose.msra.mxu0 0.0
        %3308 = vmatprep.subr.mxu0 0.0
        %3309 = vmatpush1.xpose.msra.mxu0 0.0
        %3310 = vmatprep.subr.mxu0 0.0
        %3311 = vmatpush1.xpose.msra.mxu0 0.0
        %3312 = vmatprep.subr.mxu0 0.0
        %3313 = vmatpush1.xpose.msra.mxu0 0.0
        %3314 = vmatprep.subr.mxu0 0.0
        %3315 = vmatpush1.xpose.msra.mxu0 0.0
        %3316 = vmatprep.subr.mxu0 0.0
        %3317 = vmatpush1.xpose.msra.mxu0 0.0
        %3318 = vmatprep.subr.mxu0 0.0
        %3319 = vmatpush1.xpose.msra.mxu0 0.0
        %3320 = vmatprep.subr.mxu0 0.0
        %3321 = vmatpush1.xpose.msra.mxu0 0.0
        %3322 = vmatprep.subr.mxu0 0.0
        %3323 = vmatpush1.xpose.msra.mxu0 0.0
        %3324 = vmatprep.mubr.f32.mxu0 0.0
        %3325 = vmatmul.mubr.f32.gmra.mrb[0].mxu0 %v3243
        %v3326 = vpop.f32.mrb[0].mxu0
        %v3327 = vadd.f32 0.0, %v3326
        %v3328 = vpop.f32.mrb[0].mxu0
        %3329 = vmatprep.mubr.f32.mxu0 0.0
        %3330 = vmatmul.mubr.f32.gmra.mrb[0].mxu0 %v3246
        %v3331 = vpop.f32.mrb[0].mxu0
        %v3332 = vadd.f32 0.0, %v3331
        %v3333 = vpop.f32.mrb[0].mxu0
        %3334 = vmatprep.mubr.f32.mxu0 0.0
        %3335 = vmatmul.mubr.f32.gmra.mrb[0].mxu0 %v3249
        %v3336 = vpop.f32.mrb[0].mxu0
        %v3337 = vadd.f32 0.0, %v3336
        %v3338 = vpop.f32.mrb[0].mxu0
        %3339 = vdwg.mxu0
        %v3340 = vmul.f32 %v3327, 0.35355338
        %v3341 = vmul.f32 %v3332, 0.35355338
        %v3342 = vmul.f32 %v3337, 0.35355338
        %v3343 = vsel %vm1167, %v3340, -1e+30
        %v3344 = vsel %vm1167, %v3341, -1e+30
        %v3345 = vsel %vm1167, %v3342, -1e+30
        %v3346 = vsel %vm1555, %v3343, -inf
        %3347 = vmax.xlane.f32.xlu0 %v3346
        %v3348 = vpop.xlane.xlu0 %3347
        %v3349 = vsel %vm1555, %v3344, -inf
        %3350 = vmax.xlane.f32.xlu0 %v3349
        %v3351 = vpop.xlane.xlu0 %3350
        %v3352 = vsel %vm1555, %v3345, -inf
        %3353 = vmax.xlane.f32.xlu0 %v3352
        %v3354 = vpop.xlane.xlu0 %3353
        %v3355 = vsub.f32 %v3343, %v3348
        %v3356 = vsub.f32 %v3344, %v3351
        %v3357 = vsub.f32 %v3345, %v3354
        %v3358 = vmul.f32 %v3355, 1.442695
        %v3359 = vpow.pop %v3358
        %v3360 = vmul.f32 %v3356, 1.442695
        %v3361 = vpow.pop %v3360
        %v3362 = vmul.f32 %v3357, 1.442695
        %v3363 = vpow.pop %v3362
        %v3364 = vsel %vm1555, %v3359, 0.0
        %3365 = vadd.xlane.f32.xlu0 %v3364
        %v3366 = vpop.xlane.xlu0 %3365
        %v3367 = vsel %vm1555, %v3361, 0.0
        %3368 = vadd.xlane.f32.xlu0 %v3367
        %v3369 = vpop.xlane.xlu0 %3368
        %v3370 = vsel %vm1555, %v3363, 0.0
        %3371 = vadd.xlane.f32.xlu0 %v3370
        %v3372 = vpop.xlane.xlu0 %3371
        %v3373 = vrcp.pop %v3366
        %v3374 = vrcp.pop %v3369
        %v3375 = vrcp.pop %v3372
        %v3376 = vmul.f32 %v3359, %v3373
        %v3377 = vmul.f32 %v3361, %v3374
        %v3378 = vmul.f32 %v3363, %v3375
        %v3380 = vsel %vm1555, %v3376, 0
        %v3383 = vsel %vm1555, %v3377, 0
        %v3386 = vsel %vm1555, %v3378, 0
        %3388 = vmatprep.subr.mxu0 0.0
        %3389 = vmatpush1.msra.mxu0 %v3229
        %3390 = vmatprep.subr.mxu0 0.0
        %3391 = vmatpush1.msra.mxu0 %v3234
        %3392 = vmatprep.subr.mxu0 0.0
        %3393 = vmatpush1.msra.mxu0 %v3239
        %3394 = vmatprep.subr.mxu0 0.0
        %3395 = vmatpush1.msra.mxu0 0.0
        %3396 = vmatprep.subr.mxu0 0.0
        %3397 = vmatpush1.msra.mxu0 0.0
        %3398 = vmatprep.subr.mxu0 0.0
        %3399 = vmatpush1.msra.mxu0 0.0
        %3400 = vmatprep.subr.mxu0 0.0
        %3401 = vmatpush1.msra.mxu0 0.0
        %3402 = vmatprep.subr.mxu0 0.0
        %3403 = vmatpush1.msra.mxu0 0.0
        %3404 = vmatprep.subr.mxu0 0.0
        %3405 = vmatpush1.msra.mxu0 0.0
        %3406 = vmatprep.subr.mxu0 0.0
        %3407 = vmatpush1.msra.mxu0 0.0
        %3408 = vmatprep.subr.mxu0 0.0
        %3409 = vmatpush1.msra.mxu0 0.0
        %3410 = vmatprep.subr.mxu0 0.0
        %3411 = vmatpush1.msra.mxu0 0.0
        %3412 = vmatprep.subr.mxu0 0.0
        %3413 = vmatpush1.msra.mxu0 0.0
        %3414 = vmatprep.subr.mxu0 0.0
        %3415 = vmatpush1.msra.mxu0 0.0
        %3416 = vmatprep.subr.mxu0 0.0
        %3417 = vmatpush1.msra.mxu0 0.0
        %3418 = vmatprep.subr.mxu0 0.0
        %3419 = vmatpush1.msra.mxu0 0.0
        %3420 = vmatprep.subr.mxu0 0.0
        %3421 = vmatpush1.msra.mxu0 0.0
        %3422 = vmatprep.subr.mxu0 0.0
        %3423 = vmatpush1.msra.mxu0 0.0
        %3424 = vmatprep.subr.mxu0 0.0
        %3425 = vmatpush1.msra.mxu0 0.0
        %3426 = vmatprep.subr.mxu0 0.0
        %3427 = vmatpush1.msra.mxu0 0.0
        %3428 = vmatprep.subr.mxu0 0.0
        %3429 = vmatpush1.msra.mxu0 0.0
        %3430 = vmatprep.subr.mxu0 0.0
        %3431 = vmatpush1.msra.mxu0 0.0
        %3432 = vmatprep.subr.mxu0 0.0
        %3433 = vmatpush1.msra.mxu0 0.0
        %3434 = vmatprep.subr.mxu0 0.0
        %3435 = vmatpush1.msra.mxu0 0.0
        %3436 = vmatprep.subr.mxu0 0.0
        %3437 = vmatpush1.msra.mxu0 0.0
        %3438 = vmatprep.subr.mxu0 0.0
        %3439 = vmatpush1.msra.mxu0 0.0
        %3440 = vmatprep.subr.mxu0 0.0
        %3441 = vmatpush1.msra.mxu0 0.0
        %3442 = vmatprep.subr.mxu0 0.0
        %3443 = vmatpush1.msra.mxu0 0.0
        %3444 = vmatprep.subr.mxu0 0.0
        %3445 = vmatpush1.msra.mxu0 0.0
        %3446 = vmatprep.subr.mxu0 0.0
        %3447 = vmatpush1.msra.mxu0 0.0
        %3448 = vmatprep.subr.mxu0 0.0
        %3449 = vmatpush1.msra.mxu0 0.0
        %3450 = vmatprep.subr.mxu0 0.0
        %3451 = vmatpush1.msra.mxu0 0.0
        %3452 = vmatprep.mubr.f32.mxu0 0.0
        %3453 = vmatmul.mubr.f32.gmra.mrb[0].mxu0 %v3380
        %v3454 = vpop.f32.mrb[0].mxu0
        %v3455 = vadd.f32 0.0, %v3454
        %v3456 = vpop.f32.mrb[0].mxu0
        %3457 = vmatprep.mubr.f32.mxu0 0.0
        %3458 = vmatmul.mubr.f32.gmra.mrb[0].mxu0 %v3383
        %v3459 = vpop.f32.mrb[0].mxu0
        %v3460 = vadd.f32 0.0, %v3459
        %v3461 = vpop.f32.mrb[0].mxu0
        %3462 = vmatprep.mubr.f32.mxu0 0.0
        %3463 = vmatmul.mubr.f32.gmra.mrb[0].mxu0 %v3386
        %v3464 = vpop.f32.mrb[0].mxu0
        %v3465 = vadd.f32 0.0, %v3464
        %v3466 = vpop.f32.mrb[0].mxu0
        %3467 = vdwg.mxu0
        %s3468 = scalar_lea.vmem %s963, 24
        %v3469 = vld [vmem:[%s3468] sm:$0xff]
        %v3471 = vsel %vm1450, %v3455, 0
        %v3474 = vsel %vm1450, %v3460, 0
        %v3477 = vsel %vm1450, %v3465, 0
        %3479 = vmatprep.subr.mxu0 0.0
        %3480 = vmatpush1.msra.mxu0 %v3469
        %3481 = vmatprep.subr.mxu0 0.0
        %3482 = vmatpush1.msra.mxu0 0.0
        %3483 = vmatprep.subr.mxu0 0.0
        %3484 = vmatpush1.msra.mxu0 0.0
        %3485 = vmatprep.subr.mxu0 0.0
        %3486 = vmatpush1.msra.mxu0 0.0
        %3487 = vmatprep.subr.mxu0 0.0
        %3488 = vmatpush1.msra.mxu0 0.0
        %3489 = vmatprep.subr.mxu0 0.0
        %3490 = vmatpush1.msra.mxu0 0.0
        %3491 = vmatprep.subr.mxu0 0.0
        %3492 = vmatpush1.msra.mxu0 0.0
        %3493 = vmatprep.subr.mxu0 0.0
        %3494 = vmatpush1.msra.mxu0 0.0
        %3495 = vmatprep.subr.mxu0 0.0
        %3496 = vmatpush1.msra.mxu0 0.0
        %3497 = vmatprep.subr.mxu0 0.0
        %3498 = vmatpush1.msra.mxu0 0.0
        %3499 = vmatprep.subr.mxu0 0.0
        %3500 = vmatpush1.msra.mxu0 0.0
        %3501 = vmatprep.subr.mxu0 0.0
        %3502 = vmatpush1.msra.mxu0 0.0
        %3503 = vmatprep.subr.mxu0 0.0
        %3504 = vmatpush1.msra.mxu0 0.0
        %3505 = vmatprep.subr.mxu0 0.0
        %3506 = vmatpush1.msra.mxu0 0.0
        %3507 = vmatprep.subr.mxu0 0.0
        %3508 = vmatpush1.msra.mxu0 0.0
        %3509 = vmatprep.subr.mxu0 0.0
        %3510 = vmatpush1.msra.mxu0 0.0
        %3511 = vmatprep.subr.mxu0 0.0
        %3512 = vmatpush1.msra.mxu0 0.0
        %3513 = vmatprep.subr.mxu0 0.0
        %3514 = vmatpush1.msra.mxu0 0.0
        %3515 = vmatprep.subr.mxu0 0.0
        %3516 = vmatpush1.msra.mxu0 0.0
        %3517 = vmatprep.subr.mxu0 0.0
        %3518 = vmatpush1.msra.mxu0 0.0
        %3519 = vmatprep.subr.mxu0 0.0
        %3520 = vmatpush1.msra.mxu0 0.0
        %3521 = vmatprep.subr.mxu0 0.0
        %3522 = vmatpush1.msra.mxu0 0.0
        %3523 = vmatprep.subr.mxu0 0.0
        %3524 = vmatpush1.msra.mxu0 0.0
        %3525 = vmatprep.subr.mxu0 0.0
        %3526 = vmatpush1.msra.mxu0 0.0
        %3527 = vmatprep.subr.mxu0 0.0
        %3528 = vmatpush1.msra.mxu0 0.0
        %3529 = vmatprep.subr.mxu0 0.0
        %3530 = vmatpush1.msra.mxu0 0.0
        %3531 = vmatprep.subr.mxu0 0.0
        %3532 = vmatpush1.msra.mxu0 0.0
        %3533 = vmatprep.subr.mxu0 0.0
        %3534 = vmatpush1.msra.mxu0 0.0
        %3535 = vmatprep.subr.mxu0 0.0
        %3536 = vmatpush1.msra.mxu0 0.0
        %3537 = vmatprep.subr.mxu0 0.0
        %3538 = vmatpush1.msra.mxu0 0.0
        %3539 = vmatprep.subr.mxu0 0.0
        %3540 = vmatpush1.msra.mxu0 0.0
        %3541 = vmatprep.subr.mxu0 0.0
        %3542 = vmatpush1.msra.mxu0 0.0
        %3543 = vmatprep.mubr.f32.mxu0 0.0
        %3544 = vmatmul.mubr.f32.gmra.mrb[0].mxu0 %v3471
        %v3545 = vpop.f32.mrb[0].mxu0
        %v3546 = vadd.f32 0.0, %v3545
        %v3547 = vpop.f32.mrb[0].mxu0
        %3548 = vmatprep.mubr.f32.mxu0 0.0
        %3549 = vmatmul.mubr.f32.gmra.mrb[0].mxu0 %v3474
        %v3550 = vpop.f32.mrb[0].mxu0
        %v3551 = vadd.f32 0.0, %v3550
        %v3552 = vpop.f32.mrb[0].mxu0
        %3553 = vmatprep.mubr.f32.mxu0 0.0
        %3554 = vmatmul.mubr.f32.gmra.mrb[0].mxu0 %v3477
        %v3555 = vpop.f32.mrb[0].mxu0
        %v3556 = vadd.f32 0.0, %v3555
        %v3557 = vpop.f32.mrb[0].mxu0
        %3558 = vdwg.mxu0
        %v3559 = vadd.f32 %v2960, %v3546
        %v3560 = vadd.f32 %v2961, %v3551
        %v3561 = vadd.f32 %v2962, %v3556
        %v3562 = vadd.f32 %v1101, %v3559
        %v3563 = vadd.f32 %v1102, %v3560
        %v3564 = vadd.f32 %v1103, %v3561
        %v3565 = vld [vmem:[%s966] sm:$0x1]
        %v3567 = vlaneseq
        %v3568 = vshrl.u32 %v3567, 7
        %v3569 = vsub.s32 0, %v3568
        %v3570 = vrot.slane %v3565, %v3569
        %v3572 = vadd.f32 %v3562, %v3570
        %v3573 = vadd.f32 %v3563, %v3570
        %v3574 = vadd.f32 %v3564, %v3570
        %v3575 = vld [vmem:[%s969] sm:$0x1]
        %v3576 = vld [vmem:[%s972] sm:$0x1]
        %v3577 = vsel %vm1106, %v3572, 0.0
        %3578 = vadd.xlane.f32.xlu0 %v3577
        %v3579 = vpop.xlane.xlu0 %3578
        %v3580 = vsel %vm1106, %v3573, 0.0
        %3581 = vadd.xlane.f32.xlu0 %v3580
        %v3582 = vpop.xlane.xlu0 %3581
        %v3583 = vsel %vm1106, %v3574, 0.0
        %3584 = vadd.xlane.f32.xlu0 %v3583
        %v3585 = vpop.xlane.xlu0 %3584
        %v3586 = vmul.f32 %v3579, %v1116
        %v3587 = vmul.f32 %v3582, %v1116
        %v3588 = vmul.f32 %v3585, %v1116
        %v3589 = vsub.f32 %v3572, %v3586
        %v3590 = vsub.f32 %v3573, %v3587
        %v3591 = vsub.f32 %v3574, %v3588
        %v3592 = vmul.f32 %v3589, %v3589
        %v3593 = vmul.f32 %v3590, %v3590
        %v3594 = vmul.f32 %v3591, %v3591
        %v3595 = vsel %vm1106, %v3592, 0.0
        %3596 = vadd.xlane.f32.xlu0 %v3595
        %v3597 = vpop.xlane.xlu0 %3596
        %v3598 = vsel %vm1106, %v3593, 0.0
        %3599 = vadd.xlane.f32.xlu0 %v3598
        %v3600 = vpop.xlane.xlu0 %3599
        %v3601 = vsel %vm1106, %v3594, 0.0
        %3602 = vadd.xlane.f32.xlu0 %v3601
        %v3603 = vpop.xlane.xlu0 %3602
        %v3604 = vmul.f32 %v3597, %v1116
        %v3605 = vmul.f32 %v3600, %v1116
        %v3606 = vmul.f32 %v3603, %v1116
        %v3607 = vadd.f32 %v3604, 1e-05
        %v3608 = vadd.f32 %v3605, 1e-05
        %v3609 = vadd.f32 %v3606, 1e-05
        %v3610 = vrsqrt.pop %v3607
        %v3611 = vrsqrt.pop %v3608
        %v3612 = vrsqrt.pop %v3609
        %v3613 = vmul.f32 %v3589, %v3610
        %v3614 = vmul.f32 %v3590, %v3611
        %v3615 = vmul.f32 %v3591, %v3612
        %v3617 = vlaneseq
        %v3618 = vshrl.u32 %v3617, 7
        %v3619 = vsub.s32 0, %v3618
        %v3620 = vrot.slane %v3575, %v3619
        %v3622 = vmul.f32 %v3613, %v3620
        %v3623 = vmul.f32 %v3614, %v3620
        %v3624 = vmul.f32 %v3615, %v3620
        %v3626 = vlaneseq
        %v3627 = vshrl.u32 %v3626, 7
        %v3628 = vsub.s32 0, %v3627
        %v3629 = vrot.slane %v3576, %v3628
        %v3631 = vadd.f32 %v3622, %v3629
        %v3632 = vadd.f32 %v3623, %v3629
        %v3633 = vadd.f32 %v3624, %v3629
        %v3634 = vld [vmem:[%s977] sm:$0xff]
        %v3635 = vld [vmem:[%s977 + $0x8] sm:$0xff]
        %v3636 = vld [vmem:[%s977 + $0x10] sm:$0xff]
        %v3637 = vld [vmem:[%s977 + $0x18] sm:$0xff]
        %v3638 = vld [vmem:[%s980] sm:$0x1]
        %v3640 = vlaneseq
        %v3641 = vshrl.u32 %v3640, 7
        %v3642 = vsub.s32 0, %v3641
        %v3643 = vrot.slane %v3638, %v3642
        %v3646 = vsel %vm1106, %v3631, 0
        %v3649 = vsel %vm1106, %v3632, 0
        %v3652 = vsel %vm1106, %v3633, 0
        %3654 = vmatprep.subr.mxu0 0.0
        %3655 = vmatpush1.msra.mxu0 %v3634
        %3656 = vmatprep.subr.mxu0 0.0
        %3657 = vmatpush1.msra.mxu0 %v3635
        %3658 = vmatprep.subr.mxu0 0.0
        %3659 = vmatpush1.msra.mxu0 %v3636
        %3660 = vmatprep.subr.mxu0 0.0
        %3661 = vmatpush1.msra.mxu0 %v3637
        %3662 = vmatprep.subr.mxu0 0.0
        %3663 = vmatpush1.msra.mxu0 0.0
        %3664 = vmatprep.subr.mxu0 0.0
        %3665 = vmatpush1.msra.mxu0 0.0
        %3666 = vmatprep.subr.mxu0 0.0
        %3667 = vmatpush1.msra.mxu0 0.0
        %3668 = vmatprep.subr.mxu0 0.0
        %3669 = vmatpush1.msra.mxu0 0.0
        %3670 = vmatprep.subr.mxu0 0.0
        %3671 = vmatpush1.msra.mxu0 0.0
        %3672 = vmatprep.subr.mxu0 0.0
        %3673 = vmatpush1.msra.mxu0 0.0
        %3674 = vmatprep.subr.mxu0 0.0
        %3675 = vmatpush1.msra.mxu0 0.0
        %3676 = vmatprep.subr.mxu0 0.0
        %3677 = vmatpush1.msra.mxu0 0.0
        %3678 = vmatprep.subr.mxu0 0.0
        %3679 = vmatpush1.msra.mxu0 0.0
        %3680 = vmatprep.subr.mxu0 0.0
        %3681 = vmatpush1.msra.mxu0 0.0
        %3682 = vmatprep.subr.mxu0 0.0
        %3683 = vmatpush1.msra.mxu0 0.0
        %3684 = vmatprep.subr.mxu0 0.0
        %3685 = vmatpush1.msra.mxu0 0.0
        %3686 = vmatprep.subr.mxu0 0.0
        %3687 = vmatpush1.msra.mxu0 0.0
        %3688 = vmatprep.subr.mxu0 0.0
        %3689 = vmatpush1.msra.mxu0 0.0
        %3690 = vmatprep.subr.mxu0 0.0
        %3691 = vmatpush1.msra.mxu0 0.0
        %3692 = vmatprep.subr.mxu0 0.0
        %3693 = vmatpush1.msra.mxu0 0.0
        %3694 = vmatprep.subr.mxu0 0.0
        %3695 = vmatpush1.msra.mxu0 0.0
        %3696 = vmatprep.subr.mxu0 0.0
        %3697 = vmatpush1.msra.mxu0 0.0
        %3698 = vmatprep.subr.mxu0 0.0
        %3699 = vmatpush1.msra.mxu0 0.0
        %3700 = vmatprep.subr.mxu0 0.0
        %3701 = vmatpush1.msra.mxu0 0.0
        %3702 = vmatprep.subr.mxu0 0.0
        %3703 = vmatpush1.msra.mxu0 0.0
        %3704 = vmatprep.subr.mxu0 0.0
        %3705 = vmatpush1.msra.mxu0 0.0
        %3706 = vmatprep.subr.mxu0 0.0
        %3707 = vmatpush1.msra.mxu0 0.0
        %3708 = vmatprep.subr.mxu0 0.0
        %3709 = vmatpush1.msra.mxu0 0.0
        %3710 = vmatprep.subr.mxu0 0.0
        %3711 = vmatpush1.msra.mxu0 0.0
        %3712 = vmatprep.subr.mxu0 0.0
        %3713 = vmatpush1.msra.mxu0 0.0
        %3714 = vmatprep.subr.mxu0 0.0
        %3715 = vmatpush1.msra.mxu0 0.0
        %3716 = vmatprep.subr.mxu0 0.0
        %3717 = vmatpush1.msra.mxu0 0.0
        %3718 = vmatprep.mubr.f32.mxu0 0.0
        %3719 = vmatmul.mubr.f32.gmra.mrb[0].mxu0 %v3646
        %v3720 = vpop.f32.mrb[0].mxu0
        %v3721 = vadd.f32 %v3643, %v3720
        %v3722 = vpop.f32.mrb[0].mxu0
        %3723 = vmatprep.mubr.f32.mxu0 0.0
        %3724 = vmatmul.mubr.f32.gmra.mrb[0].mxu0 %v3649
        %v3725 = vpop.f32.mrb[0].mxu0
        %v3726 = vadd.f32 %v3643, %v3725
        %v3727 = vpop.f32.mrb[0].mxu0
        %3728 = vmatprep.mubr.f32.mxu0 0.0
        %3729 = vmatmul.mubr.f32.gmra.mrb[0].mxu0 %v3652
        %v3730 = vpop.f32.mrb[0].mxu0
        %v3731 = vadd.f32 %v3643, %v3730
        %v3732 = vpop.f32.mrb[0].mxu0
        %3733 = vdwg.mxu0
        %v3734 = vmul.f32 %v3721, %v3721
        %v3735 = vmul.f32 %v3726, %v3726
        %v3736 = vmul.f32 %v3731, %v3731
        %v3737 = vmul.f32 %v3721, %v3734
        %v3738 = vmul.f32 %v3726, %v3735
        %v3739 = vmul.f32 %v3731, %v3736
        %v3740 = vmul.f32 %v3737, 0.044715
        %v3741 = vmul.f32 %v3738, 0.044715
        %v3742 = vmul.f32 %v3739, 0.044715
        %v3743 = vadd.f32 %v3721, %v3740
        %v3744 = vadd.f32 %v3726, %v3741
        %v3745 = vadd.f32 %v3731, %v3742
        %v3746 = vmul.f32 %v3743, 0.7978846
        %v3747 = vmul.f32 %v3744, 0.7978846
        %v3748 = vmul.f32 %v3745, 0.7978846
        %v3749 = vtanh.pop %v3746
        %v3750 = vtanh.pop %v3747
        %v3751 = vtanh.pop %v3748
        %v3752 = vadd.f32 %v3749, 1.0
        %v3753 = vadd.f32 %v3750, 1.0
        %v3754 = vadd.f32 %v3751, 1.0
        %v3755 = vmul.f32 %v3752, 0.5
        %v3756 = vmul.f32 %v3753, 0.5
        %v3757 = vmul.f32 %v3754, 0.5
        %v3758 = vmul.f32 %v3721, %v3755
        %v3759 = vmul.f32 %v3726, %v3756
        %v3760 = vmul.f32 %v3731, %v3757
        %v3761 = vld [vmem:[%s985] sm:$0xff]
        %v3762 = vld [vmem:[%s985 + $0x8] sm:$0xff]
        %v3763 = vld [vmem:[%s985 + $0x10] sm:$0xff]
        %v3764 = vld [vmem:[%s985 + $0x18] sm:$0xff]
        %v3765 = vld [vmem:[%s985 + $0x20] sm:$0xff]
        %v3766 = vld [vmem:[%s985 + $0x28] sm:$0xff]
        %v3767 = vld [vmem:[%s985 + $0x30] sm:$0xff]
        %v3768 = vld [vmem:[%s985 + $0x38] sm:$0xff]
        %v3769 = vld [vmem:[%s988] sm:$0x1]
        %v3771 = vlaneseq
        %v3772 = vshrl.u32 %v3771, 7
        %v3773 = vsub.s32 0, %v3772
        %v3774 = vrot.slane %v3769, %v3773
        %vm3776 = vcmask 523264
        %v3778 = vsel %vm3776, %v3758, 0
        %v3781 = vsel %vm3776, %v3759, 0
        %v3784 = vsel %vm3776, %v3760, 0
        %3786 = vmatprep.subr.mxu0 0.0
        %3787 = vmatpush1.msra.mxu0 %v3761
        %3788 = vmatprep.subr.mxu0 0.0
        %3789 = vmatpush1.msra.mxu0 %v3762
        %3790 = vmatprep.subr.mxu0 0.0
        %3791 = vmatpush1.msra.mxu0 %v3763
        %3792 = vmatprep.subr.mxu0 0.0
        %3793 = vmatpush1.msra.mxu0 %v3764
        %3794 = vmatprep.subr.mxu0 0.0
        %3795 = vmatpush1.msra.mxu0 %v3765
        %3796 = vmatprep.subr.mxu0 0.0
        %3797 = vmatpush1.msra.mxu0 %v3766
        %3798 = vmatprep.subr.mxu0 0.0
        %3799 = vmatpush1.msra.mxu0 %v3767
        %3800 = vmatprep.subr.mxu0 0.0
        %3801 = vmatpush1.msra.mxu0 %v3768
        %3802 = vmatprep.subr.mxu0 0.0
        %3803 = vmatpush1.msra.mxu0 0.0
        %3804 = vmatprep.subr.mxu0 0.0
        %3805 = vmatpush1.msra.mxu0 0.0
        %3806 = vmatprep.subr.mxu0 0.0
        %3807 = vmatpush1.msra.mxu0 0.0
        %3808 = vmatprep.subr.mxu0 0.0
        %3809 = vmatpush1.msra.mxu0 0.0
        %3810 = vmatprep.subr.mxu0 0.0
        %3811 = vmatpush1.msra.mxu0 0.0
        %3812 = vmatprep.subr.mxu0 0.0
        %3813 = vmatpush1.msra.mxu0 0.0
        %3814 = vmatprep.subr.mxu0 0.0
        %3815 = vmatpush1.msra.mxu0 0.0
        %3816 = vmatprep.subr.mxu0 0.0
        %3817 = vmatpush1.msra.mxu0 0.0
        %3818 = vmatprep.subr.mxu0 0.0
        %3819 = vmatpush1.msra.mxu0 0.0
        %3820 = vmatprep.subr.mxu0 0.0
        %3821 = vmatpush1.msra.mxu0 0.0
        %3822 = vmatprep.subr.mxu0 0.0
        %3823 = vmatpush1.msra.mxu0 0.0
        %3824 = vmatprep.subr.mxu0 0.0
        %3825 = vmatpush1.msra.mxu0 0.0
        %3826 = vmatprep.subr.mxu0 0.0
        %3827 = vmatpush1.msra.mxu0 0.0
        %3828 = vmatprep.subr.mxu0 0.0
        %3829 = vmatpush1.msra.mxu0 0.0
        %3830 = vmatprep.subr.mxu0 0.0
        %3831 = vmatpush1.msra.mxu0 0.0
        %3832 = vmatprep.subr.mxu0 0.0
        %3833 = vmatpush1.msra.mxu0 0.0
        %3834 = vmatprep.subr.mxu0 0.0
        %3835 = vmatpush1.msra.mxu0 0.0
        %3836 = vmatprep.subr.mxu0 0.0
        %3837 = vmatpush1.msra.mxu0 0.0
        %3838 = vmatprep.subr.mxu0 0.0
        %3839 = vmatpush1.msra.mxu0 0.0
        %3840 = vmatprep.subr.mxu0 0.0
        %3841 = vmatpush1.msra.mxu0 0.0
        %3842 = vmatprep.subr.mxu0 0.0
        %3843 = vmatpush1.msra.mxu0 0.0
        %3844 = vmatprep.subr.mxu0 0.0
        %3845 = vmatpush1.msra.mxu0 0.0
        %3846 = vmatprep.subr.mxu0 0.0
        %3847 = vmatpush1.msra.mxu0 0.0
        %3848 = vmatprep.subr.mxu0 0.0
        %3849 = vmatpush1.msra.mxu0 0.0
        %3850 = vmatprep.mubr.f32.mxu0 0.0
        %3851 = vmatmul.mubr.f32.gmra.mrb[0].mxu0 %v3778
        %v3852 = vpop.f32.mrb[0].mxu0
        %v3853 = vadd.f32 %v3774, %v3852
        %v3854 = vpop.f32.mrb[0].mxu0
        %3855 = vmatprep.mubr.f32.mxu0 0.0
        %3856 = vmatmul.mubr.f32.gmra.mrb[0].mxu0 %v3781
        %v3857 = vpop.f32.mrb[0].mxu0
        %v3858 = vadd.f32 %v3774, %v3857
        %v3859 = vpop.f32.mrb[0].mxu0
        %3860 = vmatprep.mubr.f32.mxu0 0.0
        %3861 = vmatmul.mubr.f32.gmra.mrb[0].mxu0 %v3784
        %v3862 = vpop.f32.mrb[0].mxu0
        %v3863 = vadd.f32 %v3774, %v3862
        %v3864 = vpop.f32.mrb[0].mxu0
        %3865 = vdwg.mxu0
        %v3866 = vadd.f32 %v3572, %v3853
        %v3867 = vadd.f32 %v3573, %v3858
        %v3868 = vadd.f32 %v3574, %v3863
        %3869 = vst.msk [vmem:[#allocation2] sm:$0xff] %vm1106, %v3866
        %3870 = vst.msk [vmem:[#allocation2 + $0x8] sm:$0xff] %vm1106, %v3867
        %3871 = vst.msk [vmem:[#allocation2 + $0x10] sm:$0xff] %vm1106, %v3868
        %p3872 = scmp.eq.s32.totalorder %s42, 2
        // Predicated region
        $region117: #{tpu_custom_call.1} parent=111 // pred_check
          %p3873 = pneg %p3872
        $region118: #{tpu_custom_call.1} parent=111 // pred_check_branch
          %3875 = sbr.rel (%p3873) target = $region120
        $region119: #{tpu_custom_call.1} parent=111 // pred_region
          %v3876 = vld [vmem:[#allocation2 + $0x10] sm:$0x1]
          %v3877 = vld [vmem:[%s21] sm:$0xff]
          %v3878 = vld [vmem:[%s21 + $0x8] sm:$0xff]
          %v3879 = vld [vmem:[%s21 + $0x10] sm:$0xff]
          %v3880 = vld [vmem:[%s21 + $0x18] sm:$0xff]
          %v3881 = vld [vmem:[%s22] sm:$0x1]
          %v3883 = vsel %vm1106, %v3876, 0
          %3885 = vmatprep.subr.mxu0 0.0
          %3886 = vmatpush1.msra.mxu0 %v3877
          %3887 = vmatprep.subr.mxu0 0.0
          %3888 = vmatpush1.msra.mxu0 %v3878
          %3889 = vmatprep.subr.mxu0 0.0
          %3890 = vmatpush1.msra.mxu0 %v3879
          %3891 = vmatprep.subr.mxu0 0.0
          %3892 = vmatpush1.msra.mxu0 %v3880
          %3893 = vmatprep.subr.mxu0 0.0
          %3894 = vmatpush1.msra.mxu0 0.0
          %3895 = vmatprep.subr.mxu0 0.0
          %3896 = vmatpush1.msra.mxu0 0.0
          %3897 = vmatprep.subr.mxu0 0.0
          %3898 = vmatpush1.msra.mxu0 0.0
          %3899 = vmatprep.subr.mxu0 0.0
          %3900 = vmatpush1.msra.mxu0 0.0
          %3901 = vmatprep.subr.mxu0 0.0
          %3902 = vmatpush1.msra.mxu0 0.0
          %3903 = vmatprep.subr.mxu0 0.0
          %3904 = vmatpush1.msra.mxu0 0.0
          %3905 = vmatprep.subr.mxu0 0.0
          %3906 = vmatpush1.msra.mxu0 0.0
          %3907 = vmatprep.subr.mxu0 0.0
          %3908 = vmatpush1.msra.mxu0 0.0
          %3909 = vmatprep.subr.mxu0 0.0
          %3910 = vmatpush1.msra.mxu0 0.0
          %3911 = vmatprep.subr.mxu0 0.0
          %3912 = vmatpush1.msra.mxu0 0.0
          %3913 = vmatprep.subr.mxu0 0.0
          %3914 = vmatpush1.msra.mxu0 0.0
          %3915 = vmatprep.subr.mxu0 0.0
          %3916 = vmatpush1.msra.mxu0 0.0
          %3917 = vmatprep.subr.mxu0 0.0
          %3918 = vmatpush1.msra.mxu0 0.0
          %3919 = vmatprep.subr.mxu0 0.0
          %3920 = vmatpush1.msra.mxu0 0.0
          %3921 = vmatprep.subr.mxu0 0.0
          %3922 = vmatpush1.msra.mxu0 0.0
          %3923 = vmatprep.subr.mxu0 0.0
          %3924 = vmatpush1.msra.mxu0 0.0
          %3925 = vmatprep.subr.mxu0 0.0
          %3926 = vmatpush1.msra.mxu0 0.0
          %3927 = vmatprep.subr.mxu0 0.0
          %3928 = vmatpush1.msra.mxu0 0.0
          %3929 = vmatprep.subr.mxu0 0.0
          %3930 = vmatpush1.msra.mxu0 0.0
          %3931 = vmatprep.subr.mxu0 0.0
          %3932 = vmatpush1.msra.mxu0 0.0
          %3933 = vmatprep.subr.mxu0 0.0
          %3934 = vmatpush1.msra.mxu0 0.0
          %3935 = vmatprep.subr.mxu0 0.0
          %3936 = vmatpush1.msra.mxu0 0.0
          %3937 = vmatprep.subr.mxu0 0.0
          %3938 = vmatpush1.msra.mxu0 0.0
          %3939 = vmatprep.subr.mxu0 0.0
          %3940 = vmatpush1.msra.mxu0 0.0
          %3941 = vmatprep.subr.mxu0 0.0
          %3942 = vmatpush1.msra.mxu0 0.0
          %3943 = vmatprep.subr.mxu0 0.0
          %3944 = vmatpush1.msra.mxu0 0.0
          %3945 = vmatprep.subr.mxu0 0.0
          %3946 = vmatpush1.msra.mxu0 0.0
          %3947 = vmatprep.subr.mxu0 0.0
          %3948 = vmatpush1.msra.mxu0 0.0
          %3949 = vmatprep.mubr.f32.mxu0 0.0
          %3950 = vmatmul.mubr.f32.gmra.mrb[0].mxu0 %v3883
          %v3951 = vpop.f32.mrb[0].mxu0
          %v3952 = vadd.f32 %v3881, %v3951
          %v3953 = vpop.f32.mrb[0].mxu0
          %3954 = vdwg.mxu0
          %vm3955 = vcmask 57344
          %3956 = vst.msk [vmem:[%s920] sm:$0x1] %vm3955, %v3952
        $region120: #{tpu_custom_call.1} parent=111 // pred_fallthru
          _
        %s3957 = sand.u32 %s625, 1
        %s3958 = scalar_lea.sflag [#allocation4], %s3957
        %s3959 = sand.u32 %s625, 1
        %s3960 = scalar_lea.vmem [#allocation3], %s3959
        // Predicated region
        $region121: #{tpu_custom_call.1} parent=111 // pred_check
          %p3961 = pneg %p635
        $region122: #{tpu_custom_call.1} parent=111 // pred_check_branch
          %3963 = sbr.rel (%p3961) target = $region124
        $region123: #{tpu_custom_call.1} parent=111 // pred_region
          %s3965 = ssub.s32 16, 16
          %3966 = vsyncadd %s3958, %s3965
          %s3967 = smul.addr %s41, 16
          %s3968 = scalar_lea.hbm %s23, %s3967
          %s3970 = sshll.u32 %s3960, 4
          %s3971 = int_to_ptr.vmem [resolvable:$true] %s3970
          %3973 = dma.vmem_to_hbm [thread:$0]  %s3971, 16, %s3968, %s3958
        $region124: #{tpu_custom_call.1} parent=111 // pred_fallthru
          _
      $region112: #{tpu_custom_call.1} parent=5 // pred_fallthru
        _
      %p3974 = scmp.le.s32.totalorder 2, %s32
      // Predicated region
      $region125: #{tpu_custom_call.1} parent=5 // pred_check
        %p3975 = pneg %p3974
      $region126: #{tpu_custom_call.1} parent=5 // pred_check_branch
        %3977 = sbr.rel (%p3975) target = $region128
      $region127: #{tpu_custom_call.1} parent=5 // pred_region
        %s3978 = ssub.s32 %s32, 2
        // Predicated region
        $region129: #{tpu_custom_call.1} parent=127 // pred_check
          %p3979 = pneg %p641
        $region130: #{tpu_custom_call.1} parent=127 // pred_check_branch
          %3981 = sbr.rel (%p3979) target = $region132
        $region131: #{tpu_custom_call.1} parent=127 // pred_region
          %s3982 = sand.u32 %s626, 1
          %s3983 = scalar_lea.sflag [#allocation4], %s3982
          %s3984 = sand.u32 %s626, 1
          %s3985 = scalar_lea.vmem [#allocation3], %s3984
          %3986 = dma.done %s3983, 16
        $region132: #{tpu_custom_call.1} parent=127 // pred_fallthru
          _
      $region128: #{tpu_custom_call.1} parent=5 // pred_fallthru
        _
    $region6: #{tpu_custom_call.1} parent=1 // loop_footer
      %s36 = sadd.s32 1, %s32
    $region7: #{tpu_custom_call.1} parent=1 // loop_footer_branch
      %31 = sbr.rel target = $region3
    $region8: #{tpu_custom_call.1} parent=1 // loop_exit
      _
    %3987 = vsyncpa [#allocation4], 1
    %s3988 = scalar_lea.sflag [#allocation4], 1
    %3989 = vsyncpa %s3988, 1

</llo_original>
